<compile_context>
chip_gen: v7x
topology: tpu7x:2x2x1
jax: 0.10.0
libtpu: 0.0.40
codegen_flags: <defaults>
</compile_context>

<pallas_src>
import jax
import jax.numpy as jnp
from jax import lax
from jax.experimental import pallas as pl
from jax.experimental.pallas import tpu as pltpu

_VMEM_LIMIT = 32 * 1024 * 1024   # safe scoped-VMEM request on v5e/v6e/v7x
_T_TILE_CAP = 16                 # time-tile for the streamed recurrence
_ROW_TILE_CAP = 256              # row-tile for the big input-projection matmul
_LN_EPS = 1e-5


# ----------------------------------------------------------------------------
# tiling helpers
# ----------------------------------------------------------------------------

def _divisor_tile(n, cap):
    """Largest divisor of n that is <= cap (leading-dim tile: no (8,128) constraint)."""
    for t in range(min(n, cap), 0, -1):
        if n % t == 0:
            return t
    return n


def _row_tile(m, cap):
    """Largest divisor of m <= cap that is a multiple of 8 (sublane dim); fallback: full m."""
    if m <= cap:
        return m
    t = min(cap, m)
    t -= t % 8
    for tt in range(t, 7, -8):
        if m % tt == 0:
            return tt
    return m


# ----------------------------------------------------------------------------
# Kernel 1: (optional LayerNorm) + fused input projection for both directions
#   x:(T*B, D) @ Wi:(D, 6H) + folded bias -> (T*B, 6H)
# ----------------------------------------------------------------------------

def _make_proj_kernel(apply_ln):
    def kernel(x_ref, w_ref, b_ref, g_ref, bt_ref, o_ref):
        x = x_ref[...].astype(jnp.float32)
        if apply_ln:
            mean = jnp.mean(x, axis=-1, keepdims=True)
            xc = x - mean
            var = jnp.mean(xc * xc, axis=-1, keepdims=True)
            x = xc * lax.rsqrt(var + _LN_EPS) * g_ref[...] + bt_ref[...]
        o_ref[...] = (jnp.dot(x, w_ref[...], preferred_element_type=jnp.float32)
                      + b_ref[...]).astype(o_ref.dtype)
    return kernel


def input_projection(xf, wi_all, b_all, gamma, beta, apply_ln):
    M, D = xf.shape
    G = wi_all.shape[1]                      # 6H
    rt = _row_tile(M, _ROW_TILE_CAP)
    return pl.pallas_call(
        _make_proj_kernel(apply_ln),
        out_shape=jax.ShapeDtypeStruct((M, G), jnp.float32),
        grid_spec=pltpu.PrefetchScalarGridSpec(
            num_scalar_prefetch=0,
            grid=(M // rt,),
            in_specs=[
                pl.BlockSpec((rt, D), lambda r: (r, 0)),
                pl.BlockSpec((D, G), lambda r: (0, 0)),
                pl.BlockSpec((1, G), lambda r: (0, 0)),
                pl.BlockSpec((1, D), lambda r: (0, 0)),
                pl.BlockSpec((1, D), lambda r: (0, 0)),
            ],
            out_specs=pl.BlockSpec((rt, G), lambda r: (r, 0)),
        ),
        compiler_params=pltpu.CompilerParams(
            dimension_semantics=("parallel",),
            vmem_limit_bytes=_VMEM_LIMIT),
    )(xf, wi_all, b_all, gamma, beta)


# ----------------------------------------------------------------------------
# Kernel 2: streamed bidirectional GRU recurrence.
#   grid = (direction, time_tile); h carried in VMEM scratch across time tiles.
#   Per step: xp = precomputed projection slice, gh = h @ Wh (single fused matmul).
# ----------------------------------------------------------------------------

def _bigru_rec_kernel(xp_ref, wh_ref, bhn_ref, h0_ref, out_ref, hT_ref, h_scr):
    H = wh_ref.shape[0]
    t_tile = xp_ref.shape[0]
    d = pl.program_id(0)          # 0 = forward, 1 = backward
    i = pl.program_id(1)          # time tile (direction-reversed by the index_maps for d=1)

    @pl.when(i == 0)
    def _():
        h_scr[...] = h0_ref[0].astype(jnp.float32)

    wh = wh_ref[...]
    bhn = bhn_ref[...]

    def step(j, h):
        # forward walks rows 0..t_tile-1, backward walks t_tile-1..0
        row = d * (t_tile - 1) + (1 - 2 * d) * j
        xp = xp_ref[row]                                           # (B, 3H): x@Wi + folded biases
        gh = jnp.dot(h, wh, preferred_element_type=jnp.float32)    # (B, 3H): one fused hidden matmul
        r = jax.nn.sigmoid(xp[:, :H] + gh[:, :H])
        z = jax.nn.sigmoid(xp[:, H:2 * H] + gh[:, H:2 * H])
        n = jnp.tanh(xp[:, 2 * H:] + r * (gh[:, 2 * H:] + bhn))
        h_new = (1.0 - z) * n + z * h
        out_ref[row] = h_new.astype(out_ref.dtype)
        return h_new

    h_last = lax.fori_loop(0, t_tile, step, h_scr[...])
    h_scr[...] = h_last
    hT_ref[0] = h_last.astype(hT_ref.dtype)


def bigru_recurrence(xproj, wh_all, bhn_all, h0):
    """xproj: (T, B, 6H) precomputed projections; returns out (T, B, 2H), h_n (2, B, H)."""
    T, B, G = xproj.shape
    H = G // 6
    tt = _divisor_tile(T, _T_TILE_CAP)
    nT = T // tt
    out, h_n = pl.pallas_call(
        _bigru_rec_kernel,
        out_shape=(jax.ShapeDtypeStruct((T, B, 2 * H), jnp.float32),
                   jax.ShapeDtypeStruct((2, B, H), jnp.float32)),
        grid_spec=pltpu.PrefetchScalarGridSpec(
            num_scalar_prefetch=0,
            grid=(2, nT),
            in_specs=[
                # direction d reads its own 3H column half; d=1 walks time tiles in reverse
                pl.BlockSpec((tt, B, 3 * H),
                             lambda d, i: (d * (nT - 1) + (1 - 2 * d) * i, 0, d)),
                pl.BlockSpec((H, 3 * H), lambda d, i: (0, d)),
                pl.BlockSpec((1, H), lambda d, i: (0, d)),
                pl.BlockSpec((1, B, H), lambda d, i: (d, 0, 0)),
            ],
            out_specs=(
                # fwd writes columns [0:H], bwd writes [H:2H] of the shared (T,B,2H) output
                pl.BlockSpec((tt, B, H),
                             lambda d, i: (d * (nT - 1) + (1 - 2 * d) * i, 0, d)),
                pl.BlockSpec((1, B, H), lambda d, i: (d, 0, 0)),
            ),
            scratch_shapes=[pltpu.VMEM((B, H), jnp.float32)],
        ),
        compiler_params=pltpu.CompilerParams(
            dimension_semantics=("parallel", "arbitrary"),
            vmem_limit_bytes=_VMEM_LIMIT),
    )(xproj, wh_all, bhn_all, h0)
    return out, h_n


# ----------------------------------------------------------------------------
# Module forward (time-major across layers; transpose only at entry/exit)
# ----------------------------------------------------------------------------

def layernorm_bigru_forward(x_btd, params):
    B, T, _ = x_btd.shape
    H = params["hidden_size"]
    cur = jnp.transpose(x_btd, (1, 0, 2))              # (T, B, Din), transposed once
    h_n = jnp.zeros((2, B, H), jnp.float32)
    for i in range(params["num_layers"]):
        pk = params["packed"][i]
        D = cur.shape[-1]
        xf = cur.reshape(T * B, D)                     # contiguous view
        if i == 0:
            gamma = jnp.ones((1, D), jnp.float32)
            beta = jnp.zeros((1, D), jnp.float32)
            apply_ln = False
        else:
            ln = params["ln"][i - 1]
            gamma = ln["gamma"].reshape(1, D)
            beta = ln["beta"].reshape(1, D)
            apply_ln = True
        xproj = input_projection(xf, pk["wi"], pk["b"], gamma, beta, apply_ln)
        xproj = xproj.reshape(T, B, 6 * H)
        cur, h_n = bigru_recurrence(xproj, pk["wh"], pk["bhn"], h_n)
    return jnp.transpose(cur, (1, 0, 2))               # back to batch-first (B, T, 2H)


# ----------------------------------------------------------------------------
# Parameter init (PyTorch-equivalent shapes) + packing for the kernels
# ----------------------------------------------------------------------------

def _init_gru_dir(key, din, h):
    ks = jax.random.split(key, 12)
    s = 1.0 / jnp.sqrt(jnp.float32(h))
    u = lambda k, shape: jax.random.uniform(k, shape, jnp.float32, -s, s)
    return dict(
        wir=u(ks[0], (din, h)), wiz=u(ks[1], (din, h)), win=u(ks[2], (din, h)),
        whr=u(ks[3], (h, h)),   whz=u(ks[4], (h, h)),   whn=u(ks[5], (h, h)),
        bir=u(ks[6], (1, h)),   biz=u(ks[7], (1, h)),   bin=u(ks[8], (1, h)),
        bhr=u(ks[9], (1, h)),   bhz=u(ks[10], (1, h)),  bhn=u(ks[11], (1, h)),
    )


def _pack_bigru(pf, pb):
    """Fuse gate weights and pre-fold biases.

    wi : (Din, 6H)  columns = [r_f, z_f, n_f, r_b, z_b, n_b] input weights
    wh : (H, 6H)    same column layout, hidden weights
    b  : (1, 6H)    bir+bhr / biz+bhz / bin per direction (folded into the big projection)
    bhn: (1, 2H)    hidden new-gate bias (must stay inside the r* term)
    # TODO(synk): cast wi/wh and the projected activations to bf16 on v6e/v7x (f32 accumulation)
    # for ~2x MXU throughput and half the weight VMEM.
    """
    wi = jnp.concatenate([pf["wir"], pf["wiz"], pf["win"],
                          pb["wir"], pb["wiz"], pb["win"]], axis=1)
    wh = jnp.concatenate([pf["whr"], pf["whz"], pf["whn"],
                          pb["whr"], pb["whz"], pb["whn"]], axis=1)
    b = jnp.concatenate([pf["bir"] + pf["bhr"], pf["biz"] + pf["bhz"], pf["bin"],
                         pb["bir"] + pb["bhr"], pb["biz"] + pb["bhz"], pb["bin"]], axis=1)
    bhn = jnp.concatenate([pf["bhn"], pb["bhn"]], axis=1)
    return dict(wi=wi, wh=wh, b=b, bhn=bhn)


def init_params(key, input_size, hidden_size, num_layers):
    if hidden_size % 128 != 0:
        # TODO(synk): zero-pad H to a multiple of 128 to support arbitrary hidden sizes while
        # keeping lane-dense blocks; this demo requires H % 128 == 0.
        raise ValueError("hidden_size must be a multiple of 128 for the lane-dense kernel path")
    params = {"hidden_size": hidden_size, "num_layers": num_layers,
              "gru": [], "ln": [], "packed": []}
    for i in range(num_layers):
        din = input_size if i == 0 else 2 * hidden_size
        key, kf, kb = jax.random.split(key, 3)
        pf = _init_gru_dir(kf, din, hidden_size)
        pb = _init_gru_dir(kb, din, hidden_size)
        params["gru"].append({"fwd": pf, "bwd": pb})
        params["packed"].append(_pack_bigru(pf, pb))
        if i > 0:
            key, kg, kbt = jax.random.split(key, 3)
            params["ln"].append({
                "gamma": 1.0 + 0.1 * jax.random.normal(kg, (2 * hidden_size,), jnp.float32),
                "beta": 0.1 * jax.random.normal(kbt, (2 * hidden_size,), jnp.float32),
            })
    return params


# ----------------------------------------------------------------------------
# Pure-JAX reference (same math, raw per-gate params) for correctness check
# ----------------------------------------------------------------------------

def _gru_dir_ref(x_tbd, p, h0):
    def step(h, x_t):
        gir = x_t @ p["wir"] + p["bir"]
        giz = x_t @ p["wiz"] + p["biz"]
        gin = x_t @ p["win"] + p["bin"]
        ghr = h @ p["whr"] + p["bhr"]
        ghz = h @ p["whz"] + p["bhz"]
        ghn = h @ p["whn"] + p["bhn"]
        r = jax.nn.sigmoid(gir + ghr)
        z = jax.nn.sigmoid(giz + ghz)
        n = jnp.tanh(gin + r * ghn)
        h_new = (1.0 - z) * n + z * h
        return h_new, h_new
    hT, out = lax.scan(step, h0, x_tbd)
    return out, hT


def _forward_ref(x, params):
    B = x.shape[0]
    H = params["hidden_size"]
    h_fwd = jnp.zeros((B, H), jnp.float32)
    h_bwd = jnp.zeros((B, H), jnp.float32)
    out = x
    for i in range(params["num_layers"]):
        if i > 0:
            ln = params["ln"][i - 1]
            mean = jnp.mean(out, axis=-1, keepdims=True)
            var = jnp.mean((out - mean) ** 2, axis=-1, keepdims=True)
            out = (out - mean) * lax.rsqrt(var + _LN_EPS) * ln["gamma"] + ln["beta"]
        x_tbd = jnp.transpose(out, (1, 0, 2))
        of, hf = _gru_dir_ref(x_tbd, params["gru"][i]["fwd"], h_fwd)
        ob_rev, hb = _gru_dir_ref(jnp.flip(x_tbd, 0), params["gru"][i]["bwd"], h_bwd)
        ob = jnp.flip(ob_rev, 0)
        out = jnp.transpose(jnp.concatenate([of, ob], axis=-1), (1, 0, 2))
        h_fwd, h_bwd = hf, hb
    return out


# ----------------------------------------------------------------------------

if __name__ == "__main__":
    B, T = 2, 32                         # T=32 with T_TILE_CAP=16 exercises the streamed carry
    input_size, hidden_size, num_layers = 64, 128, 3

    key = jax.random.PRNGKey(0)
    key, kx, kp = jax.random.split(key, 3)
    x = jax.random.normal(kx, (B, T, input_size), jnp.float32)
    params = init_params(kp, input_size, hidden_size, num_layers)

    fwd = jax.jit(lambda xx: layernorm_bigru_forward(xx, params))
    out = jax.block_until_ready(fwd(x))

    assert out.shape == (B, T, 2 * hidden_size), out.shape

    ref = _forward_ref(x, params)
    err = float(jnp.max(jnp.abs(out - ref)))
    assert jnp.allclose(out, ref, atol=1e-3, rtol=1e-3), f"max err {err}"

    print("KERNEL_OK")
</pallas_src>

<mosaic_0001>
module attributes {stable_mosaic.version = 11 : i64} {
  func.func @kernel(%arg0: i32, %arg1: memref<64x64xf32, #tpu.memory_space<vmem>>, %arg2: memref<64x768xf32, #tpu.memory_space<vmem>>, %arg3: memref<1x768xf32, #tpu.memory_space<vmem>>, %arg4: memref<1x64xf32, #tpu.memory_space<vmem>>, %arg5: memref<1x64xf32, #tpu.memory_space<vmem>>, %arg6: memref<64x768xf32, #tpu.memory_space<vmem>>) attributes {dimension_semantics = [#tpu.dimension_semantics<parallel>], iteration_bounds = array<i64: 1>, scalar_prefetch = 0 : i64, scratch_operands = 0 : i64, tpu.core_type = #tpu.core_type<tc>, window_params = [{transform_indices = @transform_0, window_bounds = array<i64: 64, 64>}, {pipeline_mode = #tpu.pipeline_mode<synchronous>, transform_indices = @transform_1, window_bounds = array<i64: 64, 768>}, {pipeline_mode = #tpu.pipeline_mode<synchronous>, transform_indices = @transform_2, window_bounds = array<i64: 1, 768>}, {pipeline_mode = #tpu.pipeline_mode<synchronous>, transform_indices = @transform_3, window_bounds = array<i64: 1, 64>}, {pipeline_mode = #tpu.pipeline_mode<synchronous>, transform_indices = @transform_4, window_bounds = array<i64: 1, 64>}, {transform_indices = @transform_5, window_bounds = array<i64: 64, 768>}]} {
    %c0 = arith.constant 0 : index
    %c0_0 = arith.constant 0 : index
    %0 = vector.load %arg1[%c0, %c0_0] : memref<64x64xf32, #tpu.memory_space<vmem>>, vector<64x64xf32>
    %c0_1 = arith.constant 0 : index
    %c0_2 = arith.constant 0 : index
    %1 = vector.load %arg2[%c0_1, %c0_2] : memref<64x768xf32, #tpu.memory_space<vmem>>, vector<64x768xf32>
    %cst = arith.constant dense<0.000000e+00> : vector<64x768xf32>
    %2 = tpu.matmul %0, %1, %cst {dimension_numbers = #tpu.dot_dimension_numbers<[1], [0], [0], [1], [0, 0, 1, 1], [], []>} : vector<64x64xf32>, vector<64x768xf32>, vector<64x768xf32> -> vector<64x768xf32>
    %c0_3 = arith.constant 0 : index
    %c0_4 = arith.constant 0 : index
    %3 = vector.load %arg3[%c0_3, %c0_4] : memref<1x768xf32, #tpu.memory_space<vmem>>, vector<1x768xf32>
    %4 = vector.broadcast %3 : vector<1x768xf32> to vector<64x768xf32>
    %5 = arith.addf %2, %4 : vector<64x768xf32>
    %c0_5 = arith.constant 0 : index
    %c0_6 = arith.constant 0 : index
    %6 = vector.load %arg6[%c0_5, %c0_6] : memref<64x768xf32, #tpu.memory_space<vmem>>, vector<64x768xf32>
    tpu.vector_store %arg6[%c0_5, %c0_6], %5 {strides = array<i32>} : memref<64x768xf32, #tpu.memory_space<vmem>>, vector<64x768xf32>,
    return
  }
  func.func @transform_0(%arg0: i32) -> (i32, i32) {
    %c0_i32 = arith.constant 0 : i32
    %c0_i32_0 = arith.constant 0 : i32
    return %arg0, %c0_i32 : i32, i32
  }
  func.func @transform_1(%arg0: i32) -> (i32, i32) {
    %c0_i32 = arith.constant 0 : i32
    %c0_i32_0 = arith.constant 0 : i32
    %c0_i32_1 = arith.constant 0 : i32
    return %c0_i32, %c0_i32_0 : i32, i32
  }
  func.func @transform_2(%arg0: i32) -> (i32, i32) {
    %c0_i32 = arith.constant 0 : i32
    %c0_i32_0 = arith.constant 0 : i32
    %c0_i32_1 = arith.constant 0 : i32
    return %c0_i32, %c0_i32_0 : i32, i32
  }
  func.func @transform_3(%arg0: i32) -> (i32, i32) {
    %c0_i32 = arith.constant 0 : i32
    %c0_i32_0 = arith.constant 0 : i32
    %c0_i32_1 = arith.constant 0 : i32
    return %c0_i32, %c0_i32_0 : i32, i32
  }
  func.func @transform_4(%arg0: i32) -> (i32, i32) {
    %c0_i32 = arith.constant 0 : i32
    %c0_i32_0 = arith.constant 0 : i32
    %c0_i32_1 = arith.constant 0 : i32
    return %c0_i32, %c0_i32_0 : i32, i32
  }
  func.func @transform_5(%arg0: i32) -> (i32, i32) {
    %c0_i32 = arith.constant 0 : i32
    %c0_i32_0 = arith.constant 0 : i32
    return %arg0, %c0_i32 : i32, i32
  }
}

module attributes {stable_mosaic.version = 11 : i64} {
  func.func @_bigru_rec_kernel(%arg0: i32, %arg1: i32, %arg2: memref<16x2x384xf32, #tpu.memory_space<vmem>>, %arg3: memref<128x384xf32, #tpu.memory_space<vmem>>, %arg4: memref<1x128xf32, #tpu.memory_space<vmem>>, %arg5: memref<1x2x128xf32, #tpu.memory_space<vmem>>, %arg6: memref<16x2x128xf32, #tpu.memory_space<vmem>>, %arg7: memref<1x2x128xf32, #tpu.memory_space<vmem>>, %arg8: memref<2x128xf32, #tpu.memory_space<vmem>>) attributes {dimension_semantics = [#tpu.dimension_semantics<parallel>, #tpu.dimension_semantics<arbitrary>], iteration_bounds = array<i64: 2, 2>, scalar_prefetch = 0 : i64, scratch_operands = 1 : i64, tpu.core_type = #tpu.core_type<tc>, window_params = [{transform_indices = @transform_0, window_bounds = array<i64: 16, 2, 384>}, {transform_indices = @transform_1, window_bounds = array<i64: 128, 384>}, {transform_indices = @transform_2, window_bounds = array<i64: 1, 128>}, {transform_indices = @transform_3, window_bounds = array<i64: 1, 2, 128>}, {transform_indices = @transform_4, window_bounds = array<i64: 16, 2, 128>}, {transform_indices = @transform_5, window_bounds = array<i64: 1, 2, 128>}]} {
    %c0_i32 = arith.constant 0 : i32
    %0 = arith.cmpi eq, %arg1, %c0_i32 : i32
    %1 = arith.extui %0 : i1 to i32
    %c0_i32_0 = arith.constant 0 : i32
    %2 = arith.cmpi ne, %1, %c0_i32_0 : i32
    scf.if %2 {
      %c0_13 = arith.constant 0 : index
      %c0_14 = arith.constant 0 : index
      %c0_15 = arith.constant 0 : index
      %12 = vector.load %arg5[%c0_13, %c0_14, %c0_15] : memref<1x2x128xf32, #tpu.memory_space<vmem>>, vector<1x2x128xf32>
      %13 = vector.shape_cast %12 : vector<1x2x128xf32> to vector<2x128xf32>
      %c0_16 = arith.constant 0 : index
      %c0_17 = arith.constant 0 : index
      %14 = vector.load %arg8[%c0_16, %c0_17] : memref<2x128xf32, #tpu.memory_space<vmem>>, vector<2x128xf32>
      tpu.vector_store %arg8[%c0_16, %c0_17], %13 {strides = array<i32>} : memref<2x128xf32, #tpu.memory_space<vmem>>, vector<2x128xf32>,
    } else {
    }
    %c0 = arith.constant 0 : index
    %c0_1 = arith.constant 0 : index
    %3 = vector.load %arg3[%c0, %c0_1] : memref<128x384xf32, #tpu.memory_space<vmem>>, vector<128x384xf32>
    %c0_2 = arith.constant 0 : index
    %c0_3 = arith.constant 0 : index
    %4 = vector.load %arg4[%c0_2, %c0_3] : memref<1x128xf32, #tpu.memory_space<vmem>>, vector<1x128xf32>
    %c0_4 = arith.constant 0 : index
    %c0_5 = arith.constant 0 : index
    %5 = vector.load %arg8[%c0_4, %c0_5] : memref<2x128xf32, #tpu.memory_space<vmem>>, vector<2x128xf32>
    %c0_i32_6 = arith.constant 0 : i32
    %c16_i32 = arith.constant 16 : i32
    %6 = arith.addi %c0_i32_6, %c16_i32 : i32
    %c1_i32 = arith.constant 1 : i32
    %7 = scf.for %arg9 = %c0_i32_6 to %6 step %c1_i32 iter_args(%arg10 = %5) -> (vector<2x128xf32>)  : i32 {
      %c15_i32 = arith.constant 15 : i32
      %12 = arith.muli %arg0, %c15_i32 : i32
      %c2_i32 = arith.constant 2 : i32
      %13 = arith.muli %c2_i32, %arg0 : i32
      %c1_i32_13 = arith.constant 1 : i32
      %14 = arith.subi %c1_i32_13, %13 : i32
      %15 = arith.muli %14, %arg9 : i32
      %16 = arith.addi %12, %15 : i32
      %17 = arith.index_cast %16 : i32 to index
      %c0_14 = arith.constant 0 : index
      %c0_15 = arith.constant 0 : index
      %18 = vector.load %arg2[%17, %c0_14, %c0_15] : memref<16x2x384xf32, #tpu.memory_space<vmem>>, vector<1x2x384xf32>
      %19 = vector.shape_cast %18 : vector<1x2x384xf32> to vector<2x384xf32>
      %cst = arith.constant dense<0.000000e+00> : vector<2x384xf32>
      %20 = tpu.matmul %arg10, %3, %cst {dimension_numbers = #tpu.dot_dimension_numbers<[1], [0], [0], [1], [0, 0, 1, 1], [], []>} : vector<2x128xf32>, vector<128x384xf32>, vector<2x384xf32> -> vector<2x384xf32>
      %21 = vector.extract_strided_slice %19 {offsets = [0, 0], sizes = [2, 128], strides = [1, 1]} : vector<2x384xf32> to vector<2x128xf32>
      %22 = vector.extract_strided_slice %20 {offsets = [0, 0], sizes = [2, 128], strides = [1, 1]} : vector<2x384xf32> to vector<2x128xf32>
      %23 = arith.addf %21, %22 : vector<2x128xf32>
      %24 = arith.negf %23 : vector<2x128xf32>
      %25 = math.exp %24 : vector<2x128xf32>
      %cst_16 = arith.constant 1.000000e+00 : f32
      %26 = vector.broadcast %cst_16 : f32 to vector<2x128xf32>
      %27 = arith.addf %26, %25 : vector<2x128xf32>
      %28 = arith.divf %26, %27 : vector<2x128xf32>
      %29 = vector.extract_strided_slice %19 {offsets = [0, 128], sizes = [2, 128], strides = [1, 1]} : vector<2x384xf32> to vector<2x128xf32>
      %30 = vector.extract_strided_slice %20 {offsets = [0, 128], sizes = [2, 128], strides = [1, 1]} : vector<2x384xf32> to vector<2x128xf32>
      %31 = arith.addf %29, %30 : vector<2x128xf32>
      %32 = arith.negf %31 : vector<2x128xf32>
      %33 = math.exp %32 : vector<2x128xf32>
      %cst_17 = arith.constant 1.000000e+00 : f32
      %34 = vector.broadcast %cst_17 : f32 to vector<2x128xf32>
      %35 = arith.addf %34, %33 : vector<2x128xf32>
      %36 = arith.divf %34, %35 : vector<2x128xf32>
      %37 = vector.extract_strided_slice %19 {offsets = [0, 256], sizes = [2, 128], strides = [1, 1]} : vector<2x384xf32> to vector<2x128xf32>
      %38 = vector.extract_strided_slice %20 {offsets = [0, 256], sizes = [2, 128], strides = [1, 1]} : vector<2x384xf32> to vector<2x128xf32>
      %39 = vector.broadcast %4 : vector<1x128xf32> to vector<2x128xf32>
      %40 = arith.addf %38, %39 : vector<2x128xf32>
      %41 = arith.mulf %28, %40 : vector<2x128xf32>
      %42 = arith.addf %37, %41 : vector<2x128xf32>
      %43 = math.tanh %42 : vector<2x128xf32>
      %cst_18 = arith.constant 1.000000e+00 : f32
      %44 = vector.broadcast %cst_18 : f32 to vector<2x128xf32>
      %45 = arith.subf %44, %36 : vector<2x128xf32>
      %46 = arith.mulf %45, %43 : vector<2x128xf32>
      %47 = arith.mulf %36, %arg10 : vector<2x128xf32>
      %48 = arith.addf %46, %47 : vector<2x128xf32>
      %49 = arith.index_cast %16 : i32 to index
      %c0_19 = arith.constant 0 : index
      %c0_20 = arith.constant 0 : index
      %50 = vector.load %arg6[%49, %c0_19, %c0_20] : memref<16x2x128xf32, #tpu.memory_space<vmem>>, vector<1x2x128xf32>
      %51 = vector.shape_cast %50 : vector<1x2x128xf32> to vector<2x128xf32>
      %52 = vector.shape_cast %48 : vector<2x128xf32> to vector<1x2x128xf32>
      tpu.vector_store %arg6[%49, %c0_19, %c0_20], %52 {strides = array<i32>} : memref<16x2x128xf32, #tpu.memory_space<vmem>>, vector<1x2x128xf32>,
      scf.yield %48 : vector<2x128xf32>
    }
    %c16_i32_7 = arith.constant 16 : i32
    %c0_8 = arith.constant 0 : index
    %c0_9 = arith.constant 0 : index
    %8 = vector.load %arg8[%c0_8, %c0_9] : memref<2x128xf32, #tpu.memory_space<vmem>>, vector<2x128xf32>
    tpu.vector_store %arg8[%c0_8, %c0_9], %7 {strides = array<i32>} : memref<2x128xf32, #tpu.memory_space<vmem>>, vector<2x128xf32>,
    %c0_10 = arith.constant 0 : index
    %c0_11 = arith.constant 0 : index
    %c0_12 = arith.constant 0 : index
    %9 = vector.load %arg7[%c0_10, %c0_11, %c0_12] : memref<1x2x128xf32, #tpu.memory_space<vmem>>, vector<1x2x128xf32>
    %10 = vector.shape_cast %9 : vector<1x2x128xf32> to vector<2x128xf32>
    %11 = vector.shape_cast %7 : vector<2x128xf32> to vector<1x2x128xf32>
    tpu.vector_store %arg7[%c0_10, %c0_11, %c0_12], %11 {strides = array<i32>} : memref<1x2x128xf32, #tpu.memory_space<vmem>>, vector<1x2x128xf32>,
    return
  }
  func.func @transform_0(%arg0: i32, %arg1: i32) -> (i32, i32, i32) {
    %c1_i32 = arith.constant 1 : i32
    %0 = arith.muli %arg0, %c1_i32 : i32
    %c2_i32 = arith.constant 2 : i32
    %1 = arith.muli %c2_i32, %arg0 : i32
    %c1_i32_0 = arith.constant 1 : i32
    %2 = arith.subi %c1_i32_0, %1 : i32
    %3 = arith.muli %2, %arg1 : i32
    %4 = arith.addi %0, %3 : i32
    %c0_i32 = arith.constant 0 : i32
    %c0_i32_1 = arith.constant 0 : i32
    return %4, %c0_i32, %arg0 : i32, i32, i32
  }
  func.func @transform_1(%arg0: i32, %arg1: i32) -> (i32, i32) {
    %c0_i32 = arith.constant 0 : i32
    %c0_i32_0 = arith.constant 0 : i32
    return %c0_i32, %arg0 : i32, i32
  }
  func.func @transform_2(%arg0: i32, %arg1: i32) -> (i32, i32) {
    %c0_i32 = arith.constant 0 : i32
    %c0_i32_0 = arith.constant 0 : i32
    return %c0_i32, %arg0 : i32, i32
  }
  func.func @transform_3(%arg0: i32, %arg1: i32) -> (i32, i32, i32) {
    %c0_i32 = arith.constant 0 : i32
    %c0_i32_0 = arith.constant 0 : i32
    %c0_i32_1 = arith.constant 0 : i32
    return %arg0, %c0_i32, %c0_i32_0 : i32, i32, i32
  }
  func.func @transform_4(%arg0: i32, %arg1: i32) -> (i32, i32, i32) {
    %c1_i32 = arith.constant 1 : i32
    %0 = arith.muli %arg0, %c1_i32 : i32
    %c2_i32 = arith.constant 2 : i32
    %1 = arith.muli %c2_i32, %arg0 : i32
    %c1_i32_0 = arith.constant 1 : i32
    %2 = arith.subi %c1_i32_0, %1 : i32
    %3 = arith.muli %2, %arg1 : i32
    %4 = arith.addi %0, %3 : i32
    %c0_i32 = arith.constant 0 : i32
    %c0_i32_1 = arith.constant 0 : i32
    return %4, %c0_i32, %arg0 : i32, i32, i32
  }
  func.func @transform_5(%arg0: i32, %arg1: i32) -> (i32, i32, i32) {
    %c0_i32 = arith.constant 0 : i32
    %c0_i32_0 = arith.constant 0 : i32
    %c0_i32_1 = arith.constant 0 : i32
    return %arg0, %c0_i32, %c0_i32_0 : i32, i32, i32
  }
}

module attributes {stable_mosaic.version = 11 : i64} {
  func.func @kernel(%arg0: i32, %arg1: memref<64x256xf32, #tpu.memory_space<vmem>>, %arg2: memref<256x768xf32, #tpu.memory_space<vmem>>, %arg3: memref<1x768xf32, #tpu.memory_space<vmem>>, %arg4: memref<1x256xf32, #tpu.memory_space<vmem>>, %arg5: memref<1x256xf32, #tpu.memory_space<vmem>>, %arg6: memref<64x768xf32, #tpu.memory_space<vmem>>) attributes {dimension_semantics = [#tpu.dimension_semantics<parallel>], iteration_bounds = array<i64: 1>, scalar_prefetch = 0 : i64, scratch_operands = 0 : i64, tpu.core_type = #tpu.core_type<tc>, window_params = [{transform_indices = @transform_0, window_bounds = array<i64: 64, 256>}, {pipeline_mode = #tpu.pipeline_mode<synchronous>, transform_indices = @transform_1, window_bounds = array<i64: 256, 768>}, {pipeline_mode = #tpu.pipeline_mode<synchronous>, transform_indices = @transform_2, window_bounds = array<i64: 1, 768>}, {pipeline_mode = #tpu.pipeline_mode<synchronous>, transform_indices = @transform_3, window_bounds = array<i64: 1, 256>}, {pipeline_mode = #tpu.pipeline_mode<synchronous>, transform_indices = @transform_4, window_bounds = array<i64: 1, 256>}, {transform_indices = @transform_5, window_bounds = array<i64: 64, 768>}]} {
    %c0 = arith.constant 0 : index
    %c0_0 = arith.constant 0 : index
    %0 = vector.load %arg1[%c0, %c0_0] : memref<64x256xf32, #tpu.memory_space<vmem>>, vector<64x256xf32>
    %cst = arith.constant dense<0.000000e+00> : vector<64xf32>
    %1 = vector.multi_reduction <add>, %0, %cst [1] : vector<64x256xf32> to vector<64xf32>
    %2 = vector.shape_cast %1 : vector<64xf32> to vector<64x1xf32>
    %cst_1 = arith.constant 2.560000e+02 : f32
    %3 = vector.broadcast %cst_1 : f32 to vector<64x1xf32>
    %4 = arith.divf %2, %3 : vector<64x1xf32>
    %5 = vector.broadcast %4 : vector<64x1xf32> to vector<64x256xf32>
    %6 = arith.subf %0, %5 : vector<64x256xf32>
    %7 = arith.mulf %6, %6 : vector<64x256xf32>
    %cst_2 = arith.constant dense<0.000000e+00> : vector<64xf32>
    %8 = vector.multi_reduction <add>, %7, %cst_2 [1] : vector<64x256xf32> to vector<64xf32>
    %9 = vector.shape_cast %8 : vector<64xf32> to vector<64x1xf32>
    %cst_3 = arith.constant 2.560000e+02 : f32
    %10 = vector.broadcast %cst_3 : f32 to vector<64x1xf32>
    %11 = arith.divf %9, %10 : vector<64x1xf32>
    %cst_4 = arith.constant 9.99999974E-6 : f32
    %12 = vector.broadcast %cst_4 : f32 to vector<64x1xf32>
    %13 = arith.addf %11, %12 : vector<64x1xf32>
    %14 = math.rsqrt %13 : vector<64x1xf32>
    %15 = vector.broadcast %14 : vector<64x1xf32> to vector<64x256xf32>
    %16 = arith.mulf %6, %15 : vector<64x256xf32>
    %c0_5 = arith.constant 0 : index
    %c0_6 = arith.constant 0 : index
    %17 = vector.load %arg4[%c0_5, %c0_6] : memref<1x256xf32, #tpu.memory_space<vmem>>, vector<1x256xf32>
    %18 = vector.broadcast %17 : vector<1x256xf32> to vector<64x256xf32>
    %19 = arith.mulf %16, %18 : vector<64x256xf32>
    %c0_7 = arith.constant 0 : index
    %c0_8 = arith.constant 0 : index
    %20 = vector.load %arg5[%c0_7, %c0_8] : memref<1x256xf32, #tpu.memory_space<vmem>>, vector<1x256xf32>
    %21 = vector.broadcast %20 : vector<1x256xf32> to vector<64x256xf32>
    %22 = arith.addf %19, %21 : vector<64x256xf32>
    %c0_9 = arith.constant 0 : index
    %c0_10 = arith.constant 0 : index
    %23 = vector.load %arg2[%c0_9, %c0_10] : memref<256x768xf32, #tpu.memory_space<vmem>>, vector<256x768xf32>
    %cst_11 = arith.constant dense<0.000000e+00> : vector<64x768xf32>
    %24 = tpu.matmul %22, %23, %cst_11 {dimension_numbers = #tpu.dot_dimension_numbers<[1], [0], [0], [1], [0, 0, 1, 1], [], []>} : vector<64x256xf32>, vector<256x768xf32>, vector<64x768xf32> -> vector<64x768xf32>
    %c0_12 = arith.constant 0 : index
    %c0_13 = arith.constant 0 : index
    %25 = vector.load %arg3[%c0_12, %c0_13] : memref<1x768xf32, #tpu.memory_space<vmem>>, vector<1x768xf32>
    %26 = vector.broadcast %25 : vector<1x768xf32> to vector<64x768xf32>
    %27 = arith.addf %24, %26 : vector<64x768xf32>
    %c0_14 = arith.constant 0 : index
    %c0_15 = arith.constant 0 : index
    %28 = vector.load %arg6[%c0_14, %c0_15] : memref<64x768xf32, #tpu.memory_space<vmem>>, vector<64x768xf32>
    tpu.vector_store %arg6[%c0_14, %c0_15], %27 {strides = array<i32>} : memref<64x768xf32, #tpu.memory_space<vmem>>, vector<64x768xf32>,
    return
  }
  func.func @transform_0(%arg0: i32) -> (i32, i32) {
    %c0_i32 = arith.constant 0 : i32
    %c0_i32_0 = arith.constant 0 : i32
    return %arg0, %c0_i32 : i32, i32
  }
  func.func @transform_1(%arg0: i32) -> (i32, i32) {
    %c0_i32 = arith.constant 0 : i32
    %c0_i32_0 = arith.constant 0 : i32
    %c0_i32_1 = arith.constant 0 : i32
    return %c0_i32, %c0_i32_0 : i32, i32
  }
  func.func @transform_2(%arg0: i32) -> (i32, i32) {
    %c0_i32 = arith.constant 0 : i32
    %c0_i32_0 = arith.constant 0 : i32
    %c0_i32_1 = arith.constant 0 : i32
    return %c0_i32, %c0_i32_0 : i32, i32
  }
  func.func @transform_3(%arg0: i32) -> (i32, i32) {
    %c0_i32 = arith.constant 0 : i32
    %c0_i32_0 = arith.constant 0 : i32
    %c0_i32_1 = arith.constant 0 : i32
    return %c0_i32, %c0_i32_0 : i32, i32
  }
  func.func @transform_4(%arg0: i32) -> (i32, i32) {
    %c0_i32 = arith.constant 0 : i32
    %c0_i32_0 = arith.constant 0 : i32
    %c0_i32_1 = arith.constant 0 : i32
    return %c0_i32, %c0_i32_0 : i32, i32
  }
  func.func @transform_5(%arg0: i32) -> (i32, i32) {
    %c0_i32 = arith.constant 0 : i32
    %c0_i32_0 = arith.constant 0 : i32
    return %arg0, %c0_i32 : i32, i32
  }
}

module attributes {stable_mosaic.version = 11 : i64} {
  func.func @_bigru_rec_kernel(%arg0: i32, %arg1: i32, %arg2: memref<16x2x384xf32, #tpu.memory_space<vmem>>, %arg3: memref<128x384xf32, #tpu.memory_space<vmem>>, %arg4: memref<1x128xf32, #tpu.memory_space<vmem>>, %arg5: memref<1x2x128xf32, #tpu.memory_space<vmem>>, %arg6: memref<16x2x128xf32, #tpu.memory_space<vmem>>, %arg7: memref<1x2x128xf32, #tpu.memory_space<vmem>>, %arg8: memref<2x128xf32, #tpu.memory_space<vmem>>) attributes {dimension_semantics = [#tpu.dimension_semantics<parallel>, #tpu.dimension_semantics<arbitrary>], iteration_bounds = array<i64: 2, 2>, scalar_prefetch = 0 : i64, scratch_operands = 1 : i64, tpu.core_type = #tpu.core_type<tc>, window_params = [{transform_indices = @transform_0, window_bounds = array<i64: 16, 2, 384>}, {transform_indices = @transform_1, window_bounds = array<i64: 128, 384>}, {transform_indices = @transform_2, window_bounds = array<i64: 1, 128>}, {transform_indices = @transform_3, window_bounds = array<i64: 1, 2, 128>}, {transform_indices = @transform_4, window_bounds = array<i64: 16, 2, 128>}, {transform_indices = @transform_5, window_bounds = array<i64: 1, 2, 128>}]} {
    %c0_i32 = arith.constant 0 : i32
    %0 = arith.cmpi eq, %arg1, %c0_i32 : i32
    %1 = arith.extui %0 : i1 to i32
    %c0_i32_0 = arith.constant 0 : i32
    %2 = arith.cmpi ne, %1, %c0_i32_0 : i32
    scf.if %2 {
      %c0_13 = arith.constant 0 : index
      %c0_14 = arith.constant 0 : index
      %c0_15 = arith.constant 0 : index
      %12 = vector.load %arg5[%c0_13, %c0_14, %c0_15] : memref<1x2x128xf32, #tpu.memory_space<vmem>>, vector<1x2x128xf32>
      %13 = vector.shape_cast %12 : vector<1x2x128xf32> to vector<2x128xf32>
      %c0_16 = arith.constant 0 : index
      %c0_17 = arith.constant 0 : index
      %14 = vector.load %arg8[%c0_16, %c0_17] : memref<2x128xf32, #tpu.memory_space<vmem>>, vector<2x128xf32>
      tpu.vector_store %arg8[%c0_16, %c0_17], %13 {strides = array<i32>} : memref<2x128xf32, #tpu.memory_space<vmem>>, vector<2x128xf32>,
    } else {
    }
    %c0 = arith.constant 0 : index
    %c0_1 = arith.constant 0 : index
    %3 = vector.load %arg3[%c0, %c0_1] : memref<128x384xf32, #tpu.memory_space<vmem>>, vector<128x384xf32>
    %c0_2 = arith.constant 0 : index
    %c0_3 = arith.constant 0 : index
    %4 = vector.load %arg4[%c0_2, %c0_3] : memref<1x128xf32, #tpu.memory_space<vmem>>, vector<1x128xf32>
    %c0_4 = arith.constant 0 : index
    %c0_5 = arith.constant 0 : index
    %5 = vector.load %arg8[%c0_4, %c0_5] : memref<2x128xf32, #tpu.memory_space<vmem>>, vector<2x128xf32>
    %c0_i32_6 = arith.constant 0 : i32
    %c16_i32 = arith.constant 16 : i32
    %6 = arith.addi %c0_i32_6, %c16_i32 : i32
    %c1_i32 = arith.constant 1 : i32
    %7 = scf.for %arg9 = %c0_i32_6 to %6 step %c1_i32 iter_args(%arg10 = %5) -> (vector<2x128xf32>)  : i32 {
      %c15_i32 = arith.constant 15 : i32
      %12 = arith.muli %arg0, %c15_i32 : i32
      %c2_i32 = arith.constant 2 : i32
      %13 = arith.muli %c2_i32, %arg0 : i32
      %c1_i32_13 = arith.constant 1 : i32
      %14 = arith.subi %c1_i32_13, %13 : i32
      %15 = arith.muli %14, %arg9 : i32
      %16 = arith.addi %12, %15 : i32
      %17 = arith.index_cast %16 : i32 to index
      %c0_14 = arith.constant 0 : index
      %c0_15 = arith.constant 0 : index
      %18 = vector.load %arg2[%17, %c0_14, %c0_15] : memref<16x2x384xf32, #tpu.memory_space<vmem>>, vector<1x2x384xf32>
      %19 = vector.shape_cast %18 : vector<1x2x384xf32> to vector<2x384xf32>
      %cst = arith.constant dense<0.000000e+00> : vector<2x384xf32>
      %20 = tpu.matmul %arg10, %3, %cst {dimension_numbers = #tpu.dot_dimension_numbers<[1], [0], [0], [1], [0, 0, 1, 1], [], []>} : vector<2x128xf32>, vector<128x384xf32>, vector<2x384xf32> -> vector<2x384xf32>
      %21 = vector.extract_strided_slice %19 {offsets = [0, 0], sizes = [2, 128], strides = [1, 1]} : vector<2x384xf32> to vector<2x128xf32>
      %22 = vector.extract_strided_slice %20 {offsets = [0, 0], sizes = [2, 128], strides = [1, 1]} : vector<2x384xf32> to vector<2x128xf32>
      %23 = arith.addf %21, %22 : vector<2x128xf32>
      %24 = arith.negf %23 : vector<2x128xf32>
      %25 = math.exp %24 : vector<2x128xf32>
      %cst_16 = arith.constant 1.000000e+00 : f32
      %26 = vector.broadcast %cst_16 : f32 to vector<2x128xf32>
      %27 = arith.addf %26, %25 : vector<2x128xf32>
      %28 = arith.divf %26, %27 : vector<2x128xf32>
      %29 = vector.extract_strided_slice %19 {offsets = [0, 128], sizes = [2, 128], strides = [1, 1]} : vector<2x384xf32> to vector<2x128xf32>
      %30 = vector.extract_strided_slice %20 {offsets = [0, 128], sizes = [2, 128], strides = [1, 1]} : vector<2x384xf32> to vector<2x128xf32>
      %31 = arith.addf %29, %30 : vector<2x128xf32>
      %32 = arith.negf %31 : vector<2x128xf32>
      %33 = math.exp %32 : vector<2x128xf32>
      %cst_17 = arith.constant 1.000000e+00 : f32
      %34 = vector.broadcast %cst_17 : f32 to vector<2x128xf32>
      %35 = arith.addf %34, %33 : vector<2x128xf32>
      %36 = arith.divf %34, %35 : vector<2x128xf32>
      %37 = vector.extract_strided_slice %19 {offsets = [0, 256], sizes = [2, 128], strides = [1, 1]} : vector<2x384xf32> to vector<2x128xf32>
      %38 = vector.extract_strided_slice %20 {offsets = [0, 256], sizes = [2, 128], strides = [1, 1]} : vector<2x384xf32> to vector<2x128xf32>
      %39 = vector.broadcast %4 : vector<1x128xf32> to vector<2x128xf32>
      %40 = arith.addf %38, %39 : vector<2x128xf32>
      %41 = arith.mulf %28, %40 : vector<2x128xf32>
      %42 = arith.addf %37, %41 : vector<2x128xf32>
      %43 = math.tanh %42 : vector<2x128xf32>
      %cst_18 = arith.constant 1.000000e+00 : f32
      %44 = vector.broadcast %cst_18 : f32 to vector<2x128xf32>
      %45 = arith.subf %44, %36 : vector<2x128xf32>
      %46 = arith.mulf %45, %43 : vector<2x128xf32>
      %47 = arith.mulf %36, %arg10 : vector<2x128xf32>
      %48 = arith.addf %46, %47 : vector<2x128xf32>
      %49 = arith.index_cast %16 : i32 to index
      %c0_19 = arith.constant 0 : index
      %c0_20 = arith.constant 0 : index
      %50 = vector.load %arg6[%49, %c0_19, %c0_20] : memref<16x2x128xf32, #tpu.memory_space<vmem>>, vector<1x2x128xf32>
      %51 = vector.shape_cast %50 : vector<1x2x128xf32> to vector<2x128xf32>
      %52 = vector.shape_cast %48 : vector<2x128xf32> to vector<1x2x128xf32>
      tpu.vector_store %arg6[%49, %c0_19, %c0_20], %52 {strides = array<i32>} : memref<16x2x128xf32, #tpu.memory_space<vmem>>, vector<1x2x128xf32>,
      scf.yield %48 : vector<2x128xf32>
    }
    %c16_i32_7 = arith.constant 16 : i32
    %c0_8 = arith.constant 0 : index
    %c0_9 = arith.constant 0 : index
    %8 = vector.load %arg8[%c0_8, %c0_9] : memref<2x128xf32, #tpu.memory_space<vmem>>, vector<2x128xf32>
    tpu.vector_store %arg8[%c0_8, %c0_9], %7 {strides = array<i32>} : memref<2x128xf32, #tpu.memory_space<vmem>>, vector<2x128xf32>,
    %c0_10 = arith.constant 0 : index
    %c0_11 = arith.constant 0 : index
    %c0_12 = arith.constant 0 : index
    %9 = vector.load %arg7[%c0_10, %c0_11, %c0_12] : memref<1x2x128xf32, #tpu.memory_space<vmem>>, vector<1x2x128xf32>
    %10 = vector.shape_cast %9 : vector<1x2x128xf32> to vector<2x128xf32>
    %11 = vector.shape_cast %7 : vector<2x128xf32> to vector<1x2x128xf32>
    tpu.vector_store %arg7[%c0_10, %c0_11, %c0_12], %11 {strides = array<i32>} : memref<1x2x128xf32, #tpu.memory_space<vmem>>, vector<1x2x128xf32>,
    return
  }
  func.func @transform_0(%arg0: i32, %arg1: i32) -> (i32, i32, i32) {
    %c1_i32 = arith.constant 1 : i32
    %0 = arith.muli %arg0, %c1_i32 : i32
    %c2_i32 = arith.constant 2 : i32
    %1 = arith.muli %c2_i32, %arg0 : i32
    %c1_i32_0 = arith.constant 1 : i32
    %2 = arith.subi %c1_i32_0, %1 : i32
    %3 = arith.muli %2, %arg1 : i32
    %4 = arith.addi %0, %3 : i32
    %c0_i32 = arith.constant 0 : i32
    %c0_i32_1 = arith.constant 0 : i32
    return %4, %c0_i32, %arg0 : i32, i32, i32
  }
  func.func @transform_1(%arg0: i32, %arg1: i32) -> (i32, i32) {
    %c0_i32 = arith.constant 0 : i32
    %c0_i32_0 = arith.constant 0 : i32
    return %c0_i32, %arg0 : i32, i32
  }
  func.func @transform_2(%arg0: i32, %arg1: i32) -> (i32, i32) {
    %c0_i32 = arith.constant 0 : i32
    %c0_i32_0 = arith.constant 0 : i32
    return %c0_i32, %arg0 : i32, i32
  }
  func.func @transform_3(%arg0: i32, %arg1: i32) -> (i32, i32, i32) {
    %c0_i32 = arith.constant 0 : i32
    %c0_i32_0 = arith.constant 0 : i32
    %c0_i32_1 = arith.constant 0 : i32
    return %arg0, %c0_i32, %c0_i32_0 : i32, i32, i32
  }
  func.func @transform_4(%arg0: i32, %arg1: i32) -> (i32, i32, i32) {
    %c1_i32 = arith.constant 1 : i32
    %0 = arith.muli %arg0, %c1_i32 : i32
    %c2_i32 = arith.constant 2 : i32
    %1 = arith.muli %c2_i32, %arg0 : i32
    %c1_i32_0 = arith.constant 1 : i32
    %2 = arith.subi %c1_i32_0, %1 : i32
    %3 = arith.muli %2, %arg1 : i32
    %4 = arith.addi %0, %3 : i32
    %c0_i32 = arith.constant 0 : i32
    %c0_i32_1 = arith.constant 0 : i32
    return %4, %c0_i32, %arg0 : i32, i32, i32
  }
  func.func @transform_5(%arg0: i32, %arg1: i32) -> (i32, i32, i32) {
    %c0_i32 = arith.constant 0 : i32
    %c0_i32_0 = arith.constant 0 : i32
    %c0_i32_1 = arith.constant 0 : i32
    return %arg0, %c0_i32, %c0_i32_0 : i32, i32, i32
  }
}

</mosaic_0001>

<llo_original>
// kernel: _lambda_.6
$region0: #{_lambda_.6}
  #allocation0 [shape = 'u32[]', space=smem, size = 0x4, offset = 0x4, fixed_abs, tag = 'smem constant byte address 0x4 - core index']
  #allocation1 [shape = 'u32[144,128]{1,0:T(1,128)}', space=vmem, size = 0x12000, scoped, tag = 'internal scratch']
  %s0 = inlined_call_operand.vmem [shape: f32[64,64], index: 0, kind: input, shape index: {}]
  %s1 = inlined_call_operand.hbm [shape: f32[64,768], index: 1, kind: input, shape index: {}]
  %s2 = inlined_call_operand.vmem [shape: f32[1,768], index: 2, kind: input, shape index: {}]
  %s3 = inlined_call_operand.vmem [shape: f32[1,64], index: 3, kind: input, shape index: {}]
  %s4 = inlined_call_operand.vmem [shape: f32[1,64], index: 4, kind: input, shape index: {}]
  %s5 = inlined_call_operand.vmem [shape: f32[64,768], index: 5, kind: output, shape index: {}]
  %s6 = sld [smem:[#allocation0]]
  $region34: #{_lambda_.6} parent=0
    _
  %s8 = ssub.s32 1, %s6
  %s9 = scalar_select 0, %s8, %s6
  $region1: #{_lambda_.6} parent=0
    #allocation2 [shape = 'u8[196608]{0}', space=vmem, size = 0x30000, scoped, tag = 'input window, operand 1, single buffered']
    #allocation3 [shape = 's32[1]{0}', space=sflag, size = 0x4, scoped, tag = 'scoped memory for _lambda_.6']
    %10 = vsyncpa [#allocation3], 0
    // Predicated region
    $region2: #{_lambda_.6} parent=1 // pred_check
      _
    $region3: #{_lambda_.6} parent=1 // pred_check_branch
      %12 = sbr.rel (0) target = $region5
    $region4: #{_lambda_.6} parent=1 // pred_region
      _
    $region5: #{_lambda_.6} parent=1 // pred_fallthru
      _
    // Predicated region
    $region6: #{_lambda_.6} parent=1 // pred_check
      _
    $region7: #{_lambda_.6} parent=1 // pred_check_branch
      %14 = sbr.rel (0) target = $region9
    $region8: #{_lambda_.6} parent=1 // pred_region
      %s16 = ssub.s32 6144, 6144
      %17 = vsyncadd [#allocation3], %s16
      %s18 = sshll.u32 [#allocation2], 4
      %s19 = int_to_ptr.vmem [resolvable:$true] %s18
      %24 = dma.hbm_to_vmem [thread:$0]  %s1, 6144, %s19, [#allocation3], 768, 768, 48
    $region9: #{_lambda_.6} parent=1 // pred_fallthru
      _
    // Predicated region
    $region10: #{_lambda_.6} parent=1 // pred_check
      _
    $region11: #{_lambda_.6} parent=1 // pred_check_branch
      %26 = sbr.rel (0) target = $region13
    $region12: #{_lambda_.6} parent=1 // pred_region
      _
    $region13: #{_lambda_.6} parent=1 // pred_fallthru
      _
    // Predicated region
    $region14: #{_lambda_.6} parent=1 // pred_check
      _
    $region15: #{_lambda_.6} parent=1 // pred_check_branch
      %28 = sbr.rel (0) target = $region17
    $region16: #{_lambda_.6} parent=1 // pred_region
      _
    $region17: #{_lambda_.6} parent=1 // pred_fallthru
      _
    // Predicated region
    $region18: #{_lambda_.6} parent=1 // pred_check
      _
    $region19: #{_lambda_.6} parent=1 // pred_check_branch
      %30 = sbr.rel (0) target = $region21
    $region20: #{_lambda_.6} parent=1 // pred_region
      _
    $region21: #{_lambda_.6} parent=1 // pred_fallthru
      _
    // Predicated region
    $region22: #{_lambda_.6} parent=1 // pred_check
      _
    $region23: #{_lambda_.6} parent=1 // pred_check_branch
      %32 = sbr.rel (0) target = $region25
    $region24: #{_lambda_.6} parent=1 // pred_region
      %33 = dma.done [#allocation3], 6144
    $region25: #{_lambda_.6} parent=1 // pred_fallthru
      _
    %v34 = vld [vmem:[%s0] sm:$0xff]
    %v35 = vld [vmem:[%s0 + $0x8] sm:$0xff]
    %v36 = vld [vmem:[%s0 + $0x10] sm:$0xff]
    %v37 = vld [vmem:[%s0 + $0x18] sm:$0xff]
    %v38 = vld [vmem:[%s0 + $0x20] sm:$0xff]
    %v39 = vld [vmem:[%s0 + $0x28] sm:$0xff]
    %v40 = vld [vmem:[%s0 + $0x30] sm:$0xff]
    %v41 = vld [vmem:[%s0 + $0x38] sm:$0xff]
    %v42 = vld [vmem:[#allocation2] sm:$0xff]
    %v43 = vld [vmem:[#allocation2 + $0x8] sm:$0xff]
    %v44 = vld [vmem:[#allocation2 + $0x10] sm:$0xff]
    %v45 = vld [vmem:[#allocation2 + $0x18] sm:$0xff]
    %v46 = vld [vmem:[#allocation2 + $0x20] sm:$0xff]
    %v47 = vld [vmem:[#allocation2 + $0x28] sm:$0xff]
    %v48 = vld [vmem:[#allocation2 + $0x30] sm:$0xff]
    %v49 = vld [vmem:[#allocation2 + $0x38] sm:$0xff]
    %v50 = vld [vmem:[#allocation2 + $0x40] sm:$0xff]
    %v51 = vld [vmem:[#allocation2 + $0x48] sm:$0xff]
    %v52 = vld [vmem:[#allocation2 + $0x50] sm:$0xff]
    %v53 = vld [vmem:[#allocation2 + $0x58] sm:$0xff]
    %v54 = vld [vmem:[#allocation2 + $0x60] sm:$0xff]
    %v55 = vld [vmem:[#allocation2 + $0x68] sm:$0xff]
    %v56 = vld [vmem:[#allocation2 + $0x70] sm:$0xff]
    %v57 = vld [vmem:[#allocation2 + $0x78] sm:$0xff]
    %v58 = vld [vmem:[#allocation2 + $0x80] sm:$0xff]
    %v59 = vld [vmem:[#allocation2 + $0x88] sm:$0xff]
    %v60 = vld [vmem:[#allocation2 + $0x90] sm:$0xff]
    %v61 = vld [vmem:[#allocation2 + $0x98] sm:$0xff]
    %v62 = vld [vmem:[#allocation2 + $0xa0] sm:$0xff]
    %v63 = vld [vmem:[#allocation2 + $0xa8] sm:$0xff]
    %v64 = vld [vmem:[#allocation2 + $0xb0] sm:$0xff]
    %v65 = vld [vmem:[#allocation2 + $0xb8] sm:$0xff]
    %v66 = vld [vmem:[#allocation2 + $0xc0] sm:$0xff]
    %v67 = vld [vmem:[#allocation2 + $0xc8] sm:$0xff]
    %v68 = vld [vmem:[#allocation2 + $0xd0] sm:$0xff]
    %v69 = vld [vmem:[#allocation2 + $0xd8] sm:$0xff]
    %v70 = vld [vmem:[#allocation2 + $0xe0] sm:$0xff]
    %v71 = vld [vmem:[#allocation2 + $0xe8] sm:$0xff]
    %v72 = vld [vmem:[#allocation2 + $0xf0] sm:$0xff]
    %v73 = vld [vmem:[#allocation2 + $0xf8] sm:$0xff]
    %v74 = vld [vmem:[#allocation2 + $0x100] sm:$0xff]
    %v75 = vld [vmem:[#allocation2 + $0x108] sm:$0xff]
    %v76 = vld [vmem:[#allocation2 + $0x110] sm:$0xff]
    %v77 = vld [vmem:[#allocation2 + $0x118] sm:$0xff]
    %v78 = vld [vmem:[#allocation2 + $0x120] sm:$0xff]
    %v79 = vld [vmem:[#allocation2 + $0x128] sm:$0xff]
    %v80 = vld [vmem:[#allocation2 + $0x130] sm:$0xff]
    %v81 = vld [vmem:[#allocation2 + $0x138] sm:$0xff]
    %v82 = vld [vmem:[#allocation2 + $0x140] sm:$0xff]
    %v83 = vld [vmem:[#allocation2 + $0x148] sm:$0xff]
    %v84 = vld [vmem:[#allocation2 + $0x150] sm:$0xff]
    %v85 = vld [vmem:[#allocation2 + $0x158] sm:$0xff]
    %v86 = vld [vmem:[#allocation2 + $0x160] sm:$0xff]
    %v87 = vld [vmem:[#allocation2 + $0x168] sm:$0xff]
    %v88 = vld [vmem:[#allocation2 + $0x170] sm:$0xff]
    %v89 = vld [vmem:[#allocation2 + $0x178] sm:$0xff]
    %v90 = vld [vmem:[%s2] sm:$0x3f]
    %v92 = vlaneseq
    %v93 = vshrl.u32 %v92, 7
    %v94 = vsub.s32 0, %v93
    %v95 = vrot.slane %v90, %v94
    %v96 = vlaneseq
    %v97 = vshrl.u32 %v96, 7
    %v98 = vsub.s32 1, %v97
    %v99 = vrot.slane %v90, %v98
    %v100 = vlaneseq
    %v101 = vshrl.u32 %v100, 7
    %v102 = vsub.s32 2, %v101
    %v103 = vrot.slane %v90, %v102
    %v104 = vlaneseq
    %v105 = vshrl.u32 %v104, 7
    %v106 = vsub.s32 3, %v105
    %v107 = vrot.slane %v90, %v106
    %v108 = vlaneseq
    %v109 = vshrl.u32 %v108, 7
    %v110 = vsub.s32 4, %v109
    %v111 = vrot.slane %v90, %v110
    %v112 = vlaneseq
    %v113 = vshrl.u32 %v112, 7
    %v114 = vsub.s32 5, %v113
    %v115 = vrot.slane %v90, %v114
    %vm122 = vcmask 523264
    %v124 = vsel %vm122, %v34, 0
    %v127 = vsel %vm122, %v35, 0
    %v130 = vsel %vm122, %v36, 0
    %v133 = vsel %vm122, %v37, 0
    %v136 = vsel %vm122, %v38, 0
    %v139 = vsel %vm122, %v39, 0
    %v142 = vsel %vm122, %v40, 0
    %v145 = vsel %vm122, %v41, 0
    %147 = vmatprep.subr.mxu0 %v43
    %148 = vmatpush1.msra.mxu0 %v42
    %149 = vmatprep.subr.mxu0 %v49
    %150 = vmatpush1.msra.mxu0 %v48
    %151 = vmatprep.subr.mxu0 %v55
    %152 = vmatpush1.msra.mxu0 %v54
    %153 = vmatprep.subr.mxu0 %v61
    %154 = vmatpush1.msra.mxu0 %v60
    %155 = vmatprep.subr.mxu0 %v67
    %156 = vmatpush1.msra.mxu0 %v66
    %157 = vmatprep.subr.mxu0 %v73
    %158 = vmatpush1.msra.mxu0 %v72
    %159 = vmatprep.subr.mxu0 %v79
    %160 = vmatpush1.msra.mxu0 %v78
    %161 = vmatprep.subr.mxu0 %v85
    %162 = vmatpush1.msra.mxu0 %v84
    %163 = vmatprep.subr.mxu0 0.0
    %164 = vmatpush1.msra.mxu0 0.0
    %165 = vmatprep.subr.mxu0 0.0
    %166 = vmatpush1.msra.mxu0 0.0
    %167 = vmatprep.subr.mxu0 0.0
    %168 = vmatpush1.msra.mxu0 0.0
    %169 = vmatprep.subr.mxu0 0.0
    %170 = vmatpush1.msra.mxu0 0.0
    %171 = vmatprep.subr.mxu0 0.0
    %172 = vmatpush1.msra.mxu0 0.0
    %173 = vmatprep.subr.mxu0 0.0
    %174 = vmatpush1.msra.mxu0 0.0
    %175 = vmatprep.subr.mxu0 0.0
    %176 = vmatpush1.msra.mxu0 0.0
    %177 = vmatprep.subr.mxu0 0.0
    %178 = vmatpush1.msra.mxu0 0.0
    %179 = vmatprep.subr.mxu0 0.0
    %180 = vmatpush1.msra.mxu0 0.0
    %181 = vmatprep.subr.mxu0 0.0
    %182 = vmatpush1.msra.mxu0 0.0
    %183 = vmatprep.subr.mxu0 0.0
    %184 = vmatpush1.msra.mxu0 0.0
    %185 = vmatprep.subr.mxu0 0.0
    %186 = vmatpush1.msra.mxu0 0.0
    %187 = vmatprep.subr.mxu0 0.0
    %188 = vmatpush1.msra.mxu0 0.0
    %189 = vmatprep.subr.mxu0 0.0
    %190 = vmatpush1.msra.mxu0 0.0
    %191 = vmatprep.subr.mxu0 0.0
    %192 = vmatpush1.msra.mxu0 0.0
    %193 = vmatprep.subr.mxu0 0.0
    %194 = vmatpush1.msra.mxu0 0.0
    %195 = vmatprep.subr.mxu0 0.0
    %196 = vmatpush1.msra.mxu0 0.0
    %197 = vmatprep.subr.mxu0 0.0
    %198 = vmatpush1.msra.mxu0 0.0
    %199 = vmatprep.subr.mxu0 0.0
    %200 = vmatpush1.msra.mxu0 0.0
    %201 = vmatprep.subr.mxu0 0.0
    %202 = vmatpush1.msra.mxu0 0.0
    %203 = vmatprep.subr.mxu0 0.0
    %204 = vmatpush1.msra.mxu0 0.0
    %205 = vmatprep.subr.mxu0 0.0
    %206 = vmatpush1.msra.mxu0 0.0
    %207 = vmatprep.subr.mxu0 0.0
    %208 = vmatpush1.msra.mxu0 0.0
    %209 = vmatprep.subr.mxu0 0.0
    %210 = vmatpush1.msra.mxu0 0.0
    %211 = vmatprep.mubr.f32.mxu0 0.0
    %212 = vmatmul.mubr.f32.gmra.mrb[0].mxu0 %v124
    %v213 = vpop.f32.mrb[0].mxu0
    %v214 = vadd.f32 %v95, %v213
    %v215 = vpop.f32.mrb[0].mxu0
    %v216 = vadd.f32 %v99, %v215
    %217 = vmatprep.mubr.f32.mxu0 0.0
    %218 = vmatmul.mubr.f32.gmra.mrb[0].mxu0 %v127
    %v219 = vpop.f32.mrb[0].mxu0
    %v220 = vadd.f32 %v95, %v219
    %v221 = vpop.f32.mrb[0].mxu0
    %v222 = vadd.f32 %v99, %v221
    %223 = vmatprep.mubr.f32.mxu0 0.0
    %224 = vmatmul.mubr.f32.gmra.mrb[0].mxu0 %v130
    %v225 = vpop.f32.mrb[0].mxu0
    %v226 = vadd.f32 %v95, %v225
    %v227 = vpop.f32.mrb[0].mxu0
    %v228 = vadd.f32 %v99, %v227
    %229 = vmatprep.mubr.f32.mxu0 0.0
    %230 = vmatmul.mubr.f32.gmra.mrb[0].mxu0 %v133
    %v231 = vpop.f32.mrb[0].mxu0
    %v232 = vadd.f32 %v95, %v231
    %v233 = vpop.f32.mrb[0].mxu0
    %v234 = vadd.f32 %v99, %v233
    %235 = vmatprep.mubr.f32.mxu0 0.0
    %236 = vmatmul.mubr.f32.gmra.mrb[0].mxu0 %v136
    %v237 = vpop.f32.mrb[0].mxu0
    %v238 = vadd.f32 %v95, %v237
    %v239 = vpop.f32.mrb[0].mxu0
    %v240 = vadd.f32 %v99, %v239
    %241 = vmatprep.mubr.f32.mxu0 0.0
    %242 = vmatmul.mubr.f32.gmra.mrb[0].mxu0 %v139
    %v243 = vpop.f32.mrb[0].mxu0
    %v244 = vadd.f32 %v95, %v243
    %v245 = vpop.f32.mrb[0].mxu0
    %v246 = vadd.f32 %v99, %v245
    %247 = vmatprep.mubr.f32.mxu0 0.0
    %248 = vmatmul.mubr.f32.gmra.mrb[0].mxu0 %v142
    %v249 = vpop.f32.mrb[0].mxu0
    %v250 = vadd.f32 %v95, %v249
    %v251 = vpop.f32.mrb[0].mxu0
    %v252 = vadd.f32 %v99, %v251
    %253 = vmatprep.mubr.f32.mxu0 0.0
    %254 = vmatmul.mubr.f32.gmra.mrb[0].mxu0 %v145
    %v255 = vpop.f32.mrb[0].mxu0
    %v256 = vadd.f32 %v95, %v255
    %v257 = vpop.f32.mrb[0].mxu0
    %v258 = vadd.f32 %v99, %v257
    %259 = vdwg.mxu0
    %260 = vmatprep.subr.mxu0 %v45
    %261 = vmatpush1.msra.mxu0 %v44
    %262 = vmatprep.subr.mxu0 %v51
    %263 = vmatpush1.msra.mxu0 %v50
    %264 = vmatprep.subr.mxu0 %v57
    %265 = vmatpush1.msra.mxu0 %v56
    %266 = vmatprep.subr.mxu0 %v63
    %267 = vmatpush1.msra.mxu0 %v62
    %268 = vmatprep.subr.mxu0 %v69
    %269 = vmatpush1.msra.mxu0 %v68
    %270 = vmatprep.subr.mxu0 %v75
    %271 = vmatpush1.msra.mxu0 %v74
    %272 = vmatprep.subr.mxu0 %v81
    %273 = vmatpush1.msra.mxu0 %v80
    %274 = vmatprep.subr.mxu0 %v87
    %275 = vmatpush1.msra.mxu0 %v86
    %276 = vmatprep.subr.mxu0 0.0
    %277 = vmatpush1.msra.mxu0 0.0
    %278 = vmatprep.subr.mxu0 0.0
    %279 = vmatpush1.msra.mxu0 0.0
    %280 = vmatprep.subr.mxu0 0.0
    %281 = vmatpush1.msra.mxu0 0.0
    %282 = vmatprep.subr.mxu0 0.0
    %283 = vmatpush1.msra.mxu0 0.0
    %284 = vmatprep.subr.mxu0 0.0
    %285 = vmatpush1.msra.mxu0 0.0
    %286 = vmatprep.subr.mxu0 0.0
    %287 = vmatpush1.msra.mxu0 0.0
    %288 = vmatprep.subr.mxu0 0.0
    %289 = vmatpush1.msra.mxu0 0.0
    %290 = vmatprep.subr.mxu0 0.0
    %291 = vmatpush1.msra.mxu0 0.0
    %292 = vmatprep.subr.mxu0 0.0
    %293 = vmatpush1.msra.mxu0 0.0
    %294 = vmatprep.subr.mxu0 0.0
    %295 = vmatpush1.msra.mxu0 0.0
    %296 = vmatprep.subr.mxu0 0.0
    %297 = vmatpush1.msra.mxu0 0.0
    %298 = vmatprep.subr.mxu0 0.0
    %299 = vmatpush1.msra.mxu0 0.0
    %300 = vmatprep.subr.mxu0 0.0
    %301 = vmatpush1.msra.mxu0 0.0
    %302 = vmatprep.subr.mxu0 0.0
    %303 = vmatpush1.msra.mxu0 0.0
    %304 = vmatprep.subr.mxu0 0.0
    %305 = vmatpush1.msra.mxu0 0.0
    %306 = vmatprep.subr.mxu0 0.0
    %307 = vmatpush1.msra.mxu0 0.0
    %308 = vmatprep.subr.mxu0 0.0
    %309 = vmatpush1.msra.mxu0 0.0
    %310 = vmatprep.subr.mxu0 0.0
    %311 = vmatpush1.msra.mxu0 0.0
    %312 = vmatprep.subr.mxu0 0.0
    %313 = vmatpush1.msra.mxu0 0.0
    %314 = vmatprep.subr.mxu0 0.0
    %315 = vmatpush1.msra.mxu0 0.0
    %316 = vmatprep.subr.mxu0 0.0
    %317 = vmatpush1.msra.mxu0 0.0
    %318 = vmatprep.subr.mxu0 0.0
    %319 = vmatpush1.msra.mxu0 0.0
    %320 = vmatprep.subr.mxu0 0.0
    %321 = vmatpush1.msra.mxu0 0.0
    %322 = vmatprep.subr.mxu0 0.0
    %323 = vmatpush1.msra.mxu0 0.0
    %324 = vmatprep.mubr.f32.mxu0 0.0
    %325 = vmatmul.mubr.f32.gmra.mrb[0].mxu0 %v124
    %v326 = vpop.f32.mrb[0].mxu0
    %v327 = vadd.f32 %v103, %v326
    %v328 = vpop.f32.mrb[0].mxu0
    %v329 = vadd.f32 %v107, %v328
    %330 = vmatprep.mubr.f32.mxu0 0.0
    %331 = vmatmul.mubr.f32.gmra.mrb[0].mxu0 %v127
    %v332 = vpop.f32.mrb[0].mxu0
    %v333 = vadd.f32 %v103, %v332
    %v334 = vpop.f32.mrb[0].mxu0
    %v335 = vadd.f32 %v107, %v334
    %336 = vmatprep.mubr.f32.mxu0 0.0
    %337 = vmatmul.mubr.f32.gmra.mrb[0].mxu0 %v130
    %v338 = vpop.f32.mrb[0].mxu0
    %v339 = vadd.f32 %v103, %v338
    %v340 = vpop.f32.mrb[0].mxu0
    %v341 = vadd.f32 %v107, %v340
    %342 = vmatprep.mubr.f32.mxu0 0.0
    %343 = vmatmul.mubr.f32.gmra.mrb[0].mxu0 %v133
    %v344 = vpop.f32.mrb[0].mxu0
    %v345 = vadd.f32 %v103, %v344
    %v346 = vpop.f32.mrb[0].mxu0
    %v347 = vadd.f32 %v107, %v346
    %348 = vmatprep.mubr.f32.mxu0 0.0
    %349 = vmatmul.mubr.f32.gmra.mrb[0].mxu0 %v136
    %v350 = vpop.f32.mrb[0].mxu0
    %v351 = vadd.f32 %v103, %v350
    %v352 = vpop.f32.mrb[0].mxu0
    %v353 = vadd.f32 %v107, %v352
    %354 = vmatprep.mubr.f32.mxu0 0.0
    %355 = vmatmul.mubr.f32.gmra.mrb[0].mxu0 %v139
    %v356 = vpop.f32.mrb[0].mxu0
    %v357 = vadd.f32 %v103, %v356
    %v358 = vpop.f32.mrb[0].mxu0
    %v359 = vadd.f32 %v107, %v358
    %360 = vmatprep.mubr.f32.mxu0 0.0
    %361 = vmatmul.mubr.f32.gmra.mrb[0].mxu0 %v142
    %v362 = vpop.f32.mrb[0].mxu0
    %v363 = vadd.f32 %v103, %v362
    %v364 = vpop.f32.mrb[0].mxu0
    %v365 = vadd.f32 %v107, %v364
    %366 = vmatprep.mubr.f32.mxu0 0.0
    %367 = vmatmul.mubr.f32.gmra.mrb[0].mxu0 %v145
    %v368 = vpop.f32.mrb[0].mxu0
    %v369 = vadd.f32 %v103, %v368
    %v370 = vpop.f32.mrb[0].mxu0
    %v371 = vadd.f32 %v107, %v370
    %372 = vdwg.mxu0
    %373 = vmatprep.subr.mxu0 %v47
    %374 = vmatpush1.msra.mxu0 %v46
    %375 = vmatprep.subr.mxu0 %v53
    %376 = vmatpush1.msra.mxu0 %v52
    %377 = vmatprep.subr.mxu0 %v59
    %378 = vmatpush1.msra.mxu0 %v58
    %379 = vmatprep.subr.mxu0 %v65
    %380 = vmatpush1.msra.mxu0 %v64
    %381 = vmatprep.subr.mxu0 %v71
    %382 = vmatpush1.msra.mxu0 %v70
    %383 = vmatprep.subr.mxu0 %v77
    %384 = vmatpush1.msra.mxu0 %v76
    %385 = vmatprep.subr.mxu0 %v83
    %386 = vmatpush1.msra.mxu0 %v82
    %387 = vmatprep.subr.mxu0 %v89
    %388 = vmatpush1.msra.mxu0 %v88
    %389 = vmatprep.subr.mxu0 0.0
    %390 = vmatpush1.msra.mxu0 0.0
    %391 = vmatprep.subr.mxu0 0.0
    %392 = vmatpush1.msra.mxu0 0.0
    %393 = vmatprep.subr.mxu0 0.0
    %394 = vmatpush1.msra.mxu0 0.0
    %395 = vmatprep.subr.mxu0 0.0
    %396 = vmatpush1.msra.mxu0 0.0
    %397 = vmatprep.subr.mxu0 0.0
    %398 = vmatpush1.msra.mxu0 0.0
    %399 = vmatprep.subr.mxu0 0.0
    %400 = vmatpush1.msra.mxu0 0.0
    %401 = vmatprep.subr.mxu0 0.0
    %402 = vmatpush1.msra.mxu0 0.0
    %403 = vmatprep.subr.mxu0 0.0
    %404 = vmatpush1.msra.mxu0 0.0
    %405 = vmatprep.subr.mxu0 0.0
    %406 = vmatpush1.msra.mxu0 0.0
    %407 = vmatprep.subr.mxu0 0.0
    %408 = vmatpush1.msra.mxu0 0.0
    %409 = vmatprep.subr.mxu0 0.0
    %410 = vmatpush1.msra.mxu0 0.0
    %411 = vmatprep.subr.mxu0 0.0
    %412 = vmatpush1.msra.mxu0 0.0
    %413 = vmatprep.subr.mxu0 0.0
    %414 = vmatpush1.msra.mxu0 0.0
    %415 = vmatprep.subr.mxu0 0.0
    %416 = vmatpush1.msra.mxu0 0.0
    %417 = vmatprep.subr.mxu0 0.0
    %418 = vmatpush1.msra.mxu0 0.0
    %419 = vmatprep.subr.mxu0 0.0
    %420 = vmatpush1.msra.mxu0 0.0
    %421 = vmatprep.subr.mxu0 0.0
    %422 = vmatpush1.msra.mxu0 0.0
    %423 = vmatprep.subr.mxu0 0.0
    %424 = vmatpush1.msra.mxu0 0.0
    %425 = vmatprep.subr.mxu0 0.0
    %426 = vmatpush1.msra.mxu0 0.0
    %427 = vmatprep.subr.mxu0 0.0
    %428 = vmatpush1.msra.mxu0 0.0
    %429 = vmatprep.subr.mxu0 0.0
    %430 = vmatpush1.msra.mxu0 0.0
    %431 = vmatprep.subr.mxu0 0.0
    %432 = vmatpush1.msra.mxu0 0.0
    %433 = vmatprep.subr.mxu0 0.0
    %434 = vmatpush1.msra.mxu0 0.0
    %435 = vmatprep.subr.mxu0 0.0
    %436 = vmatpush1.msra.mxu0 0.0
    %437 = vmatprep.mubr.f32.mxu0 0.0
    %438 = vmatmul.mubr.f32.gmra.mrb[0].mxu0 %v124
    %v439 = vpop.f32.mrb[0].mxu0
    %v440 = vadd.f32 %v111, %v439
    %v441 = vpop.f32.mrb[0].mxu0
    %v442 = vadd.f32 %v115, %v441
    %443 = vmatprep.mubr.f32.mxu0 0.0
    %444 = vmatmul.mubr.f32.gmra.mrb[0].mxu0 %v127
    %v445 = vpop.f32.mrb[0].mxu0
    %v446 = vadd.f32 %v111, %v445
    %v447 = vpop.f32.mrb[0].mxu0
    %v448 = vadd.f32 %v115, %v447
    %449 = vmatprep.mubr.f32.mxu0 0.0
    %450 = vmatmul.mubr.f32.gmra.mrb[0].mxu0 %v130
    %v451 = vpop.f32.mrb[0].mxu0
    %v452 = vadd.f32 %v111, %v451
    %v453 = vpop.f32.mrb[0].mxu0
    %v454 = vadd.f32 %v115, %v453
    %455 = vmatprep.mubr.f32.mxu0 0.0
    %456 = vmatmul.mubr.f32.gmra.mrb[0].mxu0 %v133
    %v457 = vpop.f32.mrb[0].mxu0
    %v458 = vadd.f32 %v111, %v457
    %v459 = vpop.f32.mrb[0].mxu0
    %v460 = vadd.f32 %v115, %v459
    %461 = vmatprep.mubr.f32.mxu0 0.0
    %462 = vmatmul.mubr.f32.gmra.mrb[0].mxu0 %v136
    %v463 = vpop.f32.mrb[0].mxu0
    %v464 = vadd.f32 %v111, %v463
    %v465 = vpop.f32.mrb[0].mxu0
    %v466 = vadd.f32 %v115, %v465
    %467 = vmatprep.mubr.f32.mxu0 0.0
    %468 = vmatmul.mubr.f32.gmra.mrb[0].mxu0 %v139
    %v469 = vpop.f32.mrb[0].mxu0
    %v470 = vadd.f32 %v111, %v469
    %v471 = vpop.f32.mrb[0].mxu0
    %v472 = vadd.f32 %v115, %v471
    %473 = vmatprep.mubr.f32.mxu0 0.0
    %474 = vmatmul.mubr.f32.gmra.mrb[0].mxu0 %v142
    %v475 = vpop.f32.mrb[0].mxu0
    %v476 = vadd.f32 %v111, %v475
    %v477 = vpop.f32.mrb[0].mxu0
    %v478 = vadd.f32 %v115, %v477
    %479 = vmatprep.mubr.f32.mxu0 0.0
    %480 = vmatmul.mubr.f32.gmra.mrb[0].mxu0 %v145
    %v481 = vpop.f32.mrb[0].mxu0
    %v482 = vadd.f32 %v111, %v481
    %v483 = vpop.f32.mrb[0].mxu0
    %v484 = vadd.f32 %v115, %v483
    %485 = vdwg.mxu0
    %486 = vst [vmem:[%s5] sm:$0xff] %v214
    %487 = vst [vmem:[%s5 + $0x8] sm:$0xff] %v216
    %488 = vst [vmem:[%s5 + $0x10] sm:$0xff] %v327
    %489 = vst [vmem:[%s5 + $0x18] sm:$0xff] %v329
    %490 = vst [vmem:[%s5 + $0x20] sm:$0xff] %v440
    %491 = vst [vmem:[%s5 + $0x28] sm:$0xff] %v442
    %492 = vst [vmem:[%s5 + $0x30] sm:$0xff] %v220
    %493 = vst [vmem:[%s5 + $0x38] sm:$0xff] %v222
    %494 = vst [vmem:[%s5 + $0x40] sm:$0xff] %v333
    %495 = vst [vmem:[%s5 + $0x48] sm:$0xff] %v335
    %496 = vst [vmem:[%s5 + $0x50] sm:$0xff] %v446
    %497 = vst [vmem:[%s5 + $0x58] sm:$0xff] %v448
    %498 = vst [vmem:[%s5 + $0x60] sm:$0xff] %v226
    %499 = vst [vmem:[%s5 + $0x68] sm:$0xff] %v228
    %500 = vst [vmem:[%s5 + $0x70] sm:$0xff] %v339
    %501 = vst [vmem:[%s5 + $0x78] sm:$0xff] %v341
    %502 = vst [vmem:[%s5 + $0x80] sm:$0xff] %v452
    %503 = vst [vmem:[%s5 + $0x88] sm:$0xff] %v454
    %504 = vst [vmem:[%s5 + $0x90] sm:$0xff] %v232
    %505 = vst [vmem:[%s5 + $0x98] sm:$0xff] %v234
    %506 = vst [vmem:[%s5 + $0xa0] sm:$0xff] %v345
    %507 = vst [vmem:[%s5 + $0xa8] sm:$0xff] %v347
    %508 = vst [vmem:[%s5 + $0xb0] sm:$0xff] %v458
    %509 = vst [vmem:[%s5 + $0xb8] sm:$0xff] %v460
    %510 = vst [vmem:[%s5 + $0xc0] sm:$0xff] %v238
    %511 = vst [vmem:[%s5 + $0xc8] sm:$0xff] %v240
    %512 = vst [vmem:[%s5 + $0xd0] sm:$0xff] %v351
    %513 = vst [vmem:[%s5 + $0xd8] sm:$0xff] %v353
    %514 = vst [vmem:[%s5 + $0xe0] sm:$0xff] %v464
    %515 = vst [vmem:[%s5 + $0xe8] sm:$0xff] %v466
    %516 = vst [vmem:[%s5 + $0xf0] sm:$0xff] %v244
    %517 = vst [vmem:[%s5 + $0xf8] sm:$0xff] %v246
    %518 = vst [vmem:[%s5 + $0x100] sm:$0xff] %v357
    %519 = vst [vmem:[%s5 + $0x108] sm:$0xff] %v359
    %520 = vst [vmem:[%s5 + $0x110] sm:$0xff] %v470
    %521 = vst [vmem:[%s5 + $0x118] sm:$0xff] %v472
    %522 = vst [vmem:[%s5 + $0x120] sm:$0xff] %v250
    %523 = vst [vmem:[%s5 + $0x128] sm:$0xff] %v252
    %524 = vst [vmem:[%s5 + $0x130] sm:$0xff] %v363
    %525 = vst [vmem:[%s5 + $0x138] sm:$0xff] %v365
    %526 = vst [vmem:[%s5 + $0x140] sm:$0xff] %v476
    %527 = vst [vmem:[%s5 + $0x148] sm:$0xff] %v478
    %528 = vst [vmem:[%s5 + $0x150] sm:$0xff] %v256
    %529 = vst [vmem:[%s5 + $0x158] sm:$0xff] %v258
    %530 = vst [vmem:[%s5 + $0x160] sm:$0xff] %v369
    %531 = vst [vmem:[%s5 + $0x168] sm:$0xff] %v371
    %532 = vst [vmem:[%s5 + $0x170] sm:$0xff] %v482
    %533 = vst [vmem:[%s5 + $0x178] sm:$0xff] %v484
    // Predicated region
    $region26: #{_lambda_.6} parent=1 // pred_check
      _
    $region27: #{_lambda_.6} parent=1 // pred_check_branch
      %535 = sbr.rel (0) target = $region29
    $region28: #{_lambda_.6} parent=1 // pred_region
      _
    $region29: #{_lambda_.6} parent=1 // pred_fallthru
      _
    // Predicated region
    $region30: #{_lambda_.6} parent=1 // pred_check
      _
    $region31: #{_lambda_.6} parent=1 // pred_check_branch
      %537 = sbr.rel (0) target = $region33
    $region32: #{_lambda_.6} parent=1 // pred_region
      _
    $region33: #{_lambda_.6} parent=1 // pred_fallthru
      _
    %538 = vsyncpa [#allocation3], 1

// kernel: _lambda_.7
$region0: #{_lambda_.7}
  #allocation0 [shape = 'u32[]', space=smem, size = 0x4, offset = 0x4, fixed_abs, tag = 'smem constant byte address 0x4 - core index']
  #allocation1 [shape = 'u32[144,128]{1,0:T(1,128)}', space=vmem, size = 0x12000, scoped, tag = 'internal scratch']
  #allocation2 [shape = 'f32[2,128]{1,0:T(2,128)}', space=vmem, size = 0x400, scoped, tag = 'scratch operand']
  %s0 = inlined_call_operand.vmem [shape: f32[32,2,768], index: 0, kind: input, shape index: {}]
  %s1 = inlined_call_operand.vmem [shape: f32[128,768], index: 1, kind: input, shape index: {}]
  %s2 = inlined_call_operand.vmem [shape: f32[1,256], index: 2, kind: input, shape index: {}]
  %s3 = inlined_call_operand.vmem [shape: f32[2,2,128], index: 3, kind: input, shape index: {}]
  %s4 = inlined_call_operand.vmem [shape: f32[32,2,256], index: 4, kind: output, shape index: {0}]
  %s5 = inlined_call_operand.vmem [shape: f32[2,2,128], index: 5, kind: output, shape index: {1}]
  %6 = xla_tuple %s4, %s5
  %s7 = sld [smem:[#allocation0]]
  $region169: #{_lambda_.7} parent=0
    _
  %s9 = ssub.s32 1, %s7
  %s10 = scalar_select 0, %s9, %s7
  $region1: #{_lambda_.7} parent=0
    #allocation3 [shape = 'u8[98304]{0}', space=vmem, size = 0x18000, scoped, tag = 'input window, operand 0']
    #allocation4 [shape = 'u8[393216]{0}', space=vmem, size = 0x60000, scoped, tag = 'input window, operand 1']
    #allocation5 [shape = 'u8[32768]{0}', space=vmem, size = 0x8000, scoped, tag = 'output window, operand 0']
    loop: start=0, step=1, limit=6
    $region2: #{_lambda_.7} parent=1 // loop_pre_header
      _
    $region3: #{_lambda_.7} parent=1 // loop_header
      %s12 = sphi 0, %s16
      %p13 = scmp.ge.s32.totalorder %s12, 6
      %s19 = sphi 0, %s31
      %s20 = sphi 0, %s27
      %s21 = sphi 0, %s19
      %s22 = sphi 0, %s20
      %s23 = sphi 0, %s21
      %s24 = sphi 0, %s22
      %s44 = sphi 0, %s46
      %s47 = sphi 0, %s44
      %s48 = sphi 0, %s47
      %s64 = sphi 0, %s48
      %s70 = sphi 0, %s72
      %s73 = sphi 0, %s70
      %s74 = sphi 0, %s73
      %s90 = sphi 0, %s74
      %s96 = sphi 0, %s98
      %s99 = sphi 0, %s96
      %s100 = sphi 0, %s99
      %s116 = sphi 0, %s100
      %s122 = sphi 0, %s124
      %s125 = sphi 0, %s122
      %s126 = sphi 0, %s125
      %s142 = sphi 0, %s126
      %s158 = sphi 0, %s160
      %s161 = sphi 0, %s158
      %s162 = sphi 0, %s161
      %s178 = sphi 0, %s162
      %s184 = sphi 0, %s186
      %s187 = sphi 0, %s184
      %s188 = sphi 0, %s187
      %s204 = sphi 0, %s188
    $region4: #{_lambda_.7} parent=1 // loop_header_branch
      %15 = sbr.rel (%p13) target = $region8
    $region5: #{_lambda_.7} parent=1 // loop_body
      %s17 = ssub.s32 %s12, 1
      %s18 = ssub.s32 %s12, 2
      %s25 = sadd.s32 1, %s20
      %p26 = scmp.ge.s32.totalorder %s25, 2
      %s27 = scalar_select %p26, 0, %s25
      %s28 = sadd.s32 1, %s19
      %s29 = scalar_select %p26, %s28, %s19
      %p30 = scmp.ge.s32.totalorder %s29, 2
      %s31 = scalar_select %p30, 0, %s29
      %s32 = smul.u32 %s19, 2
      %s33 = ssub.s32 1, %s32
      %s34 = smul.u32 %s33, %s20
      %s35 = sadd.s32 %s19, %s34
      %s36 = smul.u32 %s31, 2
      %s37 = ssub.s32 1, %s36
      %s38 = smul.u32 %s37, %s27
      %s39 = sadd.s32 %s31, %s38
      %s40 = ssub.s32 %s35, %s39
      %s41 = ssub.s32 %s19, %s31
      %s42 = sor.u32 %s40, %s41
      %p43 = scmp.eq.s32.totalorder %s42, 0
      %s45 = sadd.s32 %s44, 1
      %s46 = scalar_select %p43, %s44, %s45
      %p49 = pneg %p43
      %p50 = scmp.eq.s32.totalorder %s12, 3
      %p51 = por %p49, %p50
      %p52 = scmp.ne.s32.totalorder %s44, %s47
      %p53 = scmp.eq.s32.totalorder %s12, 0
      %p54 = por %p52, %p53
      %p55 = scmp.ne.s32.totalorder %s44, %s47
      %p56 = scmp.eq.s32.totalorder %s17, 3
      %p57 = por %p55, %p56
      %p58 = scmp.ne.s32.totalorder %s47, %s48
      %p59 = scmp.eq.s32.totalorder %s17, 0
      %p60 = por %p58, %p59
      %p61 = scmp.ne.s32.totalorder %s47, %s48
      %p62 = scmp.eq.s32.totalorder %s18, 3
      %p63 = por %p61, %p62
      %p65 = scmp.ne.s32.totalorder %s48, %s64
      %p66 = scmp.eq.s32.totalorder %s18, 0
      %p67 = por %p65, %p66
      %s68 = ssub.s32 %s19, %s31
      %p69 = scmp.eq.s32.totalorder %s68, 0
      %s71 = sadd.s32 %s70, 1
      %s72 = scalar_select %p69, %s70, %s71
      %p75 = pneg %p69
      %p76 = scmp.eq.s32.totalorder %s12, 3
      %p77 = por %p75, %p76
      %p78 = scmp.ne.s32.totalorder %s70, %s73
      %p79 = scmp.eq.s32.totalorder %s12, 0
      %p80 = por %p78, %p79
      %p81 = scmp.ne.s32.totalorder %s70, %s73
      %p82 = scmp.eq.s32.totalorder %s17, 3
      %p83 = por %p81, %p82
      %p84 = scmp.ne.s32.totalorder %s73, %s74
      %p85 = scmp.eq.s32.totalorder %s17, 0
      %p86 = por %p84, %p85
      %p87 = scmp.ne.s32.totalorder %s73, %s74
      %p88 = scmp.eq.s32.totalorder %s18, 3
      %p89 = por %p87, %p88
      %p91 = scmp.ne.s32.totalorder %s74, %s90
      %p92 = scmp.eq.s32.totalorder %s18, 0
      %p93 = por %p91, %p92
      %s94 = ssub.s32 %s19, %s31
      %p95 = scmp.eq.s32.totalorder %s94, 0
      %s97 = sadd.s32 %s96, 1
      %s98 = scalar_select %p95, %s96, %s97
      %p101 = pneg %p95
      %p102 = scmp.eq.s32.totalorder %s12, 3
      %p103 = por %p101, %p102
      %p104 = scmp.ne.s32.totalorder %s96, %s99
      %p105 = scmp.eq.s32.totalorder %s12, 0
      %p106 = por %p104, %p105
      %p107 = scmp.ne.s32.totalorder %s96, %s99
      %p108 = scmp.eq.s32.totalorder %s17, 3
      %p109 = por %p107, %p108
      %p110 = scmp.ne.s32.totalorder %s99, %s100
      %p111 = scmp.eq.s32.totalorder %s17, 0
      %p112 = por %p110, %p111
      %p113 = scmp.ne.s32.totalorder %s99, %s100
      %p114 = scmp.eq.s32.totalorder %s18, 3
      %p115 = por %p113, %p114
      %p117 = scmp.ne.s32.totalorder %s100, %s116
      %p118 = scmp.eq.s32.totalorder %s18, 0
      %p119 = por %p117, %p118
      %s120 = ssub.s32 %s19, %s31
      %p121 = scmp.eq.s32.totalorder %s120, 0
      %s123 = sadd.s32 %s122, 1
      %s124 = scalar_select %p121, %s122, %s123
      %p127 = pneg %p121
      %p128 = scmp.eq.s32.totalorder %s12, 3
      %p129 = por %p127, %p128
      %p130 = scmp.ne.s32.totalorder %s122, %s125
      %p131 = scmp.eq.s32.totalorder %s12, 0
      %p132 = por %p130, %p131
      %p133 = scmp.ne.s32.totalorder %s122, %s125
      %p134 = scmp.eq.s32.totalorder %s17, 3
      %p135 = por %p133, %p134
      %p136 = scmp.ne.s32.totalorder %s125, %s126
      %p137 = scmp.eq.s32.totalorder %s17, 0
      %p138 = por %p136, %p137
      %p139 = scmp.ne.s32.totalorder %s125, %s126
      %p140 = scmp.eq.s32.totalorder %s18, 3
      %p141 = por %p139, %p140
      %p143 = scmp.ne.s32.totalorder %s126, %s142
      %p144 = scmp.eq.s32.totalorder %s18, 0
      %p145 = por %p143, %p144
      %s146 = smul.u32 %s19, 2
      %s147 = ssub.s32 1, %s146
      %s148 = smul.u32 %s147, %s20
      %s149 = sadd.s32 %s19, %s148
      %s150 = smul.u32 %s31, 2
      %s151 = ssub.s32 1, %s150
      %s152 = smul.u32 %s151, %s27
      %s153 = sadd.s32 %s31, %s152
      %s154 = ssub.s32 %s149, %s153
      %s155 = ssub.s32 %s19, %s31
      %s156 = sor.u32 %s154, %s155
      %p157 = scmp.eq.s32.totalorder %s156, 0
      %s159 = sadd.s32 %s158, 1
      %s160 = scalar_select %p157, %s158, %s159
      %p163 = pneg %p157
      %p164 = scmp.eq.s32.totalorder %s12, 3
      %p165 = por %p163, %p164
      %p166 = scmp.ne.s32.totalorder %s158, %s161
      %p167 = scmp.eq.s32.totalorder %s12, 0
      %p168 = por %p166, %p167
      %p169 = scmp.ne.s32.totalorder %s158, %s161
      %p170 = scmp.eq.s32.totalorder %s17, 3
      %p171 = por %p169, %p170
      %p172 = scmp.ne.s32.totalorder %s161, %s162
      %p173 = scmp.eq.s32.totalorder %s17, 0
      %p174 = por %p172, %p173
      %p175 = scmp.ne.s32.totalorder %s161, %s162
      %p176 = scmp.eq.s32.totalorder %s18, 3
      %p177 = por %p175, %p176
      %p179 = scmp.ne.s32.totalorder %s162, %s178
      %p180 = scmp.eq.s32.totalorder %s18, 0
      %p181 = por %p179, %p180
      %s182 = ssub.s32 %s19, %s31
      %p183 = scmp.eq.s32.totalorder %s182, 0
      %s185 = sadd.s32 %s184, 1
      %s186 = scalar_select %p183, %s184, %s185
      %p189 = pneg %p183
      %p190 = scmp.eq.s32.totalorder %s12, 3
      %p191 = por %p189, %p190
      %p192 = scmp.ne.s32.totalorder %s184, %s187
      %p193 = scmp.eq.s32.totalorder %s12, 0
      %p194 = por %p192, %p193
      %p195 = scmp.ne.s32.totalorder %s184, %s187
      %p196 = scmp.eq.s32.totalorder %s17, 3
      %p197 = por %p195, %p196
      %p198 = scmp.ne.s32.totalorder %s187, %s188
      %p199 = scmp.eq.s32.totalorder %s17, 0
      %p200 = por %p198, %p199
      %p201 = scmp.ne.s32.totalorder %s187, %s188
      %p202 = scmp.eq.s32.totalorder %s18, 3
      %p203 = por %p201, %p202
      %p205 = scmp.ne.s32.totalorder %s188, %s204
      %p206 = scmp.eq.s32.totalorder %s18, 0
      %p207 = por %p205, %p206
      %p208 = scmp.le.s32.totalorder 1, %s12
      %p209 = scmp.lt.s32.totalorder %s12, 5
      %p210 = pnand %p208, %p209
      %p211 = pneg %p210
      // Predicated region
      $region9: #{_lambda_.7} parent=5 // pred_check
        _
      $region10: #{_lambda_.7} parent=5 // pred_check_branch
        %213 = sbr.rel (%p210) target = $region12
      $region11: #{_lambda_.7} parent=5 // pred_region
        %s214 = ssub.s32 %s12, 1
      $region12: #{_lambda_.7} parent=5 // pred_fallthru
        _
      %p215 = scmp.lt.s32.totalorder %s12, 4
      // Predicated region
      $region13: #{_lambda_.7} parent=5 // pred_check
        %p216 = pneg %p215
      $region14: #{_lambda_.7} parent=5 // pred_check_branch
        %218 = sbr.rel (%p216) target = $region16
      $region15: #{_lambda_.7} parent=5 // pred_region
        // Predicated region
        $region17: #{_lambda_.7} parent=15 // pred_check
          %p219 = pneg %p54
        $region18: #{_lambda_.7} parent=15 // pred_check_branch
          %221 = sbr.rel (%p219) target = $region20
        $region19: #{_lambda_.7} parent=15 // pred_region
          %s222 = sand.u32 %s44, 1
          %s223 = sand.u32 %s44, 1
          %s224 = smul.addr %s223, 96
          %s225 = scalar_lea.vmem [#allocation3], %s224
          %s226 = smul.u32 %s19, 2
          %s227 = ssub.s32 1, %s226
          %s228 = smul.u32 %s227, %s20
          %s229 = sadd.s32 %s19, %s228
          %s230 = smul.u32 16, %s229
          %s231 = smul.u32 3, %s19
          %s232 = smul.addr %s230, 6
          %s233 = sadd.s32 %s231, %s232
          %s234 = smul.addr %s233, 2
          %s235 = scalar_lea.vmem %s0, %s234
          // Predicated region
          $region21: #{_lambda_.7} parent=19 // pred_check
            _
          $region22: #{_lambda_.7} parent=19 // pred_check_branch
            %237 = sbr.rel (0) target = $region24
          $region23: #{_lambda_.7} parent=19 // pred_region
            // Predicated region
            $region25: #{_lambda_.7} parent=23 // pred_check
              _
            $region26: #{_lambda_.7} parent=23 // pred_check_branch
              %239 = sbr.rel target = $region28
            $region27: #{_lambda_.7} parent=23 // pred_region
              // Predicated region
              $region40: #{_lambda_.7} parent=27 // pred_check
                _
              $region41: #{_lambda_.7} parent=27 // pred_check_branch
                %284 = sbr.rel (0) target = $region43
              $region42: #{_lambda_.7} parent=27 // pred_region
                loop: start=0, step=1, limit=1
                $region44: #{_lambda_.7} parent=42 // loop_pre_header
                  _
                $region45: #{_lambda_.7} parent=42 // loop_header
                  %s286 = sphi 0, %s290
                  %p287 = scmp.ge.s32.totalorder %s286, 1
                  %s291 = sphi %s235, %s235
                  %s292 = sphi %s225, %s225
                $region46: #{_lambda_.7} parent=42 // loop_header_branch
                  %289 = sbr.rel (%p287) target = $region50
                $region47: #{_lambda_.7} parent=42 // loop_body
                  _
                $region48: #{_lambda_.7} parent=42 // loop_footer
                  %s290 = sadd.s32 1, %s286
                $region49: #{_lambda_.7} parent=42 // loop_footer_branch
                  %285 = sbr.rel target = $region45
                $region50: #{_lambda_.7} parent=42 // loop_exit
                  _
                loop: start=0, step=1, limit=1
                $region51: #{_lambda_.7} parent=42 // loop_pre_header
                  _
                $region52: #{_lambda_.7} parent=42 // loop_header
                  %s295 = sphi 0, %s299
                  %p296 = scmp.ge.s32.totalorder %s295, 1
                  %s300 = sphi %s235, %s235
                  %s301 = sphi %s225, %s225
                $region53: #{_lambda_.7} parent=42 // loop_header_branch
                  %298 = sbr.rel (%p296) target = $region57
                $region54: #{_lambda_.7} parent=42 // loop_body
                  %v302 = vld [vmem:[%s300] sm:$0x3f]
                  %303 = vst [vmem:[%s301] sm:$0x3f] %v302
                  %v304 = vld [vmem:[%s300 + $0xc] sm:$0x3f]
                  %305 = vst [vmem:[%s301 + $0x6] sm:$0x3f] %v304
                  %v306 = vld [vmem:[%s300 + $0x18] sm:$0x3f]
                  %307 = vst [vmem:[%s301 + $0xc] sm:$0x3f] %v306
                  %v308 = vld [vmem:[%s300 + $0x24] sm:$0x3f]
                  %309 = vst [vmem:[%s301 + $0x12] sm:$0x3f] %v308
                  %v310 = vld [vmem:[%s300 + $0x30] sm:$0x3f]
                  %311 = vst [vmem:[%s301 + $0x18] sm:$0x3f] %v310
                  %v312 = vld [vmem:[%s300 + $0x3c] sm:$0x3f]
                  %313 = vst [vmem:[%s301 + $0x1e] sm:$0x3f] %v312
                  %v314 = vld [vmem:[%s300 + $0x48] sm:$0x3f]
                  %315 = vst [vmem:[%s301 + $0x24] sm:$0x3f] %v314
                  %v316 = vld [vmem:[%s300 + $0x54] sm:$0x3f]
                  %317 = vst [vmem:[%s301 + $0x2a] sm:$0x3f] %v316
                  %v318 = vld [vmem:[%s300 + $0x60] sm:$0x3f]
                  %319 = vst [vmem:[%s301 + $0x30] sm:$0x3f] %v318
                  %v320 = vld [vmem:[%s300 + $0x6c] sm:$0x3f]
                  %321 = vst [vmem:[%s301 + $0x36] sm:$0x3f] %v320
                  %v322 = vld [vmem:[%s300 + $0x78] sm:$0x3f]
                  %323 = vst [vmem:[%s301 + $0x3c] sm:$0x3f] %v322
                  %v324 = vld [vmem:[%s300 + $0x84] sm:$0x3f]
                  %325 = vst [vmem:[%s301 + $0x42] sm:$0x3f] %v324
                  %v326 = vld [vmem:[%s300 + $0x90] sm:$0x3f]
                  %327 = vst [vmem:[%s301 + $0x48] sm:$0x3f] %v326
                  %v328 = vld [vmem:[%s300 + $0x9c] sm:$0x3f]
                  %329 = vst [vmem:[%s301 + $0x4e] sm:$0x3f] %v328
                  %v330 = vld [vmem:[%s300 + $0xa8] sm:$0x3f]
                  %331 = vst [vmem:[%s301 + $0x54] sm:$0x3f] %v330
                  %v332 = vld [vmem:[%s300 + $0xb4] sm:$0x3f]
                  %333 = vst [vmem:[%s301 + $0x5a] sm:$0x3f] %v332
                $region55: #{_lambda_.7} parent=42 // loop_footer
                  %s299 = sadd.s32 1, %s295
                $region56: #{_lambda_.7} parent=42 // loop_footer_branch
                  %294 = sbr.rel target = $region52
                $region57: #{_lambda_.7} parent=42 // loop_exit
                  _
              $region43: #{_lambda_.7} parent=27 // pred_fallthru
                _
            $region28: #{_lambda_.7} parent=23 // pred_fallthru
              _
            // Predicated region
            $region29: #{_lambda_.7} parent=23 // pred_check
              _
            $region30: #{_lambda_.7} parent=23 // pred_check_branch
              %241 = sbr.rel (0) target = $region32
            $region31: #{_lambda_.7} parent=23 // pred_region
              loop: start=0, step=1, limit=1
              $region33: #{_lambda_.7} parent=31 // loop_pre_header
                _
              $region34: #{_lambda_.7} parent=31 // loop_header
                %s244 = sphi 0, %s248
                %p245 = scmp.ge.s32.totalorder %s244, 1
                %s249 = sphi %s235, %s235
                %s250 = sphi %s225, %s225
              $region35: #{_lambda_.7} parent=31 // loop_header_branch
                %247 = sbr.rel (%p245) target = $region39
              $region36: #{_lambda_.7} parent=31 // loop_body
                %v251 = vld [vmem:[%s249] sm:$0x3f]
                %252 = vst [vmem:[%s250] sm:$0x3f] %v251
                %v253 = vld [vmem:[%s249 + $0xc] sm:$0x3f]
                %254 = vst [vmem:[%s250 + $0x6] sm:$0x3f] %v253
                %v255 = vld [vmem:[%s249 + $0x18] sm:$0x3f]
                %256 = vst [vmem:[%s250 + $0xc] sm:$0x3f] %v255
                %v257 = vld [vmem:[%s249 + $0x24] sm:$0x3f]
                %258 = vst [vmem:[%s250 + $0x12] sm:$0x3f] %v257
                %v259 = vld [vmem:[%s249 + $0x30] sm:$0x3f]
                %260 = vst [vmem:[%s250 + $0x18] sm:$0x3f] %v259
                %v261 = vld [vmem:[%s249 + $0x3c] sm:$0x3f]
                %262 = vst [vmem:[%s250 + $0x1e] sm:$0x3f] %v261
                %v263 = vld [vmem:[%s249 + $0x48] sm:$0x3f]
                %264 = vst [vmem:[%s250 + $0x24] sm:$0x3f] %v263
                %v265 = vld [vmem:[%s249 + $0x54] sm:$0x3f]
                %266 = vst [vmem:[%s250 + $0x2a] sm:$0x3f] %v265
                %v267 = vld [vmem:[%s249 + $0x60] sm:$0x3f]
                %268 = vst [vmem:[%s250 + $0x30] sm:$0x3f] %v267
                %v269 = vld [vmem:[%s249 + $0x6c] sm:$0x3f]
                %270 = vst [vmem:[%s250 + $0x36] sm:$0x3f] %v269
                %v271 = vld [vmem:[%s249 + $0x78] sm:$0x3f]
                %272 = vst [vmem:[%s250 + $0x3c] sm:$0x3f] %v271
                %v273 = vld [vmem:[%s249 + $0x84] sm:$0x3f]
                %274 = vst [vmem:[%s250 + $0x42] sm:$0x3f] %v273
                %v275 = vld [vmem:[%s249 + $0x90] sm:$0x3f]
                %276 = vst [vmem:[%s250 + $0x48] sm:$0x3f] %v275
                %v277 = vld [vmem:[%s249 + $0x9c] sm:$0x3f]
                %278 = vst [vmem:[%s250 + $0x4e] sm:$0x3f] %v277
                %v279 = vld [vmem:[%s249 + $0xa8] sm:$0x3f]
                %280 = vst [vmem:[%s250 + $0x54] sm:$0x3f] %v279
                %v281 = vld [vmem:[%s249 + $0xb4] sm:$0x3f]
                %282 = vst [vmem:[%s250 + $0x5a] sm:$0x3f] %v281
              $region37: #{_lambda_.7} parent=31 // loop_footer
                %s248 = sadd.s32 1, %s244
              $region38: #{_lambda_.7} parent=31 // loop_footer_branch
                %243 = sbr.rel target = $region34
              $region39: #{_lambda_.7} parent=31 // loop_exit
                _
            $region32: #{_lambda_.7} parent=23 // pred_fallthru
              _
          $region24: #{_lambda_.7} parent=19 // pred_fallthru
            _
          %334 = vnop
        $region20: #{_lambda_.7} parent=15 // pred_fallthru
          _
        // Predicated region
        $region58: #{_lambda_.7} parent=15 // pred_check
          %p335 = pneg %p80
        $region59: #{_lambda_.7} parent=15 // pred_check_branch
          %337 = sbr.rel (%p335) target = $region61
        $region60: #{_lambda_.7} parent=15 // pred_region
          %s338 = sand.u32 %s70, 1
          %s339 = sand.u32 %s70, 1
          %s340 = smul.addr %s339, 384
          %s341 = scalar_lea.vmem [#allocation4], %s340
          %s342 = smul.u32 3, %s19
          %s343 = smul.addr %s342, 8
          %s344 = scalar_lea.vmem %s1, %s343
          // Predicated region
          $region62: #{_lambda_.7} parent=60 // pred_check
            _
          $region63: #{_lambda_.7} parent=60 // pred_check_branch
            %346 = sbr.rel (0) target = $region65
          $region64: #{_lambda_.7} parent=60 // pred_region
            // Predicated region
            $region66: #{_lambda_.7} parent=64 // pred_check
              _
            $region67: #{_lambda_.7} parent=64 // pred_check_branch
              %348 = sbr.rel (0) target = $region69
            $region68: #{_lambda_.7} parent=64 // pred_region
              loop: start=0, step=1, limit=1
              $region70: #{_lambda_.7} parent=68 // loop_pre_header
                _
              $region71: #{_lambda_.7} parent=68 // loop_header
                %s350 = sphi 0, %s354
                %p351 = scmp.ge.s32.totalorder %s350, 1
                %s355 = sphi %s344, %s344
                %s356 = sphi %s341, %s341
              $region72: #{_lambda_.7} parent=68 // loop_header_branch
                %353 = sbr.rel (%p351) target = $region76
              $region73: #{_lambda_.7} parent=68 // loop_body
                %v357 = vld [vmem:[%s355] sm:$0xff]
                %358 = vst [vmem:[%s356] sm:$0xff] %v357
                %v359 = vld [vmem:[%s355 + $0x8] sm:$0xff]
                %360 = vst [vmem:[%s356 + $0x8] sm:$0xff] %v359
                %v361 = vld [vmem:[%s355 + $0x10] sm:$0xff]
                %362 = vst [vmem:[%s356 + $0x10] sm:$0xff] %v361
                %v363 = vld [vmem:[%s355 + $0x30] sm:$0xff]
                %364 = vst [vmem:[%s356 + $0x18] sm:$0xff] %v363
                %v365 = vld [vmem:[%s355 + $0x38] sm:$0xff]
                %366 = vst [vmem:[%s356 + $0x20] sm:$0xff] %v365
                %v367 = vld [vmem:[%s355 + $0x40] sm:$0xff]
                %368 = vst [vmem:[%s356 + $0x28] sm:$0xff] %v367
                %v369 = vld [vmem:[%s355 + $0x60] sm:$0xff]
                %370 = vst [vmem:[%s356 + $0x30] sm:$0xff] %v369
                %v371 = vld [vmem:[%s355 + $0x68] sm:$0xff]
                %372 = vst [vmem:[%s356 + $0x38] sm:$0xff] %v371
                %v373 = vld [vmem:[%s355 + $0x70] sm:$0xff]
                %374 = vst [vmem:[%s356 + $0x40] sm:$0xff] %v373
                %v375 = vld [vmem:[%s355 + $0x90] sm:$0xff]
                %376 = vst [vmem:[%s356 + $0x48] sm:$0xff] %v375
                %v377 = vld [vmem:[%s355 + $0x98] sm:$0xff]
                %378 = vst [vmem:[%s356 + $0x50] sm:$0xff] %v377
                %v379 = vld [vmem:[%s355 + $0xa0] sm:$0xff]
                %380 = vst [vmem:[%s356 + $0x58] sm:$0xff] %v379
                %v381 = vld [vmem:[%s355 + $0xc0] sm:$0xff]
                %382 = vst [vmem:[%s356 + $0x60] sm:$0xff] %v381
                %v383 = vld [vmem:[%s355 + $0xc8] sm:$0xff]
                %384 = vst [vmem:[%s356 + $0x68] sm:$0xff] %v383
                %v385 = vld [vmem:[%s355 + $0xd0] sm:$0xff]
                %386 = vst [vmem:[%s356 + $0x70] sm:$0xff] %v385
                %v387 = vld [vmem:[%s355 + $0xf0] sm:$0xff]
                %388 = vst [vmem:[%s356 + $0x78] sm:$0xff] %v387
                %v389 = vld [vmem:[%s355 + $0xf8] sm:$0xff]
                %390 = vst [vmem:[%s356 + $0x80] sm:$0xff] %v389
                %v391 = vld [vmem:[%s355 + $0x100] sm:$0xff]
                %392 = vst [vmem:[%s356 + $0x88] sm:$0xff] %v391
                %v393 = vld [vmem:[%s355 + $0x120] sm:$0xff]
                %394 = vst [vmem:[%s356 + $0x90] sm:$0xff] %v393
                %v395 = vld [vmem:[%s355 + $0x128] sm:$0xff]
                %396 = vst [vmem:[%s356 + $0x98] sm:$0xff] %v395
                %v397 = vld [vmem:[%s355 + $0x130] sm:$0xff]
                %398 = vst [vmem:[%s356 + $0xa0] sm:$0xff] %v397
                %v399 = vld [vmem:[%s355 + $0x150] sm:$0xff]
                %400 = vst [vmem:[%s356 + $0xa8] sm:$0xff] %v399
                %v401 = vld [vmem:[%s355 + $0x158] sm:$0xff]
                %402 = vst [vmem:[%s356 + $0xb0] sm:$0xff] %v401
                %v403 = vld [vmem:[%s355 + $0x160] sm:$0xff]
                %404 = vst [vmem:[%s356 + $0xb8] sm:$0xff] %v403
                %v405 = vld [vmem:[%s355 + $0x180] sm:$0xff]
                %406 = vst [vmem:[%s356 + $0xc0] sm:$0xff] %v405
                %v407 = vld [vmem:[%s355 + $0x188] sm:$0xff]
                %408 = vst [vmem:[%s356 + $0xc8] sm:$0xff] %v407
                %v409 = vld [vmem:[%s355 + $0x190] sm:$0xff]
                %410 = vst [vmem:[%s356 + $0xd0] sm:$0xff] %v409
                %v411 = vld [vmem:[%s355 + $0x1b0] sm:$0xff]
                %412 = vst [vmem:[%s356 + $0xd8] sm:$0xff] %v411
                %v413 = vld [vmem:[%s355 + $0x1b8] sm:$0xff]
                %414 = vst [vmem:[%s356 + $0xe0] sm:$0xff] %v413
                %v415 = vld [vmem:[%s355 + $0x1c0] sm:$0xff]
                %416 = vst [vmem:[%s356 + $0xe8] sm:$0xff] %v415
                %v417 = vld [vmem:[%s355 + $0x1e0] sm:$0xff]
                %418 = vst [vmem:[%s356 + $0xf0] sm:$0xff] %v417
                %v419 = vld [vmem:[%s355 + $0x1e8] sm:$0xff]
                %420 = vst [vmem:[%s356 + $0xf8] sm:$0xff] %v419
                %v421 = vld [vmem:[%s355 + $0x1f0] sm:$0xff]
                %422 = vst [vmem:[%s356 + $0x100] sm:$0xff] %v421
                %v423 = vld [vmem:[%s355 + $0x210] sm:$0xff]
                %424 = vst [vmem:[%s356 + $0x108] sm:$0xff] %v423
                %v425 = vld [vmem:[%s355 + $0x218] sm:$0xff]
                %426 = vst [vmem:[%s356 + $0x110] sm:$0xff] %v425
                %v427 = vld [vmem:[%s355 + $0x220] sm:$0xff]
                %428 = vst [vmem:[%s356 + $0x118] sm:$0xff] %v427
                %v429 = vld [vmem:[%s355 + $0x240] sm:$0xff]
                %430 = vst [vmem:[%s356 + $0x120] sm:$0xff] %v429
                %v431 = vld [vmem:[%s355 + $0x248] sm:$0xff]
                %432 = vst [vmem:[%s356 + $0x128] sm:$0xff] %v431
                %v433 = vld [vmem:[%s355 + $0x250] sm:$0xff]
                %434 = vst [vmem:[%s356 + $0x130] sm:$0xff] %v433
                %v435 = vld [vmem:[%s355 + $0x270] sm:$0xff]
                %436 = vst [vmem:[%s356 + $0x138] sm:$0xff] %v435
                %v437 = vld [vmem:[%s355 + $0x278] sm:$0xff]
                %438 = vst [vmem:[%s356 + $0x140] sm:$0xff] %v437
                %v439 = vld [vmem:[%s355 + $0x280] sm:$0xff]
                %440 = vst [vmem:[%s356 + $0x148] sm:$0xff] %v439
                %v441 = vld [vmem:[%s355 + $0x2a0] sm:$0xff]
                %442 = vst [vmem:[%s356 + $0x150] sm:$0xff] %v441
                %v443 = vld [vmem:[%s355 + $0x2a8] sm:$0xff]
                %444 = vst [vmem:[%s356 + $0x158] sm:$0xff] %v443
                %v445 = vld [vmem:[%s355 + $0x2b0] sm:$0xff]
                %446 = vst [vmem:[%s356 + $0x160] sm:$0xff] %v445
                %v447 = vld [vmem:[%s355 + $0x2d0] sm:$0xff]
                %448 = vst [vmem:[%s356 + $0x168] sm:$0xff] %v447
                %v449 = vld [vmem:[%s355 + $0x2d8] sm:$0xff]
                %450 = vst [vmem:[%s356 + $0x170] sm:$0xff] %v449
                %v451 = vld [vmem:[%s355 + $0x2e0] sm:$0xff]
                %452 = vst [vmem:[%s356 + $0x178] sm:$0xff] %v451
              $region74: #{_lambda_.7} parent=68 // loop_footer
                %s354 = sadd.s32 1, %s350
              $region75: #{_lambda_.7} parent=68 // loop_footer_branch
                %349 = sbr.rel target = $region71
              $region76: #{_lambda_.7} parent=68 // loop_exit
                _
            $region69: #{_lambda_.7} parent=64 // pred_fallthru
              _
            // Predicated region
            $region77: #{_lambda_.7} parent=64 // pred_check
              _
            $region78: #{_lambda_.7} parent=64 // pred_check_branch
              %454 = sbr.rel target = $region80
            $region79: #{_lambda_.7} parent=64 // pred_region
              _
            $region80: #{_lambda_.7} parent=64 // pred_fallthru
              _
          $region65: #{_lambda_.7} parent=60 // pred_fallthru
            _
          %455 = vnop
        $region61: #{_lambda_.7} parent=15 // pred_fallthru
          _
        // Predicated region
        $region81: #{_lambda_.7} parent=15 // pred_check
          %p456 = pneg %p106
        $region82: #{_lambda_.7} parent=15 // pred_check_branch
          %458 = sbr.rel (%p456) target = $region84
        $region83: #{_lambda_.7} parent=15 // pred_region
          %p459 = scmp.lt.s32.totalorder %s19, 1
          %s460 = scalar_select %p459, %s19, 1
          %s461 = scalar_lea.vmem %s2, %s460
        $region84: #{_lambda_.7} parent=15 // pred_fallthru
          _
        // Predicated region
        $region85: #{_lambda_.7} parent=15 // pred_check
          %p462 = pneg %p132
        $region86: #{_lambda_.7} parent=15 // pred_check_branch
          %464 = sbr.rel (%p462) target = $region88
        $region87: #{_lambda_.7} parent=15 // pred_region
          %p465 = scmp.lt.s32.totalorder %s19, 1
          %s466 = scalar_select %p465, %s19, 1
          %s467 = smul.addr %s466, 2
          %s468 = scalar_lea.vmem %s3, %s467
        $region88: #{_lambda_.7} parent=15 // pred_fallthru
          _
      $region16: #{_lambda_.7} parent=5 // pred_fallthru
        _
      %p469 = scmp.le.s32.totalorder 1, %s12
      %p470 = scmp.lt.s32.totalorder %s12, 5
      %p471 = pnand %p469, %p470
      %p472 = pneg %p471
      // Predicated region
      $region89: #{_lambda_.7} parent=5 // pred_check
        _
      $region90: #{_lambda_.7} parent=5 // pred_check_branch
        %474 = sbr.rel (%p471) target = $region92
      $region91: #{_lambda_.7} parent=5 // pred_region
        %s475 = ssub.s32 %s12, 1
        %s476 = sand.u32 %s47, 1
        %s477 = sand.u32 %s47, 1
        %s478 = smul.addr %s477, 96
        %s479 = scalar_lea.vmem [#allocation3], %s478
        // Predicated region
        $region93: #{_lambda_.7} parent=91 // pred_check
          %p480 = pneg %p60
        $region94: #{_lambda_.7} parent=91 // pred_check_branch
          %482 = sbr.rel (%p480) target = $region96
        $region95: #{_lambda_.7} parent=91 // pred_region
          _
        $region96: #{_lambda_.7} parent=91 // pred_fallthru
          _
        %s483 = sand.u32 %s73, 1
        %s484 = sand.u32 %s73, 1
        %s485 = smul.addr %s484, 384
        %s486 = scalar_lea.vmem [#allocation4], %s485
        // Predicated region
        $region97: #{_lambda_.7} parent=91 // pred_check
          %p487 = pneg %p86
        $region98: #{_lambda_.7} parent=91 // pred_check_branch
          %489 = sbr.rel (%p487) target = $region100
        $region99: #{_lambda_.7} parent=91 // pred_region
          _
        $region100: #{_lambda_.7} parent=91 // pred_fallthru
          _
        %s490 = sand.u32 %s47, 1
        %s491 = sand.u32 %s47, 1
        %s492 = smul.addr %s491, 96
        %s493 = scalar_lea.vmem [#allocation3], %s492
        %p494 = pneg %p60
        %p495 = pneg %p57
        %s496 = sand.u32 %s73, 1
        %s497 = sand.u32 %s73, 1
        %s498 = smul.addr %s497, 384
        %s499 = scalar_lea.vmem [#allocation4], %s498
        %p500 = pneg %p86
        %p501 = pneg %p83
        %p502 = scmp.lt.s32.totalorder %s21, 1
        %s503 = scalar_select %p502, %s21, 1
        %s504 = scalar_lea.vmem %s2, %s503
        %p505 = pneg %p112
        %p506 = pneg %p109
        %p507 = scmp.lt.s32.totalorder %s21, 1
        %s508 = scalar_select %p507, %s21, 1
        %s509 = smul.addr %s508, 2
        %s510 = scalar_lea.vmem %s3, %s509
        %p511 = pneg %p138
        %p512 = pneg %p135
        %p513 = pneg %p174
        %p514 = pneg %p171
        %s515 = sand.u32 %s161, 1
        %s516 = sand.u32 %s161, 1
        %s517 = smul.addr %s516, 32
        %s518 = scalar_lea.vmem [#allocation5], %s517
        %p519 = pneg %p200
        %p520 = pneg %p197
        %p521 = scmp.lt.s32.totalorder %s21, 1
        %s522 = scalar_select %p521, %s21, 1
        %s523 = smul.addr %s522, 2
        %s524 = scalar_lea.vmem %s5, %s523
        %s525 = smul.u32 %s21, 2
        %s526 = ssub.s32 1, %s525
        %s527 = smul.u32 %s526, %s22
        %s528 = sadd.s32 %s21, %s527
        %s529 = smul.u32 16, %s528
        %s530 = smul.u32 3, %s21
        %s531 = smul.u32 3, %s21
        %p532 = scmp.lt.s32.totalorder %s21, 1
        %s533 = scalar_select %p532, %s21, 1
        %s534 = scalar_lea.vmem %s2, %s533
        %p535 = scmp.lt.s32.totalorder %s21, 1
        %s536 = scalar_select %p535, %s21, 1
        %s537 = smul.addr %s536, 2
        %s538 = scalar_lea.vmem %s3, %s537
        %s539 = smul.u32 %s21, 2
        %s540 = ssub.s32 1, %s539
        %s541 = smul.u32 %s540, %s22
        %s542 = sadd.s32 %s21, %s541
        %s543 = smul.u32 16, %s542
        %p544 = scmp.lt.s32.totalorder %s21, 1
        %s545 = scalar_select %p544, %s21, 1
        %s546 = smul.addr %s545, 2
        %s547 = scalar_lea.vmem %s5, %s546
        %p548 = scmp.eq.s32.totalorder %s22, 0
        // Predicated region
        $region101: #{_lambda_.7} parent=91 // pred_check
          %p549 = pneg %p548
        $region102: #{_lambda_.7} parent=91 // pred_check_branch
          %551 = sbr.rel (%p549) target = $region104
        $region103: #{_lambda_.7} parent=91 // pred_region
          %v552 = vld [vmem:[%s538] sm:$0x3]
          %553 = vst [vmem:[#allocation2] sm:$0x3] %v552
        $region104: #{_lambda_.7} parent=91 // pred_fallthru
          _
        %v554 = vld [vmem:[%s486] sm:$0xff]
        %v555 = vld [vmem:[%s486 + $0x8] sm:$0xff]
        %v556 = vld [vmem:[%s486 + $0x10] sm:$0xff]
        %v557 = vld [vmem:[%s486 + $0x18] sm:$0xff]
        %v558 = vld [vmem:[%s486 + $0x20] sm:$0xff]
        %v559 = vld [vmem:[%s486 + $0x28] sm:$0xff]
        %v560 = vld [vmem:[%s486 + $0x30] sm:$0xff]
        %v561 = vld [vmem:[%s486 + $0x38] sm:$0xff]
        %v562 = vld [vmem:[%s486 + $0x40] sm:$0xff]
        %v563 = vld [vmem:[%s486 + $0x48] sm:$0xff]
        %v564 = vld [vmem:[%s486 + $0x50] sm:$0xff]
        %v565 = vld [vmem:[%s486 + $0x58] sm:$0xff]
        %v566 = vld [vmem:[%s486 + $0x60] sm:$0xff]
        %v567 = vld [vmem:[%s486 + $0x68] sm:$0xff]
        %v568 = vld [vmem:[%s486 + $0x70] sm:$0xff]
        %v569 = vld [vmem:[%s486 + $0x78] sm:$0xff]
        %v570 = vld [vmem:[%s486 + $0x80] sm:$0xff]
        %v571 = vld [vmem:[%s486 + $0x88] sm:$0xff]
        %v572 = vld [vmem:[%s486 + $0x90] sm:$0xff]
        %v573 = vld [vmem:[%s486 + $0x98] sm:$0xff]
        %v574 = vld [vmem:[%s486 + $0xa0] sm:$0xff]
        %v575 = vld [vmem:[%s486 + $0xa8] sm:$0xff]
        %v576 = vld [vmem:[%s486 + $0xb0] sm:$0xff]
        %v577 = vld [vmem:[%s486 + $0xb8] sm:$0xff]
        %v578 = vld [vmem:[%s486 + $0xc0] sm:$0xff]
        %v579 = vld [vmem:[%s486 + $0xc8] sm:$0xff]
        %v580 = vld [vmem:[%s486 + $0xd0] sm:$0xff]
        %v581 = vld [vmem:[%s486 + $0xd8] sm:$0xff]
        %v582 = vld [vmem:[%s486 + $0xe0] sm:$0xff]
        %v583 = vld [vmem:[%s486 + $0xe8] sm:$0xff]
        %v584 = vld [vmem:[%s486 + $0xf0] sm:$0xff]
        %v585 = vld [vmem:[%s486 + $0xf8] sm:$0xff]
        %v586 = vld [vmem:[%s486 + $0x100] sm:$0xff]
        %v587 = vld [vmem:[%s486 + $0x108] sm:$0xff]
        %v588 = vld [vmem:[%s486 + $0x110] sm:$0xff]
        %v589 = vld [vmem:[%s486 + $0x118] sm:$0xff]
        %v590 = vld [vmem:[%s486 + $0x120] sm:$0xff]
        %v591 = vld [vmem:[%s486 + $0x128] sm:$0xff]
        %v592 = vld [vmem:[%s486 + $0x130] sm:$0xff]
        %v593 = vld [vmem:[%s486 + $0x138] sm:$0xff]
        %v594 = vld [vmem:[%s486 + $0x140] sm:$0xff]
        %v595 = vld [vmem:[%s486 + $0x148] sm:$0xff]
        %v596 = vld [vmem:[%s486 + $0x150] sm:$0xff]
        %v597 = vld [vmem:[%s486 + $0x158] sm:$0xff]
        %v598 = vld [vmem:[%s486 + $0x160] sm:$0xff]
        %v599 = vld [vmem:[%s486 + $0x168] sm:$0xff]
        %v600 = vld [vmem:[%s486 + $0x170] sm:$0xff]
        %v601 = vld [vmem:[%s486 + $0x178] sm:$0xff]
        %v602 = vld [vmem:[%s534] sm:$0x1]
        %v603 = vld [vmem:[#allocation2] sm:$0x3]
        loop: start=0, step=1, limit=16
        $region105: #{_lambda_.7} parent=91 // loop_pre_header
          _
        $region106: #{_lambda_.7} parent=91 // loop_header
          %s605 = sphi 0, %s609
          %p606 = scmp.ge.s32.totalorder %s605, 16
          %v610 = vphi %v603, %v793
        $region107: #{_lambda_.7} parent=91 // loop_header_branch
          %608 = sbr.rel (%p606) target = $region111
        $region108: #{_lambda_.7} parent=91 // loop_body
          %s611 = smul.u32 %s21, 15
          %s612 = smul.u32 %s21, 2
          %s613 = ssub.s32 1, %s612
          %s614 = smul.u32 %s613, %s605
          %s615 = sadd.s32 %s611, %s614
          %s616 = smul.u32 %s615, 3
          %s617 = smul.addr %s616, 2
          %s618 = scalar_lea.vmem %s479, %s617 [#allocation3]
          %v619 = vld [vmem:[%s618] sm:$0x3f]
          %620 = vmatprep.subr.mxu0 %v555
          %621 = vmatpush1.msra.mxu0 %v554
          %622 = vmatprep.subr.mxu0 %v558
          %623 = vmatpush1.msra.mxu0 %v557
          %624 = vmatprep.subr.mxu0 %v561
          %625 = vmatpush1.msra.mxu0 %v560
          %626 = vmatprep.subr.mxu0 %v564
          %627 = vmatpush1.msra.mxu0 %v563
          %628 = vmatprep.subr.mxu0 %v567
          %629 = vmatpush1.msra.mxu0 %v566
          %630 = vmatprep.subr.mxu0 %v570
          %631 = vmatpush1.msra.mxu0 %v569
          %632 = vmatprep.subr.mxu0 %v573
          %633 = vmatpush1.msra.mxu0 %v572
          %634 = vmatprep.subr.mxu0 %v576
          %635 = vmatpush1.msra.mxu0 %v575
          %636 = vmatprep.subr.mxu0 %v579
          %637 = vmatpush1.msra.mxu0 %v578
          %638 = vmatprep.subr.mxu0 %v582
          %639 = vmatpush1.msra.mxu0 %v581
          %640 = vmatprep.subr.mxu0 %v585
          %641 = vmatpush1.msra.mxu0 %v584
          %642 = vmatprep.subr.mxu0 %v588
          %643 = vmatpush1.msra.mxu0 %v587
          %644 = vmatprep.subr.mxu0 %v591
          %645 = vmatpush1.msra.mxu0 %v590
          %646 = vmatprep.subr.mxu0 %v594
          %647 = vmatpush1.msra.mxu0 %v593
          %648 = vmatprep.subr.mxu0 %v597
          %649 = vmatpush1.msra.mxu0 %v596
          %650 = vmatprep.subr.mxu0 %v600
          %651 = vmatpush1.msra.mxu0 %v599
          %652 = vmatprep.subr.mxu0 0.0
          %653 = vmatpush1.msra.mxu0 0.0
          %654 = vmatprep.subr.mxu0 0.0
          %655 = vmatpush1.msra.mxu0 0.0
          %656 = vmatprep.subr.mxu0 0.0
          %657 = vmatpush1.msra.mxu0 0.0
          %658 = vmatprep.subr.mxu0 0.0
          %659 = vmatpush1.msra.mxu0 0.0
          %660 = vmatprep.subr.mxu0 0.0
          %661 = vmatpush1.msra.mxu0 0.0
          %662 = vmatprep.subr.mxu0 0.0
          %663 = vmatpush1.msra.mxu0 0.0
          %664 = vmatprep.subr.mxu0 0.0
          %665 = vmatpush1.msra.mxu0 0.0
          %666 = vmatprep.subr.mxu0 0.0
          %667 = vmatpush1.msra.mxu0 0.0
          %668 = vmatprep.subr.mxu0 0.0
          %669 = vmatpush1.msra.mxu0 0.0
          %670 = vmatprep.subr.mxu0 0.0
          %671 = vmatpush1.msra.mxu0 0.0
          %672 = vmatprep.subr.mxu0 0.0
          %673 = vmatpush1.msra.mxu0 0.0
          %674 = vmatprep.subr.mxu0 0.0
          %675 = vmatpush1.msra.mxu0 0.0
          %676 = vmatprep.subr.mxu0 0.0
          %677 = vmatpush1.msra.mxu0 0.0
          %678 = vmatprep.subr.mxu0 0.0
          %679 = vmatpush1.msra.mxu0 0.0
          %680 = vmatprep.subr.mxu0 0.0
          %681 = vmatpush1.msra.mxu0 0.0
          %682 = vmatprep.subr.mxu0 0.0
          %683 = vmatpush1.msra.mxu0 0.0
          %684 = vmatprep.mubr.f32.mxu0 0.0
          %685 = vmatmul.mubr.f32.gmra.mrb[0].mxu0 %v610
          %v686 = vpop.f32.mrb[0].mxu0
          %v687 = vadd.f32 0.0, %v686
          %v688 = vpop.f32.mrb[0].mxu0
          %v689 = vadd.f32 0.0, %v688
          %690 = vdwg.mxu0
          %691 = vmatprep.subr.mxu0 0.0
          %692 = vmatpush1.msra.mxu0 %v556
          %693 = vmatprep.subr.mxu0 0.0
          %694 = vmatpush1.msra.mxu0 %v559
          %695 = vmatprep.subr.mxu0 0.0
          %696 = vmatpush1.msra.mxu0 %v562
          %697 = vmatprep.subr.mxu0 0.0
          %698 = vmatpush1.msra.mxu0 %v565
          %699 = vmatprep.subr.mxu0 0.0
          %700 = vmatpush1.msra.mxu0 %v568
          %701 = vmatprep.subr.mxu0 0.0
          %702 = vmatpush1.msra.mxu0 %v571
          %703 = vmatprep.subr.mxu0 0.0
          %704 = vmatpush1.msra.mxu0 %v574
          %705 = vmatprep.subr.mxu0 0.0
          %706 = vmatpush1.msra.mxu0 %v577
          %707 = vmatprep.subr.mxu0 0.0
          %708 = vmatpush1.msra.mxu0 %v580
          %709 = vmatprep.subr.mxu0 0.0
          %710 = vmatpush1.msra.mxu0 %v583
          %711 = vmatprep.subr.mxu0 0.0
          %712 = vmatpush1.msra.mxu0 %v586
          %713 = vmatprep.subr.mxu0 0.0
          %714 = vmatpush1.msra.mxu0 %v589
          %715 = vmatprep.subr.mxu0 0.0
          %716 = vmatpush1.msra.mxu0 %v592
          %717 = vmatprep.subr.mxu0 0.0
          %718 = vmatpush1.msra.mxu0 %v595
          %719 = vmatprep.subr.mxu0 0.0
          %720 = vmatpush1.msra.mxu0 %v598
          %721 = vmatprep.subr.mxu0 0.0
          %722 = vmatpush1.msra.mxu0 %v601
          %723 = vmatprep.subr.mxu0 0.0
          %724 = vmatpush1.msra.mxu0 0.0
          %725 = vmatprep.subr.mxu0 0.0
          %726 = vmatpush1.msra.mxu0 0.0
          %727 = vmatprep.subr.mxu0 0.0
          %728 = vmatpush1.msra.mxu0 0.0
          %729 = vmatprep.subr.mxu0 0.0
          %730 = vmatpush1.msra.mxu0 0.0
          %731 = vmatprep.subr.mxu0 0.0
          %732 = vmatpush1.msra.mxu0 0.0
          %733 = vmatprep.subr.mxu0 0.0
          %734 = vmatpush1.msra.mxu0 0.0
          %735 = vmatprep.subr.mxu0 0.0
          %736 = vmatpush1.msra.mxu0 0.0
          %737 = vmatprep.subr.mxu0 0.0
          %738 = vmatpush1.msra.mxu0 0.0
          %739 = vmatprep.subr.mxu0 0.0
          %740 = vmatpush1.msra.mxu0 0.0
          %741 = vmatprep.subr.mxu0 0.0
          %742 = vmatpush1.msra.mxu0 0.0
          %743 = vmatprep.subr.mxu0 0.0
          %744 = vmatpush1.msra.mxu0 0.0
          %745 = vmatprep.subr.mxu0 0.0
          %746 = vmatpush1.msra.mxu0 0.0
          %747 = vmatprep.subr.mxu0 0.0
          %748 = vmatpush1.msra.mxu0 0.0
          %749 = vmatprep.subr.mxu0 0.0
          %750 = vmatpush1.msra.mxu0 0.0
          %751 = vmatprep.subr.mxu0 0.0
          %752 = vmatpush1.msra.mxu0 0.0
          %753 = vmatprep.subr.mxu0 0.0
          %754 = vmatpush1.msra.mxu0 0.0
          %755 = vmatprep.mubr.f32.mxu0 0.0
          %756 = vmatmul.mubr.f32.gmra.mrb[0].mxu0 %v610
          %v757 = vpop.f32.mrb[0].mxu0
          %v758 = vadd.f32 0.0, %v757
          %v759 = vpop.f32.mrb[0].mxu0
          %760 = vdwg.mxu0
          %v761 = vadd.f32 %v619, %v687
          %v762 = vxor.u32 %v761, 2147483648
          %v763 = vmul.f32 %v762, 1.442695
          %v764 = vpow.pop %v763
          %v765 = vadd.f32 %v764, 1.0
          %v766 = vrcp.pop %v765
          %v767 = vmul.f32 1.0, %v766
          %v769 = vrot.slane %v619, 2
          %v771 = vadd.f32 %v769, %v689
          %v772 = vxor.u32 %v771, 2147483648
          %v773 = vmul.f32 %v772, 1.442695
          %v774 = vpow.pop %v773
          %v775 = vadd.f32 %v774, 1.0
          %v776 = vrcp.pop %v775
          %v777 = vmul.f32 1.0, %v776
          %v779 = vlaneseq
          %v780 = vshrl.u32 %v779, 7
          %v781 = vsub.s32 0, %v780
          %v782 = vrot.slane %v602, %v781
          %v784 = vadd.f32 %v758, %v782
          %v785 = vmul.f32 %v767, %v784
          %v786 = vrot.slane %v619, 4
          %v788 = vadd.f32 %v786, %v785
          %v789 = vtanh.pop %v788
          %v790 = vsub.f32 1.0, %v777
          %v791 = vmul.f32 %v790, %v789
          %v792 = vmul.f32 %v777, %v610
          %v793 = vadd.f32 %v791, %v792
          %s794 = smul.u32 %s615, 2
          %s795 = scalar_lea.vmem %s518, %s794 [#allocation5]
          %796 = vst [vmem:[%s795] sm:$0x3] %v793
        $region109: #{_lambda_.7} parent=91 // loop_footer
          %s609 = sadd.s32 1, %s605
        $region110: #{_lambda_.7} parent=91 // loop_footer_branch
          %604 = sbr.rel target = $region106
        $region111: #{_lambda_.7} parent=91 // loop_exit
          _
        %797 = vst [vmem:[#allocation2] sm:$0x3] %v610
        %798 = vst [vmem:[%s547] sm:$0x3] %v610
        %s799 = sand.u32 %s161, 1
        %s800 = sand.u32 %s161, 1
        %s801 = smul.addr %s800, 32
        %s802 = scalar_lea.vmem [#allocation5], %s801
        %p803 = scmp.lt.s32.totalorder %s21, 1
        %s804 = scalar_select %p803, %s21, 1
        %s805 = smul.addr %s804, 2
        %s806 = scalar_lea.vmem %s5, %s805
        // Predicated region
        $region112: #{_lambda_.7} parent=91 // pred_check
          %p807 = pneg %p171
        $region113: #{_lambda_.7} parent=91 // pred_check_branch
          %809 = sbr.rel (%p807) target = $region115
        $region114: #{_lambda_.7} parent=91 // pred_region
          %s810 = smul.u32 %s21, 2
          %s811 = ssub.s32 1, %s810
          %s812 = smul.u32 %s811, %s22
          %s813 = sadd.s32 %s21, %s812
          %s814 = smul.u32 16, %s813
          %s815 = smul.addr %s814, 2
          %s816 = sadd.s32 %s21, %s815
          %s817 = smul.addr %s816, 2
          %s818 = scalar_lea.vmem %s4, %s817
          // Predicated region
          $region116: #{_lambda_.7} parent=114 // pred_check
            _
          $region117: #{_lambda_.7} parent=114 // pred_check_branch
            %820 = sbr.rel (0) target = $region119
          $region118: #{_lambda_.7} parent=114 // pred_region
            // Predicated region
            $region120: #{_lambda_.7} parent=118 // pred_check
              _
            $region121: #{_lambda_.7} parent=118 // pred_check_branch
              %822 = sbr.rel target = $region123
            $region122: #{_lambda_.7} parent=118 // pred_region
              // Predicated region
              $region135: #{_lambda_.7} parent=122 // pred_check
                _
              $region136: #{_lambda_.7} parent=122 // pred_check_branch
                %867 = sbr.rel (0) target = $region138
              $region137: #{_lambda_.7} parent=122 // pred_region
                loop: start=0, step=1, limit=1
                $region139: #{_lambda_.7} parent=137 // loop_pre_header
                  _
                $region140: #{_lambda_.7} parent=137 // loop_header
                  %s869 = sphi 0, %s873
                  %p870 = scmp.ge.s32.totalorder %s869, 1
                  %s874 = sphi %s802, %s802
                  %s875 = sphi %s818, %s818
                $region141: #{_lambda_.7} parent=137 // loop_header_branch
                  %872 = sbr.rel (%p870) target = $region145
                $region142: #{_lambda_.7} parent=137 // loop_body
                  _
                $region143: #{_lambda_.7} parent=137 // loop_footer
                  %s873 = sadd.s32 1, %s869
                $region144: #{_lambda_.7} parent=137 // loop_footer_branch
                  %868 = sbr.rel target = $region140
                $region145: #{_lambda_.7} parent=137 // loop_exit
                  _
                loop: start=0, step=1, limit=1
                $region146: #{_lambda_.7} parent=137 // loop_pre_header
                  _
                $region147: #{_lambda_.7} parent=137 // loop_header
                  %s878 = sphi 0, %s882
                  %p879 = scmp.ge.s32.totalorder %s878, 1
                  %s883 = sphi %s802, %s802
                  %s884 = sphi %s818, %s818
                $region148: #{_lambda_.7} parent=137 // loop_header_branch
                  %881 = sbr.rel (%p879) target = $region152
                $region149: #{_lambda_.7} parent=137 // loop_body
                  %v885 = vld [vmem:[%s883] sm:$0x3]
                  %886 = vst [vmem:[%s884] sm:$0x3] %v885
                  %v887 = vld [vmem:[%s883 + $0x2] sm:$0x3]
                  %888 = vst [vmem:[%s884 + $0x4] sm:$0x3] %v887
                  %v889 = vld [vmem:[%s883 + $0x4] sm:$0x3]
                  %890 = vst [vmem:[%s884 + $0x8] sm:$0x3] %v889
                  %v891 = vld [vmem:[%s883 + $0x6] sm:$0x3]
                  %892 = vst [vmem:[%s884 + $0xc] sm:$0x3] %v891
                  %v893 = vld [vmem:[%s883 + $0x8] sm:$0x3]
                  %894 = vst [vmem:[%s884 + $0x10] sm:$0x3] %v893
                  %v895 = vld [vmem:[%s883 + $0xa] sm:$0x3]
                  %896 = vst [vmem:[%s884 + $0x14] sm:$0x3] %v895
                  %v897 = vld [vmem:[%s883 + $0xc] sm:$0x3]
                  %898 = vst [vmem:[%s884 + $0x18] sm:$0x3] %v897
                  %v899 = vld [vmem:[%s883 + $0xe] sm:$0x3]
                  %900 = vst [vmem:[%s884 + $0x1c] sm:$0x3] %v899
                  %v901 = vld [vmem:[%s883 + $0x10] sm:$0x3]
                  %902 = vst [vmem:[%s884 + $0x20] sm:$0x3] %v901
                  %v903 = vld [vmem:[%s883 + $0x12] sm:$0x3]
                  %904 = vst [vmem:[%s884 + $0x24] sm:$0x3] %v903
                  %v905 = vld [vmem:[%s883 + $0x14] sm:$0x3]
                  %906 = vst [vmem:[%s884 + $0x28] sm:$0x3] %v905
                  %v907 = vld [vmem:[%s883 + $0x16] sm:$0x3]
                  %908 = vst [vmem:[%s884 + $0x2c] sm:$0x3] %v907
                  %v909 = vld [vmem:[%s883 + $0x18] sm:$0x3]
                  %910 = vst [vmem:[%s884 + $0x30] sm:$0x3] %v909
                  %v911 = vld [vmem:[%s883 + $0x1a] sm:$0x3]
                  %912 = vst [vmem:[%s884 + $0x34] sm:$0x3] %v911
                  %v913 = vld [vmem:[%s883 + $0x1c] sm:$0x3]
                  %914 = vst [vmem:[%s884 + $0x38] sm:$0x3] %v913
                  %v915 = vld [vmem:[%s883 + $0x1e] sm:$0x3]
                  %916 = vst [vmem:[%s884 + $0x3c] sm:$0x3] %v915
                $region150: #{_lambda_.7} parent=137 // loop_footer
                  %s882 = sadd.s32 1, %s878
                $region151: #{_lambda_.7} parent=137 // loop_footer_branch
                  %877 = sbr.rel target = $region147
                $region152: #{_lambda_.7} parent=137 // loop_exit
                  _
              $region138: #{_lambda_.7} parent=122 // pred_fallthru
                _
            $region123: #{_lambda_.7} parent=118 // pred_fallthru
              _
            // Predicated region
            $region124: #{_lambda_.7} parent=118 // pred_check
              _
            $region125: #{_lambda_.7} parent=118 // pred_check_branch
              %824 = sbr.rel (0) target = $region127
            $region126: #{_lambda_.7} parent=118 // pred_region
              loop: start=0, step=1, limit=1
              $region128: #{_lambda_.7} parent=126 // loop_pre_header
                _
              $region129: #{_lambda_.7} parent=126 // loop_header
                %s827 = sphi 0, %s831
                %p828 = scmp.ge.s32.totalorder %s827, 1
                %s832 = sphi %s802, %s802
                %s833 = sphi %s818, %s818
              $region130: #{_lambda_.7} parent=126 // loop_header_branch
                %830 = sbr.rel (%p828) target = $region134
              $region131: #{_lambda_.7} parent=126 // loop_body
                %v834 = vld [vmem:[%s832] sm:$0x3]
                %835 = vst [vmem:[%s833] sm:$0x3] %v834
                %v836 = vld [vmem:[%s832 + $0x2] sm:$0x3]
                %837 = vst [vmem:[%s833 + $0x4] sm:$0x3] %v836
                %v838 = vld [vmem:[%s832 + $0x4] sm:$0x3]
                %839 = vst [vmem:[%s833 + $0x8] sm:$0x3] %v838
                %v840 = vld [vmem:[%s832 + $0x6] sm:$0x3]
                %841 = vst [vmem:[%s833 + $0xc] sm:$0x3] %v840
                %v842 = vld [vmem:[%s832 + $0x8] sm:$0x3]
                %843 = vst [vmem:[%s833 + $0x10] sm:$0x3] %v842
                %v844 = vld [vmem:[%s832 + $0xa] sm:$0x3]
                %845 = vst [vmem:[%s833 + $0x14] sm:$0x3] %v844
                %v846 = vld [vmem:[%s832 + $0xc] sm:$0x3]
                %847 = vst [vmem:[%s833 + $0x18] sm:$0x3] %v846
                %v848 = vld [vmem:[%s832 + $0xe] sm:$0x3]
                %849 = vst [vmem:[%s833 + $0x1c] sm:$0x3] %v848
                %v850 = vld [vmem:[%s832 + $0x10] sm:$0x3]
                %851 = vst [vmem:[%s833 + $0x20] sm:$0x3] %v850
                %v852 = vld [vmem:[%s832 + $0x12] sm:$0x3]
                %853 = vst [vmem:[%s833 + $0x24] sm:$0x3] %v852
                %v854 = vld [vmem:[%s832 + $0x14] sm:$0x3]
                %855 = vst [vmem:[%s833 + $0x28] sm:$0x3] %v854
                %v856 = vld [vmem:[%s832 + $0x16] sm:$0x3]
                %857 = vst [vmem:[%s833 + $0x2c] sm:$0x3] %v856
                %v858 = vld [vmem:[%s832 + $0x18] sm:$0x3]
                %859 = vst [vmem:[%s833 + $0x30] sm:$0x3] %v858
                %v860 = vld [vmem:[%s832 + $0x1a] sm:$0x3]
                %861 = vst [vmem:[%s833 + $0x34] sm:$0x3] %v860
                %v862 = vld [vmem:[%s832 + $0x1c] sm:$0x3]
                %863 = vst [vmem:[%s833 + $0x38] sm:$0x3] %v862
                %v864 = vld [vmem:[%s832 + $0x1e] sm:$0x3]
                %865 = vst [vmem:[%s833 + $0x3c] sm:$0x3] %v864
              $region132: #{_lambda_.7} parent=126 // loop_footer
                %s831 = sadd.s32 1, %s827
              $region133: #{_lambda_.7} parent=126 // loop_footer_branch
                %826 = sbr.rel target = $region129
              $region134: #{_lambda_.7} parent=126 // loop_exit
                _
            $region127: #{_lambda_.7} parent=118 // pred_fallthru
              _
          $region119: #{_lambda_.7} parent=114 // pred_fallthru
            _
          %917 = vnop
        $region115: #{_lambda_.7} parent=91 // pred_fallthru
          _
        // Predicated region
        $region153: #{_lambda_.7} parent=91 // pred_check
          %p918 = pneg %p197
        $region154: #{_lambda_.7} parent=91 // pred_check_branch
          %920 = sbr.rel (%p918) target = $region156
        $region155: #{_lambda_.7} parent=91 // pred_region
          _
        $region156: #{_lambda_.7} parent=91 // pred_fallthru
          _
      $region92: #{_lambda_.7} parent=5 // pred_fallthru
        _
      %p921 = scmp.le.s32.totalorder 2, %s12
      // Predicated region
      $region157: #{_lambda_.7} parent=5 // pred_check
        %p922 = pneg %p921
      $region158: #{_lambda_.7} parent=5 // pred_check_branch
        %924 = sbr.rel (%p922) target = $region160
      $region159: #{_lambda_.7} parent=5 // pred_region
        %s925 = ssub.s32 %s12, 2
        // Predicated region
        $region161: #{_lambda_.7} parent=159 // pred_check
          %p926 = pneg %p177
        $region162: #{_lambda_.7} parent=159 // pred_check_branch
          %928 = sbr.rel (%p926) target = $region164
        $region163: #{_lambda_.7} parent=159 // pred_region
          %s929 = sand.u32 %s162, 1
          %s930 = sand.u32 %s162, 1
          %s931 = smul.addr %s930, 32
          %s932 = scalar_lea.vmem [#allocation5], %s931
        $region164: #{_lambda_.7} parent=159 // pred_fallthru
          _
        // Predicated region
        $region165: #{_lambda_.7} parent=159 // pred_check
          %p933 = pneg %p203
        $region166: #{_lambda_.7} parent=159 // pred_check_branch
          %935 = sbr.rel (%p933) target = $region168
        $region167: #{_lambda_.7} parent=159 // pred_region
          %p936 = scmp.lt.s32.totalorder %s23, 1
          %s937 = scalar_select %p936, %s23, 1
          %s938 = smul.addr %s937, 2
          %s939 = scalar_lea.vmem %s5, %s938
        $region168: #{_lambda_.7} parent=159 // pred_fallthru
          _
      $region160: #{_lambda_.7} parent=5 // pred_fallthru
        _
    $region6: #{_lambda_.7} parent=1 // loop_footer
      %s16 = sadd.s32 1, %s12
    $region7: #{_lambda_.7} parent=1 // loop_footer_branch
      %11 = sbr.rel target = $region3
    $region8: #{_lambda_.7} parent=1 // loop_exit
      _

// kernel: _lambda_.11
$region0: #{_lambda_.11}
  #allocation0 [shape = 'u32[]', space=smem, size = 0x4, offset = 0x4, fixed_abs, tag = 'smem constant byte address 0x4 - core index']
  #allocation1 [shape = 'u32[144,128]{1,0:T(1,128)}', space=vmem, size = 0x12000, scoped, tag = 'internal scratch']
  #allocation2 [shape = 'f32[2,128]{1,0:T(2,128)}', space=vmem, size = 0x400, scoped, tag = 'scratch operand']
  %s0 = inlined_call_operand.vmem [shape: f32[32,2,768], index: 0, kind: input, shape index: {}]
  %s1 = inlined_call_operand.vmem [shape: f32[128,768], index: 1, kind: input, shape index: {}]
  %s2 = inlined_call_operand.vmem [shape: f32[1,256], index: 2, kind: input, shape index: {}]
  %s3 = inlined_call_operand.vmem [shape: f32[2,2,128], index: 3, kind: input, shape index: {}]
  %s4 = inlined_call_operand.vmem [shape: f32[32,2,256], index: 4, kind: output, shape index: {0}]
  %s5 = inlined_call_operand.hbm [shape: f32[2,2,128], index: 5, kind: output, shape index: {1}]
  %6 = xla_tuple %s4, %s5
  %s7 = sld [smem:[#allocation0]]
  $region169: #{_lambda_.11} parent=0
    _
  %s9 = ssub.s32 1, %s7
  %s10 = scalar_select 0, %s9, %s7
  $region1: #{_lambda_.11} parent=0
    #allocation3 [shape = 'u8[98304]{0}', space=vmem, size = 0x18000, scoped, tag = 'input window, operand 0']
    #allocation4 [shape = 'u8[393216]{0}', space=vmem, size = 0x60000, scoped, tag = 'input window, operand 1']
    #allocation5 [shape = 'u8[32768]{0}', space=vmem, size = 0x8000, scoped, tag = 'output window, operand 0']
    #allocation6 [shape = 'u8[2048]{0}', space=vmem, size = 0x800, scoped, tag = 'output window, operand 1']
    #allocation7 [shape = 's32[2]{0}', space=sflag, size = 0x8, scoped, tag = 'scoped memory for _lambda_.11']
    %11 = vsyncpa [#allocation7], 0
    %s12 = scalar_lea.sflag [#allocation7], 1
    %13 = vsyncpa %s12, 0
    loop: start=0, step=1, limit=6
    $region2: #{_lambda_.11} parent=1 // loop_pre_header
      _
    $region3: #{_lambda_.11} parent=1 // loop_header
      %s15 = sphi 0, %s19
      %p16 = scmp.ge.s32.totalorder %s15, 6
      %s22 = sphi 0, %s34
      %s23 = sphi 0, %s30
      %s24 = sphi 0, %s22
      %s25 = sphi 0, %s23
      %s26 = sphi 0, %s24
      %s27 = sphi 0, %s25
      %s47 = sphi 0, %s49
      %s50 = sphi 0, %s47
      %s51 = sphi 0, %s50
      %s67 = sphi 0, %s51
      %s73 = sphi 0, %s75
      %s76 = sphi 0, %s73
      %s77 = sphi 0, %s76
      %s93 = sphi 0, %s77
      %s99 = sphi 0, %s101
      %s102 = sphi 0, %s99
      %s103 = sphi 0, %s102
      %s119 = sphi 0, %s103
      %s125 = sphi 0, %s127
      %s128 = sphi 0, %s125
      %s129 = sphi 0, %s128
      %s145 = sphi 0, %s129
      %s161 = sphi 0, %s163
      %s164 = sphi 0, %s161
      %s165 = sphi 0, %s164
      %s181 = sphi 0, %s165
      %s187 = sphi 0, %s189
      %s190 = sphi 0, %s187
      %s191 = sphi 0, %s190
      %s207 = sphi 0, %s191
    $region4: #{_lambda_.11} parent=1 // loop_header_branch
      %18 = sbr.rel (%p16) target = $region8
    $region5: #{_lambda_.11} parent=1 // loop_body
      %s20 = ssub.s32 %s15, 1
      %s21 = ssub.s32 %s15, 2
      %s28 = sadd.s32 1, %s23
      %p29 = scmp.ge.s32.totalorder %s28, 2
      %s30 = scalar_select %p29, 0, %s28
      %s31 = sadd.s32 1, %s22
      %s32 = scalar_select %p29, %s31, %s22
      %p33 = scmp.ge.s32.totalorder %s32, 2
      %s34 = scalar_select %p33, 0, %s32
      %s35 = smul.u32 %s22, 2
      %s36 = ssub.s32 1, %s35
      %s37 = smul.u32 %s36, %s23
      %s38 = sadd.s32 %s22, %s37
      %s39 = smul.u32 %s34, 2
      %s40 = ssub.s32 1, %s39
      %s41 = smul.u32 %s40, %s30
      %s42 = sadd.s32 %s34, %s41
      %s43 = ssub.s32 %s38, %s42
      %s44 = ssub.s32 %s22, %s34
      %s45 = sor.u32 %s43, %s44
      %p46 = scmp.eq.s32.totalorder %s45, 0
      %s48 = sadd.s32 %s47, 1
      %s49 = scalar_select %p46, %s47, %s48
      %p52 = pneg %p46
      %p53 = scmp.eq.s32.totalorder %s15, 3
      %p54 = por %p52, %p53
      %p55 = scmp.ne.s32.totalorder %s47, %s50
      %p56 = scmp.eq.s32.totalorder %s15, 0
      %p57 = por %p55, %p56
      %p58 = scmp.ne.s32.totalorder %s47, %s50
      %p59 = scmp.eq.s32.totalorder %s20, 3
      %p60 = por %p58, %p59
      %p61 = scmp.ne.s32.totalorder %s50, %s51
      %p62 = scmp.eq.s32.totalorder %s20, 0
      %p63 = por %p61, %p62
      %p64 = scmp.ne.s32.totalorder %s50, %s51
      %p65 = scmp.eq.s32.totalorder %s21, 3
      %p66 = por %p64, %p65
      %p68 = scmp.ne.s32.totalorder %s51, %s67
      %p69 = scmp.eq.s32.totalorder %s21, 0
      %p70 = por %p68, %p69
      %s71 = ssub.s32 %s22, %s34
      %p72 = scmp.eq.s32.totalorder %s71, 0
      %s74 = sadd.s32 %s73, 1
      %s75 = scalar_select %p72, %s73, %s74
      %p78 = pneg %p72
      %p79 = scmp.eq.s32.totalorder %s15, 3
      %p80 = por %p78, %p79
      %p81 = scmp.ne.s32.totalorder %s73, %s76
      %p82 = scmp.eq.s32.totalorder %s15, 0
      %p83 = por %p81, %p82
      %p84 = scmp.ne.s32.totalorder %s73, %s76
      %p85 = scmp.eq.s32.totalorder %s20, 3
      %p86 = por %p84, %p85
      %p87 = scmp.ne.s32.totalorder %s76, %s77
      %p88 = scmp.eq.s32.totalorder %s20, 0
      %p89 = por %p87, %p88
      %p90 = scmp.ne.s32.totalorder %s76, %s77
      %p91 = scmp.eq.s32.totalorder %s21, 3
      %p92 = por %p90, %p91
      %p94 = scmp.ne.s32.totalorder %s77, %s93
      %p95 = scmp.eq.s32.totalorder %s21, 0
      %p96 = por %p94, %p95
      %s97 = ssub.s32 %s22, %s34
      %p98 = scmp.eq.s32.totalorder %s97, 0
      %s100 = sadd.s32 %s99, 1
      %s101 = scalar_select %p98, %s99, %s100
      %p104 = pneg %p98
      %p105 = scmp.eq.s32.totalorder %s15, 3
      %p106 = por %p104, %p105
      %p107 = scmp.ne.s32.totalorder %s99, %s102
      %p108 = scmp.eq.s32.totalorder %s15, 0
      %p109 = por %p107, %p108
      %p110 = scmp.ne.s32.totalorder %s99, %s102
      %p111 = scmp.eq.s32.totalorder %s20, 3
      %p112 = por %p110, %p111
      %p113 = scmp.ne.s32.totalorder %s102, %s103
      %p114 = scmp.eq.s32.totalorder %s20, 0
      %p115 = por %p113, %p114
      %p116 = scmp.ne.s32.totalorder %s102, %s103
      %p117 = scmp.eq.s32.totalorder %s21, 3
      %p118 = por %p116, %p117
      %p120 = scmp.ne.s32.totalorder %s103, %s119
      %p121 = scmp.eq.s32.totalorder %s21, 0
      %p122 = por %p120, %p121
      %s123 = ssub.s32 %s22, %s34
      %p124 = scmp.eq.s32.totalorder %s123, 0
      %s126 = sadd.s32 %s125, 1
      %s127 = scalar_select %p124, %s125, %s126
      %p130 = pneg %p124
      %p131 = scmp.eq.s32.totalorder %s15, 3
      %p132 = por %p130, %p131
      %p133 = scmp.ne.s32.totalorder %s125, %s128
      %p134 = scmp.eq.s32.totalorder %s15, 0
      %p135 = por %p133, %p134
      %p136 = scmp.ne.s32.totalorder %s125, %s128
      %p137 = scmp.eq.s32.totalorder %s20, 3
      %p138 = por %p136, %p137
      %p139 = scmp.ne.s32.totalorder %s128, %s129
      %p140 = scmp.eq.s32.totalorder %s20, 0
      %p141 = por %p139, %p140
      %p142 = scmp.ne.s32.totalorder %s128, %s129
      %p143 = scmp.eq.s32.totalorder %s21, 3
      %p144 = por %p142, %p143
      %p146 = scmp.ne.s32.totalorder %s129, %s145
      %p147 = scmp.eq.s32.totalorder %s21, 0
      %p148 = por %p146, %p147
      %s149 = smul.u32 %s22, 2
      %s150 = ssub.s32 1, %s149
      %s151 = smul.u32 %s150, %s23
      %s152 = sadd.s32 %s22, %s151
      %s153 = smul.u32 %s34, 2
      %s154 = ssub.s32 1, %s153
      %s155 = smul.u32 %s154, %s30
      %s156 = sadd.s32 %s34, %s155
      %s157 = ssub.s32 %s152, %s156
      %s158 = ssub.s32 %s22, %s34
      %s159 = sor.u32 %s157, %s158
      %p160 = scmp.eq.s32.totalorder %s159, 0
      %s162 = sadd.s32 %s161, 1
      %s163 = scalar_select %p160, %s161, %s162
      %p166 = pneg %p160
      %p167 = scmp.eq.s32.totalorder %s15, 3
      %p168 = por %p166, %p167
      %p169 = scmp.ne.s32.totalorder %s161, %s164
      %p170 = scmp.eq.s32.totalorder %s15, 0
      %p171 = por %p169, %p170
      %p172 = scmp.ne.s32.totalorder %s161, %s164
      %p173 = scmp.eq.s32.totalorder %s20, 3
      %p174 = por %p172, %p173
      %p175 = scmp.ne.s32.totalorder %s164, %s165
      %p176 = scmp.eq.s32.totalorder %s20, 0
      %p177 = por %p175, %p176
      %p178 = scmp.ne.s32.totalorder %s164, %s165
      %p179 = scmp.eq.s32.totalorder %s21, 3
      %p180 = por %p178, %p179
      %p182 = scmp.ne.s32.totalorder %s165, %s181
      %p183 = scmp.eq.s32.totalorder %s21, 0
      %p184 = por %p182, %p183
      %s185 = ssub.s32 %s22, %s34
      %p186 = scmp.eq.s32.totalorder %s185, 0
      %s188 = sadd.s32 %s187, 1
      %s189 = scalar_select %p186, %s187, %s188
      %p192 = pneg %p186
      %p193 = scmp.eq.s32.totalorder %s15, 3
      %p194 = por %p192, %p193
      %p195 = scmp.ne.s32.totalorder %s187, %s190
      %p196 = scmp.eq.s32.totalorder %s15, 0
      %p197 = por %p195, %p196
      %p198 = scmp.ne.s32.totalorder %s187, %s190
      %p199 = scmp.eq.s32.totalorder %s20, 3
      %p200 = por %p198, %p199
      %p201 = scmp.ne.s32.totalorder %s190, %s191
      %p202 = scmp.eq.s32.totalorder %s20, 0
      %p203 = por %p201, %p202
      %p204 = scmp.ne.s32.totalorder %s190, %s191
      %p205 = scmp.eq.s32.totalorder %s21, 3
      %p206 = por %p204, %p205
      %p208 = scmp.ne.s32.totalorder %s191, %s207
      %p209 = scmp.eq.s32.totalorder %s21, 0
      %p210 = por %p208, %p209
      %p211 = scmp.le.s32.totalorder 1, %s15
      %p212 = scmp.lt.s32.totalorder %s15, 5
      %p213 = pnand %p211, %p212
      %p214 = pneg %p213
      // Predicated region
      $region9: #{_lambda_.11} parent=5 // pred_check
        _
      $region10: #{_lambda_.11} parent=5 // pred_check_branch
        %216 = sbr.rel (%p213) target = $region12
      $region11: #{_lambda_.11} parent=5 // pred_region
        %s217 = ssub.s32 %s15, 1
      $region12: #{_lambda_.11} parent=5 // pred_fallthru
        _
      %p218 = scmp.lt.s32.totalorder %s15, 4
      // Predicated region
      $region13: #{_lambda_.11} parent=5 // pred_check
        %p219 = pneg %p218
      $region14: #{_lambda_.11} parent=5 // pred_check_branch
        %221 = sbr.rel (%p219) target = $region16
      $region15: #{_lambda_.11} parent=5 // pred_region
        // Predicated region
        $region17: #{_lambda_.11} parent=15 // pred_check
          %p222 = pneg %p57
        $region18: #{_lambda_.11} parent=15 // pred_check_branch
          %224 = sbr.rel (%p222) target = $region20
        $region19: #{_lambda_.11} parent=15 // pred_region
          %s225 = sand.u32 %s47, 1
          %s226 = sand.u32 %s47, 1
          %s227 = smul.addr %s226, 96
          %s228 = scalar_lea.vmem [#allocation3], %s227
          %s229 = smul.u32 %s22, 2
          %s230 = ssub.s32 1, %s229
          %s231 = smul.u32 %s230, %s23
          %s232 = sadd.s32 %s22, %s231
          %s233 = smul.u32 16, %s232
          %s234 = smul.u32 3, %s22
          %s235 = smul.addr %s233, 6
          %s236 = sadd.s32 %s234, %s235
          %s237 = smul.addr %s236, 2
          %s238 = scalar_lea.vmem %s0, %s237
          // Predicated region
          $region21: #{_lambda_.11} parent=19 // pred_check
            _
          $region22: #{_lambda_.11} parent=19 // pred_check_branch
            %240 = sbr.rel (0) target = $region24
          $region23: #{_lambda_.11} parent=19 // pred_region
            // Predicated region
            $region25: #{_lambda_.11} parent=23 // pred_check
              _
            $region26: #{_lambda_.11} parent=23 // pred_check_branch
              %242 = sbr.rel target = $region28
            $region27: #{_lambda_.11} parent=23 // pred_region
              // Predicated region
              $region40: #{_lambda_.11} parent=27 // pred_check
                _
              $region41: #{_lambda_.11} parent=27 // pred_check_branch
                %287 = sbr.rel (0) target = $region43
              $region42: #{_lambda_.11} parent=27 // pred_region
                loop: start=0, step=1, limit=1
                $region44: #{_lambda_.11} parent=42 // loop_pre_header
                  _
                $region45: #{_lambda_.11} parent=42 // loop_header
                  %s289 = sphi 0, %s293
                  %p290 = scmp.ge.s32.totalorder %s289, 1
                  %s294 = sphi %s238, %s238
                  %s295 = sphi %s228, %s228
                $region46: #{_lambda_.11} parent=42 // loop_header_branch
                  %292 = sbr.rel (%p290) target = $region50
                $region47: #{_lambda_.11} parent=42 // loop_body
                  _
                $region48: #{_lambda_.11} parent=42 // loop_footer
                  %s293 = sadd.s32 1, %s289
                $region49: #{_lambda_.11} parent=42 // loop_footer_branch
                  %288 = sbr.rel target = $region45
                $region50: #{_lambda_.11} parent=42 // loop_exit
                  _
                loop: start=0, step=1, limit=1
                $region51: #{_lambda_.11} parent=42 // loop_pre_header
                  _
                $region52: #{_lambda_.11} parent=42 // loop_header
                  %s298 = sphi 0, %s302
                  %p299 = scmp.ge.s32.totalorder %s298, 1
                  %s303 = sphi %s238, %s238
                  %s304 = sphi %s228, %s228
                $region53: #{_lambda_.11} parent=42 // loop_header_branch
                  %301 = sbr.rel (%p299) target = $region57
                $region54: #{_lambda_.11} parent=42 // loop_body
                  %v305 = vld [vmem:[%s303] sm:$0x3f]
                  %306 = vst [vmem:[%s304] sm:$0x3f] %v305
                  %v307 = vld [vmem:[%s303 + $0xc] sm:$0x3f]
                  %308 = vst [vmem:[%s304 + $0x6] sm:$0x3f] %v307
                  %v309 = vld [vmem:[%s303 + $0x18] sm:$0x3f]
                  %310 = vst [vmem:[%s304 + $0xc] sm:$0x3f] %v309
                  %v311 = vld [vmem:[%s303 + $0x24] sm:$0x3f]
                  %312 = vst [vmem:[%s304 + $0x12] sm:$0x3f] %v311
                  %v313 = vld [vmem:[%s303 + $0x30] sm:$0x3f]
                  %314 = vst [vmem:[%s304 + $0x18] sm:$0x3f] %v313
                  %v315 = vld [vmem:[%s303 + $0x3c] sm:$0x3f]
                  %316 = vst [vmem:[%s304 + $0x1e] sm:$0x3f] %v315
                  %v317 = vld [vmem:[%s303 + $0x48] sm:$0x3f]
                  %318 = vst [vmem:[%s304 + $0x24] sm:$0x3f] %v317
                  %v319 = vld [vmem:[%s303 + $0x54] sm:$0x3f]
                  %320 = vst [vmem:[%s304 + $0x2a] sm:$0x3f] %v319
                  %v321 = vld [vmem:[%s303 + $0x60] sm:$0x3f]
                  %322 = vst [vmem:[%s304 + $0x30] sm:$0x3f] %v321
                  %v323 = vld [vmem:[%s303 + $0x6c] sm:$0x3f]
                  %324 = vst [vmem:[%s304 + $0x36] sm:$0x3f] %v323
                  %v325 = vld [vmem:[%s303 + $0x78] sm:$0x3f]
                  %326 = vst [vmem:[%s304 + $0x3c] sm:$0x3f] %v325
                  %v327 = vld [vmem:[%s303 + $0x84] sm:$0x3f]
                  %328 = vst [vmem:[%s304 + $0x42] sm:$0x3f] %v327
                  %v329 = vld [vmem:[%s303 + $0x90] sm:$0x3f]
                  %330 = vst [vmem:[%s304 + $0x48] sm:$0x3f] %v329
                  %v331 = vld [vmem:[%s303 + $0x9c] sm:$0x3f]
                  %332 = vst [vmem:[%s304 + $0x4e] sm:$0x3f] %v331
                  %v333 = vld [vmem:[%s303 + $0xa8] sm:$0x3f]
                  %334 = vst [vmem:[%s304 + $0x54] sm:$0x3f] %v333
                  %v335 = vld [vmem:[%s303 + $0xb4] sm:$0x3f]
                  %336 = vst [vmem:[%s304 + $0x5a] sm:$0x3f] %v335
                $region55: #{_lambda_.11} parent=42 // loop_footer
                  %s302 = sadd.s32 1, %s298
                $region56: #{_lambda_.11} parent=42 // loop_footer_branch
                  %297 = sbr.rel target = $region52
                $region57: #{_lambda_.11} parent=42 // loop_exit
                  _
              $region43: #{_lambda_.11} parent=27 // pred_fallthru
                _
            $region28: #{_lambda_.11} parent=23 // pred_fallthru
              _
            // Predicated region
            $region29: #{_lambda_.11} parent=23 // pred_check
              _
            $region30: #{_lambda_.11} parent=23 // pred_check_branch
              %244 = sbr.rel (0) target = $region32
            $region31: #{_lambda_.11} parent=23 // pred_region
              loop: start=0, step=1, limit=1
              $region33: #{_lambda_.11} parent=31 // loop_pre_header
                _
              $region34: #{_lambda_.11} parent=31 // loop_header
                %s247 = sphi 0, %s251
                %p248 = scmp.ge.s32.totalorder %s247, 1
                %s252 = sphi %s238, %s238
                %s253 = sphi %s228, %s228
              $region35: #{_lambda_.11} parent=31 // loop_header_branch
                %250 = sbr.rel (%p248) target = $region39
              $region36: #{_lambda_.11} parent=31 // loop_body
                %v254 = vld [vmem:[%s252] sm:$0x3f]
                %255 = vst [vmem:[%s253] sm:$0x3f] %v254
                %v256 = vld [vmem:[%s252 + $0xc] sm:$0x3f]
                %257 = vst [vmem:[%s253 + $0x6] sm:$0x3f] %v256
                %v258 = vld [vmem:[%s252 + $0x18] sm:$0x3f]
                %259 = vst [vmem:[%s253 + $0xc] sm:$0x3f] %v258
                %v260 = vld [vmem:[%s252 + $0x24] sm:$0x3f]
                %261 = vst [vmem:[%s253 + $0x12] sm:$0x3f] %v260
                %v262 = vld [vmem:[%s252 + $0x30] sm:$0x3f]
                %263 = vst [vmem:[%s253 + $0x18] sm:$0x3f] %v262
                %v264 = vld [vmem:[%s252 + $0x3c] sm:$0x3f]
                %265 = vst [vmem:[%s253 + $0x1e] sm:$0x3f] %v264
                %v266 = vld [vmem:[%s252 + $0x48] sm:$0x3f]
                %267 = vst [vmem:[%s253 + $0x24] sm:$0x3f] %v266
                %v268 = vld [vmem:[%s252 + $0x54] sm:$0x3f]
                %269 = vst [vmem:[%s253 + $0x2a] sm:$0x3f] %v268
                %v270 = vld [vmem:[%s252 + $0x60] sm:$0x3f]
                %271 = vst [vmem:[%s253 + $0x30] sm:$0x3f] %v270
                %v272 = vld [vmem:[%s252 + $0x6c] sm:$0x3f]
                %273 = vst [vmem:[%s253 + $0x36] sm:$0x3f] %v272
                %v274 = vld [vmem:[%s252 + $0x78] sm:$0x3f]
                %275 = vst [vmem:[%s253 + $0x3c] sm:$0x3f] %v274
                %v276 = vld [vmem:[%s252 + $0x84] sm:$0x3f]
                %277 = vst [vmem:[%s253 + $0x42] sm:$0x3f] %v276
                %v278 = vld [vmem:[%s252 + $0x90] sm:$0x3f]
                %279 = vst [vmem:[%s253 + $0x48] sm:$0x3f] %v278
                %v280 = vld [vmem:[%s252 + $0x9c] sm:$0x3f]
                %281 = vst [vmem:[%s253 + $0x4e] sm:$0x3f] %v280
                %v282 = vld [vmem:[%s252 + $0xa8] sm:$0x3f]
                %283 = vst [vmem:[%s253 + $0x54] sm:$0x3f] %v282
                %v284 = vld [vmem:[%s252 + $0xb4] sm:$0x3f]
                %285 = vst [vmem:[%s253 + $0x5a] sm:$0x3f] %v284
              $region37: #{_lambda_.11} parent=31 // loop_footer
                %s251 = sadd.s32 1, %s247
              $region38: #{_lambda_.11} parent=31 // loop_footer_branch
                %246 = sbr.rel target = $region34
              $region39: #{_lambda_.11} parent=31 // loop_exit
                _
            $region32: #{_lambda_.11} parent=23 // pred_fallthru
              _
          $region24: #{_lambda_.11} parent=19 // pred_fallthru
            _
          %337 = vnop
        $region20: #{_lambda_.11} parent=15 // pred_fallthru
          _
        // Predicated region
        $region58: #{_lambda_.11} parent=15 // pred_check
          %p338 = pneg %p83
        $region59: #{_lambda_.11} parent=15 // pred_check_branch
          %340 = sbr.rel (%p338) target = $region61
        $region60: #{_lambda_.11} parent=15 // pred_region
          %s341 = sand.u32 %s73, 1
          %s342 = sand.u32 %s73, 1
          %s343 = smul.addr %s342, 384
          %s344 = scalar_lea.vmem [#allocation4], %s343
          %s345 = smul.u32 3, %s22
          %s346 = smul.addr %s345, 8
          %s347 = scalar_lea.vmem %s1, %s346
          // Predicated region
          $region62: #{_lambda_.11} parent=60 // pred_check
            _
          $region63: #{_lambda_.11} parent=60 // pred_check_branch
            %349 = sbr.rel (0) target = $region65
          $region64: #{_lambda_.11} parent=60 // pred_region
            // Predicated region
            $region66: #{_lambda_.11} parent=64 // pred_check
              _
            $region67: #{_lambda_.11} parent=64 // pred_check_branch
              %351 = sbr.rel (0) target = $region69
            $region68: #{_lambda_.11} parent=64 // pred_region
              loop: start=0, step=1, limit=1
              $region70: #{_lambda_.11} parent=68 // loop_pre_header
                _
              $region71: #{_lambda_.11} parent=68 // loop_header
                %s353 = sphi 0, %s357
                %p354 = scmp.ge.s32.totalorder %s353, 1
                %s358 = sphi %s347, %s347
                %s359 = sphi %s344, %s344
              $region72: #{_lambda_.11} parent=68 // loop_header_branch
                %356 = sbr.rel (%p354) target = $region76
              $region73: #{_lambda_.11} parent=68 // loop_body
                %v360 = vld [vmem:[%s358] sm:$0xff]
                %361 = vst [vmem:[%s359] sm:$0xff] %v360
                %v362 = vld [vmem:[%s358 + $0x8] sm:$0xff]
                %363 = vst [vmem:[%s359 + $0x8] sm:$0xff] %v362
                %v364 = vld [vmem:[%s358 + $0x10] sm:$0xff]
                %365 = vst [vmem:[%s359 + $0x10] sm:$0xff] %v364
                %v366 = vld [vmem:[%s358 + $0x30] sm:$0xff]
                %367 = vst [vmem:[%s359 + $0x18] sm:$0xff] %v366
                %v368 = vld [vmem:[%s358 + $0x38] sm:$0xff]
                %369 = vst [vmem:[%s359 + $0x20] sm:$0xff] %v368
                %v370 = vld [vmem:[%s358 + $0x40] sm:$0xff]
                %371 = vst [vmem:[%s359 + $0x28] sm:$0xff] %v370
                %v372 = vld [vmem:[%s358 + $0x60] sm:$0xff]
                %373 = vst [vmem:[%s359 + $0x30] sm:$0xff] %v372
                %v374 = vld [vmem:[%s358 + $0x68] sm:$0xff]
                %375 = vst [vmem:[%s359 + $0x38] sm:$0xff] %v374
                %v376 = vld [vmem:[%s358 + $0x70] sm:$0xff]
                %377 = vst [vmem:[%s359 + $0x40] sm:$0xff] %v376
                %v378 = vld [vmem:[%s358 + $0x90] sm:$0xff]
                %379 = vst [vmem:[%s359 + $0x48] sm:$0xff] %v378
                %v380 = vld [vmem:[%s358 + $0x98] sm:$0xff]
                %381 = vst [vmem:[%s359 + $0x50] sm:$0xff] %v380
                %v382 = vld [vmem:[%s358 + $0xa0] sm:$0xff]
                %383 = vst [vmem:[%s359 + $0x58] sm:$0xff] %v382
                %v384 = vld [vmem:[%s358 + $0xc0] sm:$0xff]
                %385 = vst [vmem:[%s359 + $0x60] sm:$0xff] %v384
                %v386 = vld [vmem:[%s358 + $0xc8] sm:$0xff]
                %387 = vst [vmem:[%s359 + $0x68] sm:$0xff] %v386
                %v388 = vld [vmem:[%s358 + $0xd0] sm:$0xff]
                %389 = vst [vmem:[%s359 + $0x70] sm:$0xff] %v388
                %v390 = vld [vmem:[%s358 + $0xf0] sm:$0xff]
                %391 = vst [vmem:[%s359 + $0x78] sm:$0xff] %v390
                %v392 = vld [vmem:[%s358 + $0xf8] sm:$0xff]
                %393 = vst [vmem:[%s359 + $0x80] sm:$0xff] %v392
                %v394 = vld [vmem:[%s358 + $0x100] sm:$0xff]
                %395 = vst [vmem:[%s359 + $0x88] sm:$0xff] %v394
                %v396 = vld [vmem:[%s358 + $0x120] sm:$0xff]
                %397 = vst [vmem:[%s359 + $0x90] sm:$0xff] %v396
                %v398 = vld [vmem:[%s358 + $0x128] sm:$0xff]
                %399 = vst [vmem:[%s359 + $0x98] sm:$0xff] %v398
                %v400 = vld [vmem:[%s358 + $0x130] sm:$0xff]
                %401 = vst [vmem:[%s359 + $0xa0] sm:$0xff] %v400
                %v402 = vld [vmem:[%s358 + $0x150] sm:$0xff]
                %403 = vst [vmem:[%s359 + $0xa8] sm:$0xff] %v402
                %v404 = vld [vmem:[%s358 + $0x158] sm:$0xff]
                %405 = vst [vmem:[%s359 + $0xb0] sm:$0xff] %v404
                %v406 = vld [vmem:[%s358 + $0x160] sm:$0xff]
                %407 = vst [vmem:[%s359 + $0xb8] sm:$0xff] %v406
                %v408 = vld [vmem:[%s358 + $0x180] sm:$0xff]
                %409 = vst [vmem:[%s359 + $0xc0] sm:$0xff] %v408
                %v410 = vld [vmem:[%s358 + $0x188] sm:$0xff]
                %411 = vst [vmem:[%s359 + $0xc8] sm:$0xff] %v410
                %v412 = vld [vmem:[%s358 + $0x190] sm:$0xff]
                %413 = vst [vmem:[%s359 + $0xd0] sm:$0xff] %v412
                %v414 = vld [vmem:[%s358 + $0x1b0] sm:$0xff]
                %415 = vst [vmem:[%s359 + $0xd8] sm:$0xff] %v414
                %v416 = vld [vmem:[%s358 + $0x1b8] sm:$0xff]
                %417 = vst [vmem:[%s359 + $0xe0] sm:$0xff] %v416
                %v418 = vld [vmem:[%s358 + $0x1c0] sm:$0xff]
                %419 = vst [vmem:[%s359 + $0xe8] sm:$0xff] %v418
                %v420 = vld [vmem:[%s358 + $0x1e0] sm:$0xff]
                %421 = vst [vmem:[%s359 + $0xf0] sm:$0xff] %v420
                %v422 = vld [vmem:[%s358 + $0x1e8] sm:$0xff]
                %423 = vst [vmem:[%s359 + $0xf8] sm:$0xff] %v422
                %v424 = vld [vmem:[%s358 + $0x1f0] sm:$0xff]
                %425 = vst [vmem:[%s359 + $0x100] sm:$0xff] %v424
                %v426 = vld [vmem:[%s358 + $0x210] sm:$0xff]
                %427 = vst [vmem:[%s359 + $0x108] sm:$0xff] %v426
                %v428 = vld [vmem:[%s358 + $0x218] sm:$0xff]
                %429 = vst [vmem:[%s359 + $0x110] sm:$0xff] %v428
                %v430 = vld [vmem:[%s358 + $0x220] sm:$0xff]
                %431 = vst [vmem:[%s359 + $0x118] sm:$0xff] %v430
                %v432 = vld [vmem:[%s358 + $0x240] sm:$0xff]
                %433 = vst [vmem:[%s359 + $0x120] sm:$0xff] %v432
                %v434 = vld [vmem:[%s358 + $0x248] sm:$0xff]
                %435 = vst [vmem:[%s359 + $0x128] sm:$0xff] %v434
                %v436 = vld [vmem:[%s358 + $0x250] sm:$0xff]
                %437 = vst [vmem:[%s359 + $0x130] sm:$0xff] %v436
                %v438 = vld [vmem:[%s358 + $0x270] sm:$0xff]
                %439 = vst [vmem:[%s359 + $0x138] sm:$0xff] %v438
                %v440 = vld [vmem:[%s358 + $0x278] sm:$0xff]
                %441 = vst [vmem:[%s359 + $0x140] sm:$0xff] %v440
                %v442 = vld [vmem:[%s358 + $0x280] sm:$0xff]
                %443 = vst [vmem:[%s359 + $0x148] sm:$0xff] %v442
                %v444 = vld [vmem:[%s358 + $0x2a0] sm:$0xff]
                %445 = vst [vmem:[%s359 + $0x150] sm:$0xff] %v444
                %v446 = vld [vmem:[%s358 + $0x2a8] sm:$0xff]
                %447 = vst [vmem:[%s359 + $0x158] sm:$0xff] %v446
                %v448 = vld [vmem:[%s358 + $0x2b0] sm:$0xff]
                %449 = vst [vmem:[%s359 + $0x160] sm:$0xff] %v448
                %v450 = vld [vmem:[%s358 + $0x2d0] sm:$0xff]
                %451 = vst [vmem:[%s359 + $0x168] sm:$0xff] %v450
                %v452 = vld [vmem:[%s358 + $0x2d8] sm:$0xff]
                %453 = vst [vmem:[%s359 + $0x170] sm:$0xff] %v452
                %v454 = vld [vmem:[%s358 + $0x2e0] sm:$0xff]
                %455 = vst [vmem:[%s359 + $0x178] sm:$0xff] %v454
              $region74: #{_lambda_.11} parent=68 // loop_footer
                %s357 = sadd.s32 1, %s353
              $region75: #{_lambda_.11} parent=68 // loop_footer_branch
                %352 = sbr.rel target = $region71
              $region76: #{_lambda_.11} parent=68 // loop_exit
                _
            $region69: #{_lambda_.11} parent=64 // pred_fallthru
              _
            // Predicated region
            $region77: #{_lambda_.11} parent=64 // pred_check
              _
            $region78: #{_lambda_.11} parent=64 // pred_check_branch
              %457 = sbr.rel target = $region80
            $region79: #{_lambda_.11} parent=64 // pred_region
              _
            $region80: #{_lambda_.11} parent=64 // pred_fallthru
              _
          $region65: #{_lambda_.11} parent=60 // pred_fallthru
            _
          %458 = vnop
        $region61: #{_lambda_.11} parent=15 // pred_fallthru
          _
        // Predicated region
        $region81: #{_lambda_.11} parent=15 // pred_check
          %p459 = pneg %p109
        $region82: #{_lambda_.11} parent=15 // pred_check_branch
          %461 = sbr.rel (%p459) target = $region84
        $region83: #{_lambda_.11} parent=15 // pred_region
          %p462 = scmp.lt.s32.totalorder %s22, 1
          %s463 = scalar_select %p462, %s22, 1
          %s464 = scalar_lea.vmem %s2, %s463
        $region84: #{_lambda_.11} parent=15 // pred_fallthru
          _
        // Predicated region
        $region85: #{_lambda_.11} parent=15 // pred_check
          %p465 = pneg %p135
        $region86: #{_lambda_.11} parent=15 // pred_check_branch
          %467 = sbr.rel (%p465) target = $region88
        $region87: #{_lambda_.11} parent=15 // pred_region
          %p468 = scmp.lt.s32.totalorder %s22, 1
          %s469 = scalar_select %p468, %s22, 1
          %s470 = smul.addr %s469, 2
          %s471 = scalar_lea.vmem %s3, %s470
        $region88: #{_lambda_.11} parent=15 // pred_fallthru
          _
      $region16: #{_lambda_.11} parent=5 // pred_fallthru
        _
      %p472 = scmp.le.s32.totalorder 1, %s15
      %p473 = scmp.lt.s32.totalorder %s15, 5
      %p474 = pnand %p472, %p473
      %p475 = pneg %p474
      // Predicated region
      $region89: #{_lambda_.11} parent=5 // pred_check
        _
      $region90: #{_lambda_.11} parent=5 // pred_check_branch
        %477 = sbr.rel (%p474) target = $region92
      $region91: #{_lambda_.11} parent=5 // pred_region
        %s478 = ssub.s32 %s15, 1
        %s479 = sand.u32 %s50, 1
        %s480 = sand.u32 %s50, 1
        %s481 = smul.addr %s480, 96
        %s482 = scalar_lea.vmem [#allocation3], %s481
        // Predicated region
        $region93: #{_lambda_.11} parent=91 // pred_check
          %p483 = pneg %p63
        $region94: #{_lambda_.11} parent=91 // pred_check_branch
          %485 = sbr.rel (%p483) target = $region96
        $region95: #{_lambda_.11} parent=91 // pred_region
          _
        $region96: #{_lambda_.11} parent=91 // pred_fallthru
          _
        %s486 = sand.u32 %s76, 1
        %s487 = sand.u32 %s76, 1
        %s488 = smul.addr %s487, 384
        %s489 = scalar_lea.vmem [#allocation4], %s488
        // Predicated region
        $region97: #{_lambda_.11} parent=91 // pred_check
          %p490 = pneg %p89
        $region98: #{_lambda_.11} parent=91 // pred_check_branch
          %492 = sbr.rel (%p490) target = $region100
        $region99: #{_lambda_.11} parent=91 // pred_region
          _
        $region100: #{_lambda_.11} parent=91 // pred_fallthru
          _
        %s493 = sand.u32 %s50, 1
        %s494 = sand.u32 %s50, 1
        %s495 = smul.addr %s494, 96
        %s496 = scalar_lea.vmem [#allocation3], %s495
        %p497 = pneg %p63
        %p498 = pneg %p60
        %s499 = sand.u32 %s76, 1
        %s500 = sand.u32 %s76, 1
        %s501 = smul.addr %s500, 384
        %s502 = scalar_lea.vmem [#allocation4], %s501
        %p503 = pneg %p89
        %p504 = pneg %p86
        %p505 = scmp.lt.s32.totalorder %s24, 1
        %s506 = scalar_select %p505, %s24, 1
        %s507 = scalar_lea.vmem %s2, %s506
        %p508 = pneg %p115
        %p509 = pneg %p112
        %p510 = scmp.lt.s32.totalorder %s24, 1
        %s511 = scalar_select %p510, %s24, 1
        %s512 = smul.addr %s511, 2
        %s513 = scalar_lea.vmem %s3, %s512
        %p514 = pneg %p141
        %p515 = pneg %p138
        %p516 = pneg %p177
        %p517 = pneg %p174
        %s518 = sand.u32 %s164, 1
        %s519 = sand.u32 %s164, 1
        %s520 = smul.addr %s519, 32
        %s521 = scalar_lea.vmem [#allocation5], %s520
        %p522 = pneg %p203
        %p523 = pneg %p200
        %s524 = sand.u32 %s190, 1
        %s525 = scalar_lea.sflag [#allocation7], %s524
        %s526 = sand.u32 %s190, 1
        %s527 = smul.addr %s526, 2
        %s528 = scalar_lea.vmem [#allocation6], %s527
        %s529 = smul.u32 %s24, 2
        %s530 = ssub.s32 1, %s529
        %s531 = smul.u32 %s530, %s25
        %s532 = sadd.s32 %s24, %s531
        %s533 = smul.u32 16, %s532
        %s534 = smul.u32 3, %s24
        %s535 = smul.u32 3, %s24
        %p536 = scmp.lt.s32.totalorder %s24, 1
        %s537 = scalar_select %p536, %s24, 1
        %s538 = scalar_lea.vmem %s2, %s537
        %p539 = scmp.lt.s32.totalorder %s24, 1
        %s540 = scalar_select %p539, %s24, 1
        %s541 = smul.addr %s540, 2
        %s542 = scalar_lea.vmem %s3, %s541
        %s543 = smul.u32 %s24, 2
        %s544 = ssub.s32 1, %s543
        %s545 = smul.u32 %s544, %s25
        %s546 = sadd.s32 %s24, %s545
        %s547 = smul.u32 16, %s546
        %p548 = scmp.eq.s32.totalorder %s25, 0
        // Predicated region
        $region101: #{_lambda_.11} parent=91 // pred_check
          %p549 = pneg %p548
        $region102: #{_lambda_.11} parent=91 // pred_check_branch
          %551 = sbr.rel (%p549) target = $region104
        $region103: #{_lambda_.11} parent=91 // pred_region
          %v552 = vld [vmem:[%s542] sm:$0x3]
          %553 = vst [vmem:[#allocation2] sm:$0x3] %v552
        $region104: #{_lambda_.11} parent=91 // pred_fallthru
          _
        %v554 = vld [vmem:[%s489] sm:$0xff]
        %v555 = vld [vmem:[%s489 + $0x8] sm:$0xff]
        %v556 = vld [vmem:[%s489 + $0x10] sm:$0xff]
        %v557 = vld [vmem:[%s489 + $0x18] sm:$0xff]
        %v558 = vld [vmem:[%s489 + $0x20] sm:$0xff]
        %v559 = vld [vmem:[%s489 + $0x28] sm:$0xff]
        %v560 = vld [vmem:[%s489 + $0x30] sm:$0xff]
        %v561 = vld [vmem:[%s489 + $0x38] sm:$0xff]
        %v562 = vld [vmem:[%s489 + $0x40] sm:$0xff]
        %v563 = vld [vmem:[%s489 + $0x48] sm:$0xff]
        %v564 = vld [vmem:[%s489 + $0x50] sm:$0xff]
        %v565 = vld [vmem:[%s489 + $0x58] sm:$0xff]
        %v566 = vld [vmem:[%s489 + $0x60] sm:$0xff]
        %v567 = vld [vmem:[%s489 + $0x68] sm:$0xff]
        %v568 = vld [vmem:[%s489 + $0x70] sm:$0xff]
        %v569 = vld [vmem:[%s489 + $0x78] sm:$0xff]
        %v570 = vld [vmem:[%s489 + $0x80] sm:$0xff]
        %v571 = vld [vmem:[%s489 + $0x88] sm:$0xff]
        %v572 = vld [vmem:[%s489 + $0x90] sm:$0xff]
        %v573 = vld [vmem:[%s489 + $0x98] sm:$0xff]
        %v574 = vld [vmem:[%s489 + $0xa0] sm:$0xff]
        %v575 = vld [vmem:[%s489 + $0xa8] sm:$0xff]
        %v576 = vld [vmem:[%s489 + $0xb0] sm:$0xff]
        %v577 = vld [vmem:[%s489 + $0xb8] sm:$0xff]
        %v578 = vld [vmem:[%s489 + $0xc0] sm:$0xff]
        %v579 = vld [vmem:[%s489 + $0xc8] sm:$0xff]
        %v580 = vld [vmem:[%s489 + $0xd0] sm:$0xff]
        %v581 = vld [vmem:[%s489 + $0xd8] sm:$0xff]
        %v582 = vld [vmem:[%s489 + $0xe0] sm:$0xff]
        %v583 = vld [vmem:[%s489 + $0xe8] sm:$0xff]
        %v584 = vld [vmem:[%s489 + $0xf0] sm:$0xff]
        %v585 = vld [vmem:[%s489 + $0xf8] sm:$0xff]
        %v586 = vld [vmem:[%s489 + $0x100] sm:$0xff]
        %v587 = vld [vmem:[%s489 + $0x108] sm:$0xff]
        %v588 = vld [vmem:[%s489 + $0x110] sm:$0xff]
        %v589 = vld [vmem:[%s489 + $0x118] sm:$0xff]
        %v590 = vld [vmem:[%s489 + $0x120] sm:$0xff]
        %v591 = vld [vmem:[%s489 + $0x128] sm:$0xff]
        %v592 = vld [vmem:[%s489 + $0x130] sm:$0xff]
        %v593 = vld [vmem:[%s489 + $0x138] sm:$0xff]
        %v594 = vld [vmem:[%s489 + $0x140] sm:$0xff]
        %v595 = vld [vmem:[%s489 + $0x148] sm:$0xff]
        %v596 = vld [vmem:[%s489 + $0x150] sm:$0xff]
        %v597 = vld [vmem:[%s489 + $0x158] sm:$0xff]
        %v598 = vld [vmem:[%s489 + $0x160] sm:$0xff]
        %v599 = vld [vmem:[%s489 + $0x168] sm:$0xff]
        %v600 = vld [vmem:[%s489 + $0x170] sm:$0xff]
        %v601 = vld [vmem:[%s489 + $0x178] sm:$0xff]
        %v602 = vld [vmem:[%s538] sm:$0x1]
        %v603 = vld [vmem:[#allocation2] sm:$0x3]
        loop: start=0, step=1, limit=16
        $region105: #{_lambda_.11} parent=91 // loop_pre_header
          _
        $region106: #{_lambda_.11} parent=91 // loop_header
          %s605 = sphi 0, %s609
          %p606 = scmp.ge.s32.totalorder %s605, 16
          %v610 = vphi %v603, %v793
        $region107: #{_lambda_.11} parent=91 // loop_header_branch
          %608 = sbr.rel (%p606) target = $region111
        $region108: #{_lambda_.11} parent=91 // loop_body
          %s611 = smul.u32 %s24, 15
          %s612 = smul.u32 %s24, 2
          %s613 = ssub.s32 1, %s612
          %s614 = smul.u32 %s613, %s605
          %s615 = sadd.s32 %s611, %s614
          %s616 = smul.u32 %s615, 3
          %s617 = smul.addr %s616, 2
          %s618 = scalar_lea.vmem %s482, %s617 [#allocation3]
          %v619 = vld [vmem:[%s618] sm:$0x3f]
          %620 = vmatprep.subr.mxu0 %v555
          %621 = vmatpush1.msra.mxu0 %v554
          %622 = vmatprep.subr.mxu0 %v558
          %623 = vmatpush1.msra.mxu0 %v557
          %624 = vmatprep.subr.mxu0 %v561
          %625 = vmatpush1.msra.mxu0 %v560
          %626 = vmatprep.subr.mxu0 %v564
          %627 = vmatpush1.msra.mxu0 %v563
          %628 = vmatprep.subr.mxu0 %v567
          %629 = vmatpush1.msra.mxu0 %v566
          %630 = vmatprep.subr.mxu0 %v570
          %631 = vmatpush1.msra.mxu0 %v569
          %632 = vmatprep.subr.mxu0 %v573
          %633 = vmatpush1.msra.mxu0 %v572
          %634 = vmatprep.subr.mxu0 %v576
          %635 = vmatpush1.msra.mxu0 %v575
          %636 = vmatprep.subr.mxu0 %v579
          %637 = vmatpush1.msra.mxu0 %v578
          %638 = vmatprep.subr.mxu0 %v582
          %639 = vmatpush1.msra.mxu0 %v581
          %640 = vmatprep.subr.mxu0 %v585
          %641 = vmatpush1.msra.mxu0 %v584
          %642 = vmatprep.subr.mxu0 %v588
          %643 = vmatpush1.msra.mxu0 %v587
          %644 = vmatprep.subr.mxu0 %v591
          %645 = vmatpush1.msra.mxu0 %v590
          %646 = vmatprep.subr.mxu0 %v594
          %647 = vmatpush1.msra.mxu0 %v593
          %648 = vmatprep.subr.mxu0 %v597
          %649 = vmatpush1.msra.mxu0 %v596
          %650 = vmatprep.subr.mxu0 %v600
          %651 = vmatpush1.msra.mxu0 %v599
          %652 = vmatprep.subr.mxu0 0.0
          %653 = vmatpush1.msra.mxu0 0.0
          %654 = vmatprep.subr.mxu0 0.0
          %655 = vmatpush1.msra.mxu0 0.0
          %656 = vmatprep.subr.mxu0 0.0
          %657 = vmatpush1.msra.mxu0 0.0
          %658 = vmatprep.subr.mxu0 0.0
          %659 = vmatpush1.msra.mxu0 0.0
          %660 = vmatprep.subr.mxu0 0.0
          %661 = vmatpush1.msra.mxu0 0.0
          %662 = vmatprep.subr.mxu0 0.0
          %663 = vmatpush1.msra.mxu0 0.0
          %664 = vmatprep.subr.mxu0 0.0
          %665 = vmatpush1.msra.mxu0 0.0
          %666 = vmatprep.subr.mxu0 0.0
          %667 = vmatpush1.msra.mxu0 0.0
          %668 = vmatprep.subr.mxu0 0.0
          %669 = vmatpush1.msra.mxu0 0.0
          %670 = vmatprep.subr.mxu0 0.0
          %671 = vmatpush1.msra.mxu0 0.0
          %672 = vmatprep.subr.mxu0 0.0
          %673 = vmatpush1.msra.mxu0 0.0
          %674 = vmatprep.subr.mxu0 0.0
          %675 = vmatpush1.msra.mxu0 0.0
          %676 = vmatprep.subr.mxu0 0.0
          %677 = vmatpush1.msra.mxu0 0.0
          %678 = vmatprep.subr.mxu0 0.0
          %679 = vmatpush1.msra.mxu0 0.0
          %680 = vmatprep.subr.mxu0 0.0
          %681 = vmatpush1.msra.mxu0 0.0
          %682 = vmatprep.subr.mxu0 0.0
          %683 = vmatpush1.msra.mxu0 0.0
          %684 = vmatprep.mubr.f32.mxu0 0.0
          %685 = vmatmul.mubr.f32.gmra.mrb[0].mxu0 %v610
          %v686 = vpop.f32.mrb[0].mxu0
          %v687 = vadd.f32 0.0, %v686
          %v688 = vpop.f32.mrb[0].mxu0
          %v689 = vadd.f32 0.0, %v688
          %690 = vdwg.mxu0
          %691 = vmatprep.subr.mxu0 0.0
          %692 = vmatpush1.msra.mxu0 %v556
          %693 = vmatprep.subr.mxu0 0.0
          %694 = vmatpush1.msra.mxu0 %v559
          %695 = vmatprep.subr.mxu0 0.0
          %696 = vmatpush1.msra.mxu0 %v562
          %697 = vmatprep.subr.mxu0 0.0
          %698 = vmatpush1.msra.mxu0 %v565
          %699 = vmatprep.subr.mxu0 0.0
          %700 = vmatpush1.msra.mxu0 %v568
          %701 = vmatprep.subr.mxu0 0.0
          %702 = vmatpush1.msra.mxu0 %v571
          %703 = vmatprep.subr.mxu0 0.0
          %704 = vmatpush1.msra.mxu0 %v574
          %705 = vmatprep.subr.mxu0 0.0
          %706 = vmatpush1.msra.mxu0 %v577
          %707 = vmatprep.subr.mxu0 0.0
          %708 = vmatpush1.msra.mxu0 %v580
          %709 = vmatprep.subr.mxu0 0.0
          %710 = vmatpush1.msra.mxu0 %v583
          %711 = vmatprep.subr.mxu0 0.0
          %712 = vmatpush1.msra.mxu0 %v586
          %713 = vmatprep.subr.mxu0 0.0
          %714 = vmatpush1.msra.mxu0 %v589
          %715 = vmatprep.subr.mxu0 0.0
          %716 = vmatpush1.msra.mxu0 %v592
          %717 = vmatprep.subr.mxu0 0.0
          %718 = vmatpush1.msra.mxu0 %v595
          %719 = vmatprep.subr.mxu0 0.0
          %720 = vmatpush1.msra.mxu0 %v598
          %721 = vmatprep.subr.mxu0 0.0
          %722 = vmatpush1.msra.mxu0 %v601
          %723 = vmatprep.subr.mxu0 0.0
          %724 = vmatpush1.msra.mxu0 0.0
          %725 = vmatprep.subr.mxu0 0.0
          %726 = vmatpush1.msra.mxu0 0.0
          %727 = vmatprep.subr.mxu0 0.0
          %728 = vmatpush1.msra.mxu0 0.0
          %729 = vmatprep.subr.mxu0 0.0
          %730 = vmatpush1.msra.mxu0 0.0
          %731 = vmatprep.subr.mxu0 0.0
          %732 = vmatpush1.msra.mxu0 0.0
          %733 = vmatprep.subr.mxu0 0.0
          %734 = vmatpush1.msra.mxu0 0.0
          %735 = vmatprep.subr.mxu0 0.0
          %736 = vmatpush1.msra.mxu0 0.0
          %737 = vmatprep.subr.mxu0 0.0
          %738 = vmatpush1.msra.mxu0 0.0
          %739 = vmatprep.subr.mxu0 0.0
          %740 = vmatpush1.msra.mxu0 0.0
          %741 = vmatprep.subr.mxu0 0.0
          %742 = vmatpush1.msra.mxu0 0.0
          %743 = vmatprep.subr.mxu0 0.0
          %744 = vmatpush1.msra.mxu0 0.0
          %745 = vmatprep.subr.mxu0 0.0
          %746 = vmatpush1.msra.mxu0 0.0
          %747 = vmatprep.subr.mxu0 0.0
          %748 = vmatpush1.msra.mxu0 0.0
          %749 = vmatprep.subr.mxu0 0.0
          %750 = vmatpush1.msra.mxu0 0.0
          %751 = vmatprep.subr.mxu0 0.0
          %752 = vmatpush1.msra.mxu0 0.0
          %753 = vmatprep.subr.mxu0 0.0
          %754 = vmatpush1.msra.mxu0 0.0
          %755 = vmatprep.mubr.f32.mxu0 0.0
          %756 = vmatmul.mubr.f32.gmra.mrb[0].mxu0 %v610
          %v757 = vpop.f32.mrb[0].mxu0
          %v758 = vadd.f32 0.0, %v757
          %v759 = vpop.f32.mrb[0].mxu0
          %760 = vdwg.mxu0
          %v761 = vadd.f32 %v619, %v687
          %v762 = vxor.u32 %v761, 2147483648
          %v763 = vmul.f32 %v762, 1.442695
          %v764 = vpow.pop %v763
          %v765 = vadd.f32 %v764, 1.0
          %v766 = vrcp.pop %v765
          %v767 = vmul.f32 1.0, %v766
          %v769 = vrot.slane %v619, 2
          %v771 = vadd.f32 %v769, %v689
          %v772 = vxor.u32 %v771, 2147483648
          %v773 = vmul.f32 %v772, 1.442695
          %v774 = vpow.pop %v773
          %v775 = vadd.f32 %v774, 1.0
          %v776 = vrcp.pop %v775
          %v777 = vmul.f32 1.0, %v776
          %v779 = vlaneseq
          %v780 = vshrl.u32 %v779, 7
          %v781 = vsub.s32 0, %v780
          %v782 = vrot.slane %v602, %v781
          %v784 = vadd.f32 %v758, %v782
          %v785 = vmul.f32 %v767, %v784
          %v786 = vrot.slane %v619, 4
          %v788 = vadd.f32 %v786, %v785
          %v789 = vtanh.pop %v788
          %v790 = vsub.f32 1.0, %v777
          %v791 = vmul.f32 %v790, %v789
          %v792 = vmul.f32 %v777, %v610
          %v793 = vadd.f32 %v791, %v792
          %s794 = smul.u32 %s615, 2
          %s795 = scalar_lea.vmem %s521, %s794 [#allocation5]
          %796 = vst [vmem:[%s795] sm:$0x3] %v793
        $region109: #{_lambda_.11} parent=91 // loop_footer
          %s609 = sadd.s32 1, %s605
        $region110: #{_lambda_.11} parent=91 // loop_footer_branch
          %604 = sbr.rel target = $region106
        $region111: #{_lambda_.11} parent=91 // loop_exit
          _
        %797 = vst [vmem:[#allocation2] sm:$0x3] %v610
        %798 = vst [vmem:[%s528] sm:$0x3] %v610
        %s799 = sand.u32 %s164, 1
        %s800 = sand.u32 %s164, 1
        %s801 = smul.addr %s800, 32
        %s802 = scalar_lea.vmem [#allocation5], %s801
        %s803 = sand.u32 %s190, 1
        %s804 = scalar_lea.sflag [#allocation7], %s803
        %s805 = sand.u32 %s190, 1
        %s806 = smul.addr %s805, 2
        %s807 = scalar_lea.vmem [#allocation6], %s806
        // Predicated region
        $region112: #{_lambda_.11} parent=91 // pred_check
          %p808 = pneg %p174
        $region113: #{_lambda_.11} parent=91 // pred_check_branch
          %810 = sbr.rel (%p808) target = $region115
        $region114: #{_lambda_.11} parent=91 // pred_region
          %s811 = smul.u32 %s24, 2
          %s812 = ssub.s32 1, %s811
          %s813 = smul.u32 %s812, %s25
          %s814 = sadd.s32 %s24, %s813
          %s815 = smul.u32 16, %s814
          %s816 = smul.addr %s815, 2
          %s817 = sadd.s32 %s24, %s816
          %s818 = smul.addr %s817, 2
          %s819 = scalar_lea.vmem %s4, %s818
          // Predicated region
          $region116: #{_lambda_.11} parent=114 // pred_check
            _
          $region117: #{_lambda_.11} parent=114 // pred_check_branch
            %821 = sbr.rel (0) target = $region119
          $region118: #{_lambda_.11} parent=114 // pred_region
            // Predicated region
            $region120: #{_lambda_.11} parent=118 // pred_check
              _
            $region121: #{_lambda_.11} parent=118 // pred_check_branch
              %823 = sbr.rel target = $region123
            $region122: #{_lambda_.11} parent=118 // pred_region
              // Predicated region
              $region135: #{_lambda_.11} parent=122 // pred_check
                _
              $region136: #{_lambda_.11} parent=122 // pred_check_branch
                %868 = sbr.rel (0) target = $region138
              $region137: #{_lambda_.11} parent=122 // pred_region
                loop: start=0, step=1, limit=1
                $region139: #{_lambda_.11} parent=137 // loop_pre_header
                  _
                $region140: #{_lambda_.11} parent=137 // loop_header
                  %s870 = sphi 0, %s874
                  %p871 = scmp.ge.s32.totalorder %s870, 1
                  %s875 = sphi %s802, %s802
                  %s876 = sphi %s819, %s819
                $region141: #{_lambda_.11} parent=137 // loop_header_branch
                  %873 = sbr.rel (%p871) target = $region145
                $region142: #{_lambda_.11} parent=137 // loop_body
                  _
                $region143: #{_lambda_.11} parent=137 // loop_footer
                  %s874 = sadd.s32 1, %s870
                $region144: #{_lambda_.11} parent=137 // loop_footer_branch
                  %869 = sbr.rel target = $region140
                $region145: #{_lambda_.11} parent=137 // loop_exit
                  _
                loop: start=0, step=1, limit=1
                $region146: #{_lambda_.11} parent=137 // loop_pre_header
                  _
                $region147: #{_lambda_.11} parent=137 // loop_header
                  %s879 = sphi 0, %s883
                  %p880 = scmp.ge.s32.totalorder %s879, 1
                  %s884 = sphi %s802, %s802
                  %s885 = sphi %s819, %s819
                $region148: #{_lambda_.11} parent=137 // loop_header_branch
                  %882 = sbr.rel (%p880) target = $region152
                $region149: #{_lambda_.11} parent=137 // loop_body
                  %v886 = vld [vmem:[%s884] sm:$0x3]
                  %887 = vst [vmem:[%s885] sm:$0x3] %v886
                  %v888 = vld [vmem:[%s884 + $0x2] sm:$0x3]
                  %889 = vst [vmem:[%s885 + $0x4] sm:$0x3] %v888
                  %v890 = vld [vmem:[%s884 + $0x4] sm:$0x3]
                  %891 = vst [vmem:[%s885 + $0x8] sm:$0x3] %v890
                  %v892 = vld [vmem:[%s884 + $0x6] sm:$0x3]
                  %893 = vst [vmem:[%s885 + $0xc] sm:$0x3] %v892
                  %v894 = vld [vmem:[%s884 + $0x8] sm:$0x3]
                  %895 = vst [vmem:[%s885 + $0x10] sm:$0x3] %v894
                  %v896 = vld [vmem:[%s884 + $0xa] sm:$0x3]
                  %897 = vst [vmem:[%s885 + $0x14] sm:$0x3] %v896
                  %v898 = vld [vmem:[%s884 + $0xc] sm:$0x3]
                  %899 = vst [vmem:[%s885 + $0x18] sm:$0x3] %v898
                  %v900 = vld [vmem:[%s884 + $0xe] sm:$0x3]
                  %901 = vst [vmem:[%s885 + $0x1c] sm:$0x3] %v900
                  %v902 = vld [vmem:[%s884 + $0x10] sm:$0x3]
                  %903 = vst [vmem:[%s885 + $0x20] sm:$0x3] %v902
                  %v904 = vld [vmem:[%s884 + $0x12] sm:$0x3]
                  %905 = vst [vmem:[%s885 + $0x24] sm:$0x3] %v904
                  %v906 = vld [vmem:[%s884 + $0x14] sm:$0x3]
                  %907 = vst [vmem:[%s885 + $0x28] sm:$0x3] %v906
                  %v908 = vld [vmem:[%s884 + $0x16] sm:$0x3]
                  %909 = vst [vmem:[%s885 + $0x2c] sm:$0x3] %v908
                  %v910 = vld [vmem:[%s884 + $0x18] sm:$0x3]
                  %911 = vst [vmem:[%s885 + $0x30] sm:$0x3] %v910
                  %v912 = vld [vmem:[%s884 + $0x1a] sm:$0x3]
                  %913 = vst [vmem:[%s885 + $0x34] sm:$0x3] %v912
                  %v914 = vld [vmem:[%s884 + $0x1c] sm:$0x3]
                  %915 = vst [vmem:[%s885 + $0x38] sm:$0x3] %v914
                  %v916 = vld [vmem:[%s884 + $0x1e] sm:$0x3]
                  %917 = vst [vmem:[%s885 + $0x3c] sm:$0x3] %v916
                $region150: #{_lambda_.11} parent=137 // loop_footer
                  %s883 = sadd.s32 1, %s879
                $region151: #{_lambda_.11} parent=137 // loop_footer_branch
                  %878 = sbr.rel target = $region147
                $region152: #{_lambda_.11} parent=137 // loop_exit
                  _
              $region138: #{_lambda_.11} parent=122 // pred_fallthru
                _
            $region123: #{_lambda_.11} parent=118 // pred_fallthru
              _
            // Predicated region
            $region124: #{_lambda_.11} parent=118 // pred_check
              _
            $region125: #{_lambda_.11} parent=118 // pred_check_branch
              %825 = sbr.rel (0) target = $region127
            $region126: #{_lambda_.11} parent=118 // pred_region
              loop: start=0, step=1, limit=1
              $region128: #{_lambda_.11} parent=126 // loop_pre_header
                _
              $region129: #{_lambda_.11} parent=126 // loop_header
                %s828 = sphi 0, %s832
                %p829 = scmp.ge.s32.totalorder %s828, 1
                %s833 = sphi %s802, %s802
                %s834 = sphi %s819, %s819
              $region130: #{_lambda_.11} parent=126 // loop_header_branch
                %831 = sbr.rel (%p829) target = $region134
              $region131: #{_lambda_.11} parent=126 // loop_body
                %v835 = vld [vmem:[%s833] sm:$0x3]
                %836 = vst [vmem:[%s834] sm:$0x3] %v835
                %v837 = vld [vmem:[%s833 + $0x2] sm:$0x3]
                %838 = vst [vmem:[%s834 + $0x4] sm:$0x3] %v837
                %v839 = vld [vmem:[%s833 + $0x4] sm:$0x3]
                %840 = vst [vmem:[%s834 + $0x8] sm:$0x3] %v839
                %v841 = vld [vmem:[%s833 + $0x6] sm:$0x3]
                %842 = vst [vmem:[%s834 + $0xc] sm:$0x3] %v841
                %v843 = vld [vmem:[%s833 + $0x8] sm:$0x3]
                %844 = vst [vmem:[%s834 + $0x10] sm:$0x3] %v843
                %v845 = vld [vmem:[%s833 + $0xa] sm:$0x3]
                %846 = vst [vmem:[%s834 + $0x14] sm:$0x3] %v845
                %v847 = vld [vmem:[%s833 + $0xc] sm:$0x3]
                %848 = vst [vmem:[%s834 + $0x18] sm:$0x3] %v847
                %v849 = vld [vmem:[%s833 + $0xe] sm:$0x3]
                %850 = vst [vmem:[%s834 + $0x1c] sm:$0x3] %v849
                %v851 = vld [vmem:[%s833 + $0x10] sm:$0x3]
                %852 = vst [vmem:[%s834 + $0x20] sm:$0x3] %v851
                %v853 = vld [vmem:[%s833 + $0x12] sm:$0x3]
                %854 = vst [vmem:[%s834 + $0x24] sm:$0x3] %v853
                %v855 = vld [vmem:[%s833 + $0x14] sm:$0x3]
                %856 = vst [vmem:[%s834 + $0x28] sm:$0x3] %v855
                %v857 = vld [vmem:[%s833 + $0x16] sm:$0x3]
                %858 = vst [vmem:[%s834 + $0x2c] sm:$0x3] %v857
                %v859 = vld [vmem:[%s833 + $0x18] sm:$0x3]
                %860 = vst [vmem:[%s834 + $0x30] sm:$0x3] %v859
                %v861 = vld [vmem:[%s833 + $0x1a] sm:$0x3]
                %862 = vst [vmem:[%s834 + $0x34] sm:$0x3] %v861
                %v863 = vld [vmem:[%s833 + $0x1c] sm:$0x3]
                %864 = vst [vmem:[%s834 + $0x38] sm:$0x3] %v863
                %v865 = vld [vmem:[%s833 + $0x1e] sm:$0x3]
                %866 = vst [vmem:[%s834 + $0x3c] sm:$0x3] %v865
              $region132: #{_lambda_.11} parent=126 // loop_footer
                %s832 = sadd.s32 1, %s828
              $region133: #{_lambda_.11} parent=126 // loop_footer_branch
                %827 = sbr.rel target = $region129
              $region134: #{_lambda_.11} parent=126 // loop_exit
                _
            $region127: #{_lambda_.11} parent=118 // pred_fallthru
              _
          $region119: #{_lambda_.11} parent=114 // pred_fallthru
            _
          %918 = vnop
        $region115: #{_lambda_.11} parent=91 // pred_fallthru
          _
        // Predicated region
        $region153: #{_lambda_.11} parent=91 // pred_check
          %p919 = pneg %p200
        $region154: #{_lambda_.11} parent=91 // pred_check_branch
          %921 = sbr.rel (%p919) target = $region156
        $region155: #{_lambda_.11} parent=91 // pred_region
          %s923 = ssub.s32 32, 32
          %924 = vsyncadd %s804, %s923
          %s925 = smul.addr %s24, 32
          %s926 = scalar_lea.hbm %s5, %s925
          %s928 = sshll.u32 %s807, 4
          %s929 = int_to_ptr.vmem [resolvable:$true] %s928
          %931 = dma.vmem_to_hbm [thread:$0]  %s929, 32, %s926, %s804
        $region156: #{_lambda_.11} parent=91 // pred_fallthru
          _
      $region92: #{_lambda_.11} parent=5 // pred_fallthru
        _
      %p932 = scmp.le.s32.totalorder 2, %s15
      // Predicated region
      $region157: #{_lambda_.11} parent=5 // pred_check
        %p933 = pneg %p932
      $region158: #{_lambda_.11} parent=5 // pred_check_branch
        %935 = sbr.rel (%p933) target = $region160
      $region159: #{_lambda_.11} parent=5 // pred_region
        %s936 = ssub.s32 %s15, 2
        // Predicated region
        $region161: #{_lambda_.11} parent=159 // pred_check
          %p937 = pneg %p180
        $region162: #{_lambda_.11} parent=159 // pred_check_branch
          %939 = sbr.rel (%p937) target = $region164
        $region163: #{_lambda_.11} parent=159 // pred_region
          %s940 = sand.u32 %s165, 1
          %s941 = sand.u32 %s165, 1
          %s942 = smul.addr %s941, 32
          %s943 = scalar_lea.vmem [#allocation5], %s942
        $region164: #{_lambda_.11} parent=159 // pred_fallthru
          _
        // Predicated region
        $region165: #{_lambda_.11} parent=159 // pred_check
          %p944 = pneg %p206
        $region166: #{_lambda_.11} parent=159 // pred_check_branch
          %946 = sbr.rel (%p944) target = $region168
        $region167: #{_lambda_.11} parent=159 // pred_region
          %s947 = sand.u32 %s191, 1
          %s948 = scalar_lea.sflag [#allocation7], %s947
          %s949 = sand.u32 %s191, 1
          %s950 = smul.addr %s949, 2
          %s951 = scalar_lea.vmem [#allocation6], %s950
          %952 = dma.done %s948, 32
        $region168: #{_lambda_.11} parent=159 // pred_fallthru
          _
      $region160: #{_lambda_.11} parent=5 // pred_fallthru
        _
    $region6: #{_lambda_.11} parent=1 // loop_footer
      %s19 = sadd.s32 1, %s15
    $region7: #{_lambda_.11} parent=1 // loop_footer_branch
      %14 = sbr.rel target = $region3
    $region8: #{_lambda_.11} parent=1 // loop_exit
      _
    %953 = vsyncpa [#allocation7], 1
    %s954 = scalar_lea.sflag [#allocation7], 1
    %955 = vsyncpa %s954, 1

// kernel: _lambda_.8
$region0: #{_lambda_.8}
  #allocation0 [shape = 'u32[]', space=smem, size = 0x4, offset = 0x4, fixed_abs, tag = 'smem constant byte address 0x4 - core index']
  #allocation1 [shape = 'u32[144,128]{1,0:T(1,128)}', space=vmem, size = 0x12000, scoped, tag = 'internal scratch']
  %s0 = inlined_call_operand.vmem [shape: f32[64,256], index: 0, kind: input, shape index: {}]
  %s1 = inlined_call_operand.vmem [shape: f32[256,768], index: 1, kind: input, shape index: {}]
  %s2 = inlined_call_operand.vmem [shape: f32[1,768], index: 2, kind: input, shape index: {}]
  %s3 = inlined_call_operand.vmem [shape: f32[1,256], index: 3, kind: input, shape index: {}]
  %s4 = inlined_call_operand.vmem [shape: f32[1,256], index: 4, kind: input, shape index: {}]
  %s5 = inlined_call_operand.vmem [shape: f32[64,768], index: 5, kind: output, shape index: {}]
  %s6 = sld [smem:[#allocation0]]
  $region30: #{_lambda_.8} parent=0
    _
  %s8 = ssub.s32 1, %s6
  %s9 = scalar_select 0, %s8, %s6
  // Predicated region
  $region2: #{_lambda_.8} parent=0 // pred_check
    _
  $region3: #{_lambda_.8} parent=0 // pred_check_branch
    %11 = sbr.rel (0) target = $region5
  $region4: #{_lambda_.8} parent=0 // pred_region
    _
  $region5: #{_lambda_.8} parent=0 // pred_fallthru
    _
  // Predicated region
  $region6: #{_lambda_.8} parent=0 // pred_check
    _
  $region7: #{_lambda_.8} parent=0 // pred_check_branch
    %13 = sbr.rel (0) target = $region9
  $region8: #{_lambda_.8} parent=0 // pred_region
    _
  $region9: #{_lambda_.8} parent=0 // pred_fallthru
    _
  // Predicated region
  $region10: #{_lambda_.8} parent=0 // pred_check
    _
  $region11: #{_lambda_.8} parent=0 // pred_check_branch
    %15 = sbr.rel (0) target = $region13
  $region12: #{_lambda_.8} parent=0 // pred_region
    _
  $region13: #{_lambda_.8} parent=0 // pred_fallthru
    _
  // Predicated region
  $region14: #{_lambda_.8} parent=0 // pred_check
    _
  $region15: #{_lambda_.8} parent=0 // pred_check_branch
    %17 = sbr.rel (0) target = $region17
  $region16: #{_lambda_.8} parent=0 // pred_region
    _
  $region17: #{_lambda_.8} parent=0 // pred_fallthru
    _
  // Predicated region
  $region18: #{_lambda_.8} parent=0 // pred_check
    _
  $region19: #{_lambda_.8} parent=0 // pred_check_branch
    %19 = sbr.rel (0) target = $region21
  $region20: #{_lambda_.8} parent=0 // pred_region
    _
  $region21: #{_lambda_.8} parent=0 // pred_fallthru
    _
  %v20 = vld [vmem:[%s0] sm:$0xff]
  %v21 = vld [vmem:[%s0 + $0x8] sm:$0xff]
  %v22 = vld [vmem:[%s0 + $0x10] sm:$0xff]
  %v23 = vld [vmem:[%s0 + $0x18] sm:$0xff]
  %v24 = vld [vmem:[%s0 + $0x20] sm:$0xff]
  %v25 = vld [vmem:[%s0 + $0x28] sm:$0xff]
  %v26 = vld [vmem:[%s0 + $0x30] sm:$0xff]
  %v27 = vld [vmem:[%s0 + $0x38] sm:$0xff]
  %v28 = vld [vmem:[%s0 + $0x40] sm:$0xff]
  %v29 = vld [vmem:[%s0 + $0x48] sm:$0xff]
  %v30 = vld [vmem:[%s0 + $0x50] sm:$0xff]
  %v31 = vld [vmem:[%s0 + $0x58] sm:$0xff]
  %v32 = vld [vmem:[%s0 + $0x60] sm:$0xff]
  %v33 = vld [vmem:[%s0 + $0x68] sm:$0xff]
  %v34 = vld [vmem:[%s0 + $0x70] sm:$0xff]
  %v35 = vld [vmem:[%s0 + $0x78] sm:$0xff]
  %v36 = vadd.f32 %v20, %v21
  %37 = vadd.xlane.f32.xlu0 %v36
  %v38 = vpop.xlane.xlu0 %37
  %v39 = vadd.f32 %v22, %v23
  %40 = vadd.xlane.f32.xlu0 %v39
  %v41 = vpop.xlane.xlu0 %40
  %v42 = vadd.f32 %v24, %v25
  %43 = vadd.xlane.f32.xlu0 %v42
  %v44 = vpop.xlane.xlu0 %43
  %v45 = vadd.f32 %v26, %v27
  %46 = vadd.xlane.f32.xlu0 %v45
  %v47 = vpop.xlane.xlu0 %46
  %v48 = vadd.f32 %v28, %v29
  %49 = vadd.xlane.f32.xlu0 %v48
  %v50 = vpop.xlane.xlu0 %49
  %v51 = vadd.f32 %v30, %v31
  %52 = vadd.xlane.f32.xlu0 %v51
  %v53 = vpop.xlane.xlu0 %52
  %v54 = vadd.f32 %v32, %v33
  %55 = vadd.xlane.f32.xlu0 %v54
  %v56 = vpop.xlane.xlu0 %55
  %v57 = vadd.f32 %v34, %v35
  %58 = vadd.xlane.f32.xlu0 %v57
  %v59 = vpop.xlane.xlu0 %58
  %v60 = vrcp.pop 256.0
  %v61 = vmul.f32 %v38, %v60
  %v62 = vmul.f32 %v41, %v60
  %v63 = vmul.f32 %v44, %v60
  %v64 = vmul.f32 %v47, %v60
  %v65 = vmul.f32 %v50, %v60
  %v66 = vmul.f32 %v53, %v60
  %v67 = vmul.f32 %v56, %v60
  %v68 = vmul.f32 %v59, %v60
  %v69 = vsub.f32 %v20, %v61
  %v70 = vsub.f32 %v21, %v61
  %v71 = vsub.f32 %v22, %v62
  %v72 = vsub.f32 %v23, %v62
  %v73 = vsub.f32 %v24, %v63
  %v74 = vsub.f32 %v25, %v63
  %v75 = vsub.f32 %v26, %v64
  %v76 = vsub.f32 %v27, %v64
  %v77 = vsub.f32 %v28, %v65
  %v78 = vsub.f32 %v29, %v65
  %v79 = vsub.f32 %v30, %v66
  %v80 = vsub.f32 %v31, %v66
  %v81 = vsub.f32 %v32, %v67
  %v82 = vsub.f32 %v33, %v67
  %v83 = vsub.f32 %v34, %v68
  %v84 = vsub.f32 %v35, %v68
  %v85 = vmul.f32 %v69, %v69
  %v86 = vmul.f32 %v70, %v70
  %v87 = vmul.f32 %v71, %v71
  %v88 = vmul.f32 %v72, %v72
  %v89 = vmul.f32 %v73, %v73
  %v90 = vmul.f32 %v74, %v74
  %v91 = vmul.f32 %v75, %v75
  %v92 = vmul.f32 %v76, %v76
  %v93 = vmul.f32 %v77, %v77
  %v94 = vmul.f32 %v78, %v78
  %v95 = vmul.f32 %v79, %v79
  %v96 = vmul.f32 %v80, %v80
  %v97 = vmul.f32 %v81, %v81
  %v98 = vmul.f32 %v82, %v82
  %v99 = vmul.f32 %v83, %v83
  %v100 = vmul.f32 %v84, %v84
  %v101 = vadd.f32 %v85, %v86
  %102 = vadd.xlane.f32.xlu0 %v101
  %v103 = vpop.xlane.xlu0 %102
  %v104 = vadd.f32 %v87, %v88
  %105 = vadd.xlane.f32.xlu0 %v104
  %v106 = vpop.xlane.xlu0 %105
  %v107 = vadd.f32 %v89, %v90
  %108 = vadd.xlane.f32.xlu0 %v107
  %v109 = vpop.xlane.xlu0 %108
  %v110 = vadd.f32 %v91, %v92
  %111 = vadd.xlane.f32.xlu0 %v110
  %v112 = vpop.xlane.xlu0 %111
  %v113 = vadd.f32 %v93, %v94
  %114 = vadd.xlane.f32.xlu0 %v113
  %v115 = vpop.xlane.xlu0 %114
  %v116 = vadd.f32 %v95, %v96
  %117 = vadd.xlane.f32.xlu0 %v116
  %v118 = vpop.xlane.xlu0 %117
  %v119 = vadd.f32 %v97, %v98
  %120 = vadd.xlane.f32.xlu0 %v119
  %v121 = vpop.xlane.xlu0 %120
  %v122 = vadd.f32 %v99, %v100
  %123 = vadd.xlane.f32.xlu0 %v122
  %v124 = vpop.xlane.xlu0 %123
  %v125 = vmul.f32 %v103, %v60
  %v126 = vmul.f32 %v106, %v60
  %v127 = vmul.f32 %v109, %v60
  %v128 = vmul.f32 %v112, %v60
  %v129 = vmul.f32 %v115, %v60
  %v130 = vmul.f32 %v118, %v60
  %v131 = vmul.f32 %v121, %v60
  %v132 = vmul.f32 %v124, %v60
  %v133 = vadd.f32 %v125, 1e-05
  %v134 = vadd.f32 %v126, 1e-05
  %v135 = vadd.f32 %v127, 1e-05
  %v136 = vadd.f32 %v128, 1e-05
  %v137 = vadd.f32 %v129, 1e-05
  %v138 = vadd.f32 %v130, 1e-05
  %v139 = vadd.f32 %v131, 1e-05
  %v140 = vadd.f32 %v132, 1e-05
  %v141 = vrsqrt.pop %v133
  %v142 = vrsqrt.pop %v134
  %v143 = vrsqrt.pop %v135
  %v144 = vrsqrt.pop %v136
  %v145 = vrsqrt.pop %v137
  %v146 = vrsqrt.pop %v138
  %v147 = vrsqrt.pop %v139
  %v148 = vrsqrt.pop %v140
  %v149 = vmul.f32 %v69, %v141
  %v150 = vmul.f32 %v70, %v141
  %v151 = vmul.f32 %v71, %v142
  %v152 = vmul.f32 %v72, %v142
  %v153 = vmul.f32 %v73, %v143
  %v154 = vmul.f32 %v74, %v143
  %v155 = vmul.f32 %v75, %v144
  %v156 = vmul.f32 %v76, %v144
  %v157 = vmul.f32 %v77, %v145
  %v158 = vmul.f32 %v78, %v145
  %v159 = vmul.f32 %v79, %v146
  %v160 = vmul.f32 %v80, %v146
  %v161 = vmul.f32 %v81, %v147
  %v162 = vmul.f32 %v82, %v147
  %v163 = vmul.f32 %v83, %v148
  %v164 = vmul.f32 %v84, %v148
  %v165 = vld [vmem:[%s3] sm:$0x3]
  %v167 = vlaneseq
  %v168 = vshrl.u32 %v167, 7
  %v169 = vsub.s32 0, %v168
  %v170 = vrot.slane %v165, %v169
  %v171 = vlaneseq
  %v172 = vshrl.u32 %v171, 7
  %v173 = vsub.s32 1, %v172
  %v174 = vrot.slane %v165, %v173
  %v177 = vmul.f32 %v149, %v170
  %v178 = vmul.f32 %v150, %v174
  %v179 = vmul.f32 %v151, %v170
  %v180 = vmul.f32 %v152, %v174
  %v181 = vmul.f32 %v153, %v170
  %v182 = vmul.f32 %v154, %v174
  %v183 = vmul.f32 %v155, %v170
  %v184 = vmul.f32 %v156, %v174
  %v185 = vmul.f32 %v157, %v170
  %v186 = vmul.f32 %v158, %v174
  %v187 = vmul.f32 %v159, %v170
  %v188 = vmul.f32 %v160, %v174
  %v189 = vmul.f32 %v161, %v170
  %v190 = vmul.f32 %v162, %v174
  %v191 = vmul.f32 %v163, %v170
  %v192 = vmul.f32 %v164, %v174
  %v193 = vld [vmem:[%s4] sm:$0x3]
  %v195 = vlaneseq
  %v196 = vshrl.u32 %v195, 7
  %v197 = vsub.s32 0, %v196
  %v198 = vrot.slane %v193, %v197
  %v199 = vlaneseq
  %v200 = vshrl.u32 %v199, 7
  %v201 = vsub.s32 1, %v200
  %v202 = vrot.slane %v193, %v201
  %v205 = vadd.f32 %v177, %v198
  %v206 = vadd.f32 %v178, %v202
  %v207 = vadd.f32 %v179, %v198
  %v208 = vadd.f32 %v180, %v202
  %v209 = vadd.f32 %v181, %v198
  %v210 = vadd.f32 %v182, %v202
  %v211 = vadd.f32 %v183, %v198
  %v212 = vadd.f32 %v184, %v202
  %v213 = vadd.f32 %v185, %v198
  %v214 = vadd.f32 %v186, %v202
  %v215 = vadd.f32 %v187, %v198
  %v216 = vadd.f32 %v188, %v202
  %v217 = vadd.f32 %v189, %v198
  %v218 = vadd.f32 %v190, %v202
  %v219 = vadd.f32 %v191, %v198
  %v220 = vadd.f32 %v192, %v202
  %v221 = vld [vmem:[%s1] sm:$0xff]
  %v222 = vld [vmem:[%s1 + $0x8] sm:$0xff]
  %v223 = vld [vmem:[%s1 + $0x10] sm:$0xff]
  %v224 = vld [vmem:[%s1 + $0x18] sm:$0xff]
  %v225 = vld [vmem:[%s1 + $0x20] sm:$0xff]
  %v226 = vld [vmem:[%s1 + $0x28] sm:$0xff]
  %v227 = vld [vmem:[%s1 + $0x30] sm:$0xff]
  %v228 = vld [vmem:[%s1 + $0x38] sm:$0xff]
  %v229 = vld [vmem:[%s1 + $0x40] sm:$0xff]
  %v230 = vld [vmem:[%s1 + $0x48] sm:$0xff]
  %v231 = vld [vmem:[%s1 + $0x50] sm:$0xff]
  %v232 = vld [vmem:[%s1 + $0x58] sm:$0xff]
  %v233 = vld [vmem:[%s1 + $0x60] sm:$0xff]
  %v234 = vld [vmem:[%s1 + $0x68] sm:$0xff]
  %v235 = vld [vmem:[%s1 + $0x70] sm:$0xff]
  %v236 = vld [vmem:[%s1 + $0x78] sm:$0xff]
  %v237 = vld [vmem:[%s1 + $0x80] sm:$0xff]
  %v238 = vld [vmem:[%s1 + $0x88] sm:$0xff]
  %v239 = vld [vmem:[%s1 + $0x90] sm:$0xff]
  %v240 = vld [vmem:[%s1 + $0x98] sm:$0xff]
  %v241 = vld [vmem:[%s1 + $0xa0] sm:$0xff]
  %v242 = vld [vmem:[%s1 + $0xa8] sm:$0xff]
  %v243 = vld [vmem:[%s1 + $0xb0] sm:$0xff]
  %v244 = vld [vmem:[%s1 + $0xb8] sm:$0xff]
  %v245 = vld [vmem:[%s1 + $0xc0] sm:$0xff]
  %v246 = vld [vmem:[%s1 + $0xc8] sm:$0xff]
  %v247 = vld [vmem:[%s1 + $0xd0] sm:$0xff]
  %v248 = vld [vmem:[%s1 + $0xd8] sm:$0xff]
  %v249 = vld [vmem:[%s1 + $0xe0] sm:$0xff]
  %v250 = vld [vmem:[%s1 + $0xe8] sm:$0xff]
  %v251 = vld [vmem:[%s1 + $0xf0] sm:$0xff]
  %v252 = vld [vmem:[%s1 + $0xf8] sm:$0xff]
  %v253 = vld [vmem:[%s1 + $0x100] sm:$0xff]
  %v254 = vld [vmem:[%s1 + $0x108] sm:$0xff]
  %v255 = vld [vmem:[%s1 + $0x110] sm:$0xff]
  %v256 = vld [vmem:[%s1 + $0x118] sm:$0xff]
  %v257 = vld [vmem:[%s1 + $0x120] sm:$0xff]
  %v258 = vld [vmem:[%s1 + $0x128] sm:$0xff]
  %v259 = vld [vmem:[%s1 + $0x130] sm:$0xff]
  %v260 = vld [vmem:[%s1 + $0x138] sm:$0xff]
  %v261 = vld [vmem:[%s1 + $0x140] sm:$0xff]
  %v262 = vld [vmem:[%s1 + $0x148] sm:$0xff]
  %v263 = vld [vmem:[%s1 + $0x150] sm:$0xff]
  %v264 = vld [vmem:[%s1 + $0x158] sm:$0xff]
  %v265 = vld [vmem:[%s1 + $0x160] sm:$0xff]
  %v266 = vld [vmem:[%s1 + $0x168] sm:$0xff]
  %v267 = vld [vmem:[%s1 + $0x170] sm:$0xff]
  %v268 = vld [vmem:[%s1 + $0x178] sm:$0xff]
  %v269 = vld [vmem:[%s1 + $0x180] sm:$0xff]
  %v270 = vld [vmem:[%s1 + $0x188] sm:$0xff]
  %v271 = vld [vmem:[%s1 + $0x190] sm:$0xff]
  %v272 = vld [vmem:[%s1 + $0x198] sm:$0xff]
  %v273 = vld [vmem:[%s1 + $0x1a0] sm:$0xff]
  %v274 = vld [vmem:[%s1 + $0x1a8] sm:$0xff]
  %v275 = vld [vmem:[%s1 + $0x1b0] sm:$0xff]
  %v276 = vld [vmem:[%s1 + $0x1b8] sm:$0xff]
  %v277 = vld [vmem:[%s1 + $0x1c0] sm:$0xff]
  %v278 = vld [vmem:[%s1 + $0x1c8] sm:$0xff]
  %v279 = vld [vmem:[%s1 + $0x1d0] sm:$0xff]
  %v280 = vld [vmem:[%s1 + $0x1d8] sm:$0xff]
  %v281 = vld [vmem:[%s1 + $0x1e0] sm:$0xff]
  %v282 = vld [vmem:[%s1 + $0x1e8] sm:$0xff]
  %v283 = vld [vmem:[%s1 + $0x1f0] sm:$0xff]
  %v284 = vld [vmem:[%s1 + $0x1f8] sm:$0xff]
  %v285 = vld [vmem:[%s1 + $0x200] sm:$0xff]
  %v286 = vld [vmem:[%s1 + $0x208] sm:$0xff]
  %v287 = vld [vmem:[%s1 + $0x210] sm:$0xff]
  %v288 = vld [vmem:[%s1 + $0x218] sm:$0xff]
  %v289 = vld [vmem:[%s1 + $0x220] sm:$0xff]
  %v290 = vld [vmem:[%s1 + $0x228] sm:$0xff]
  %v291 = vld [vmem:[%s1 + $0x230] sm:$0xff]
  %v292 = vld [vmem:[%s1 + $0x238] sm:$0xff]
  %v293 = vld [vmem:[%s1 + $0x240] sm:$0xff]
  %v294 = vld [vmem:[%s1 + $0x248] sm:$0xff]
  %v295 = vld [vmem:[%s1 + $0x250] sm:$0xff]
  %v296 = vld [vmem:[%s1 + $0x258] sm:$0xff]
  %v297 = vld [vmem:[%s1 + $0x260] sm:$0xff]
  %v298 = vld [vmem:[%s1 + $0x268] sm:$0xff]
  %v299 = vld [vmem:[%s1 + $0x270] sm:$0xff]
  %v300 = vld [vmem:[%s1 + $0x278] sm:$0xff]
  %v301 = vld [vmem:[%s1 + $0x280] sm:$0xff]
  %v302 = vld [vmem:[%s1 + $0x288] sm:$0xff]
  %v303 = vld [vmem:[%s1 + $0x290] sm:$0xff]
  %v304 = vld [vmem:[%s1 + $0x298] sm:$0xff]
  %v305 = vld [vmem:[%s1 + $0x2a0] sm:$0xff]
  %v306 = vld [vmem:[%s1 + $0x2a8] sm:$0xff]
  %v307 = vld [vmem:[%s1 + $0x2b0] sm:$0xff]
  %v308 = vld [vmem:[%s1 + $0x2b8] sm:$0xff]
  %v309 = vld [vmem:[%s1 + $0x2c0] sm:$0xff]
  %v310 = vld [vmem:[%s1 + $0x2c8] sm:$0xff]
  %v311 = vld [vmem:[%s1 + $0x2d0] sm:$0xff]
  %v312 = vld [vmem:[%s1 + $0x2d8] sm:$0xff]
  %v313 = vld [vmem:[%s1 + $0x2e0] sm:$0xff]
  %v314 = vld [vmem:[%s1 + $0x2e8] sm:$0xff]
  %v315 = vld [vmem:[%s1 + $0x2f0] sm:$0xff]
  %v316 = vld [vmem:[%s1 + $0x2f8] sm:$0xff]
  %v317 = vld [vmem:[%s1 + $0x300] sm:$0xff]
  %v318 = vld [vmem:[%s1 + $0x308] sm:$0xff]
  %v319 = vld [vmem:[%s1 + $0x310] sm:$0xff]
  %v320 = vld [vmem:[%s1 + $0x318] sm:$0xff]
  %v321 = vld [vmem:[%s1 + $0x320] sm:$0xff]
  %v322 = vld [vmem:[%s1 + $0x328] sm:$0xff]
  %v323 = vld [vmem:[%s1 + $0x330] sm:$0xff]
  %v324 = vld [vmem:[%s1 + $0x338] sm:$0xff]
  %v325 = vld [vmem:[%s1 + $0x340] sm:$0xff]
  %v326 = vld [vmem:[%s1 + $0x348] sm:$0xff]
  %v327 = vld [vmem:[%s1 + $0x350] sm:$0xff]
  %v328 = vld [vmem:[%s1 + $0x358] sm:$0xff]
  %v329 = vld [vmem:[%s1 + $0x360] sm:$0xff]
  %v330 = vld [vmem:[%s1 + $0x368] sm:$0xff]
  %v331 = vld [vmem:[%s1 + $0x370] sm:$0xff]
  %v332 = vld [vmem:[%s1 + $0x378] sm:$0xff]
  %v333 = vld [vmem:[%s1 + $0x380] sm:$0xff]
  %v334 = vld [vmem:[%s1 + $0x388] sm:$0xff]
  %v335 = vld [vmem:[%s1 + $0x390] sm:$0xff]
  %v336 = vld [vmem:[%s1 + $0x398] sm:$0xff]
  %v337 = vld [vmem:[%s1 + $0x3a0] sm:$0xff]
  %v338 = vld [vmem:[%s1 + $0x3a8] sm:$0xff]
  %v339 = vld [vmem:[%s1 + $0x3b0] sm:$0xff]
  %v340 = vld [vmem:[%s1 + $0x3b8] sm:$0xff]
  %v341 = vld [vmem:[%s1 + $0x3c0] sm:$0xff]
  %v342 = vld [vmem:[%s1 + $0x3c8] sm:$0xff]
  %v343 = vld [vmem:[%s1 + $0x3d0] sm:$0xff]
  %v344 = vld [vmem:[%s1 + $0x3d8] sm:$0xff]
  %v345 = vld [vmem:[%s1 + $0x3e0] sm:$0xff]
  %v346 = vld [vmem:[%s1 + $0x3e8] sm:$0xff]
  %v347 = vld [vmem:[%s1 + $0x3f0] sm:$0xff]
  %v348 = vld [vmem:[%s1 + $0x3f8] sm:$0xff]
  %v349 = vld [vmem:[%s1 + $0x400] sm:$0xff]
  %v350 = vld [vmem:[%s1 + $0x408] sm:$0xff]
  %v351 = vld [vmem:[%s1 + $0x410] sm:$0xff]
  %v352 = vld [vmem:[%s1 + $0x418] sm:$0xff]
  %v353 = vld [vmem:[%s1 + $0x420] sm:$0xff]
  %v354 = vld [vmem:[%s1 + $0x428] sm:$0xff]
  %v355 = vld [vmem:[%s1 + $0x430] sm:$0xff]
  %v356 = vld [vmem:[%s1 + $0x438] sm:$0xff]
  %v357 = vld [vmem:[%s1 + $0x440] sm:$0xff]
  %v358 = vld [vmem:[%s1 + $0x448] sm:$0xff]
  %v359 = vld [vmem:[%s1 + $0x450] sm:$0xff]
  %v360 = vld [vmem:[%s1 + $0x458] sm:$0xff]
  %v361 = vld [vmem:[%s1 + $0x460] sm:$0xff]
  %v362 = vld [vmem:[%s1 + $0x468] sm:$0xff]
  %v363 = vld [vmem:[%s1 + $0x470] sm:$0xff]
  %v364 = vld [vmem:[%s1 + $0x478] sm:$0xff]
  %v365 = vld [vmem:[%s1 + $0x480] sm:$0xff]
  %v366 = vld [vmem:[%s1 + $0x488] sm:$0xff]
  %v367 = vld [vmem:[%s1 + $0x490] sm:$0xff]
  %v368 = vld [vmem:[%s1 + $0x498] sm:$0xff]
  %v369 = vld [vmem:[%s1 + $0x4a0] sm:$0xff]
  %v370 = vld [vmem:[%s1 + $0x4a8] sm:$0xff]
  %v371 = vld [vmem:[%s1 + $0x4b0] sm:$0xff]
  %v372 = vld [vmem:[%s1 + $0x4b8] sm:$0xff]
  %v373 = vld [vmem:[%s1 + $0x4c0] sm:$0xff]
  %v374 = vld [vmem:[%s1 + $0x4c8] sm:$0xff]
  %v375 = vld [vmem:[%s1 + $0x4d0] sm:$0xff]
  %v376 = vld [vmem:[%s1 + $0x4d8] sm:$0xff]
  %v377 = vld [vmem:[%s1 + $0x4e0] sm:$0xff]
  %v378 = vld [vmem:[%s1 + $0x4e8] sm:$0xff]
  %v379 = vld [vmem:[%s1 + $0x4f0] sm:$0xff]
  %v380 = vld [vmem:[%s1 + $0x4f8] sm:$0xff]
  %v381 = vld [vmem:[%s1 + $0x500] sm:$0xff]
  %v382 = vld [vmem:[%s1 + $0x508] sm:$0xff]
  %v383 = vld [vmem:[%s1 + $0x510] sm:$0xff]
  %v384 = vld [vmem:[%s1 + $0x518] sm:$0xff]
  %v385 = vld [vmem:[%s1 + $0x520] sm:$0xff]
  %v386 = vld [vmem:[%s1 + $0x528] sm:$0xff]
  %v387 = vld [vmem:[%s1 + $0x530] sm:$0xff]
  %v388 = vld [vmem:[%s1 + $0x538] sm:$0xff]
  %v389 = vld [vmem:[%s1 + $0x540] sm:$0xff]
  %v390 = vld [vmem:[%s1 + $0x548] sm:$0xff]
  %v391 = vld [vmem:[%s1 + $0x550] sm:$0xff]
  %v392 = vld [vmem:[%s1 + $0x558] sm:$0xff]
  %v393 = vld [vmem:[%s1 + $0x560] sm:$0xff]
  %v394 = vld [vmem:[%s1 + $0x568] sm:$0xff]
  %v395 = vld [vmem:[%s1 + $0x570] sm:$0xff]
  %v396 = vld [vmem:[%s1 + $0x578] sm:$0xff]
  %v397 = vld [vmem:[%s1 + $0x580] sm:$0xff]
  %v398 = vld [vmem:[%s1 + $0x588] sm:$0xff]
  %v399 = vld [vmem:[%s1 + $0x590] sm:$0xff]
  %v400 = vld [vmem:[%s1 + $0x598] sm:$0xff]
  %v401 = vld [vmem:[%s1 + $0x5a0] sm:$0xff]
  %v402 = vld [vmem:[%s1 + $0x5a8] sm:$0xff]
  %v403 = vld [vmem:[%s1 + $0x5b0] sm:$0xff]
  %v404 = vld [vmem:[%s1 + $0x5b8] sm:$0xff]
  %v405 = vld [vmem:[%s1 + $0x5c0] sm:$0xff]
  %v406 = vld [vmem:[%s1 + $0x5c8] sm:$0xff]
  %v407 = vld [vmem:[%s1 + $0x5d0] sm:$0xff]
  %v408 = vld [vmem:[%s1 + $0x5d8] sm:$0xff]
  %v409 = vld [vmem:[%s1 + $0x5e0] sm:$0xff]
  %v410 = vld [vmem:[%s1 + $0x5e8] sm:$0xff]
  %v411 = vld [vmem:[%s1 + $0x5f0] sm:$0xff]
  %v412 = vld [vmem:[%s1 + $0x5f8] sm:$0xff]
  %v413 = vld [vmem:[%s2] sm:$0x3f]
  %v415 = vlaneseq
  %v416 = vshrl.u32 %v415, 7
  %v417 = vsub.s32 0, %v416
  %v418 = vrot.slane %v413, %v417
  %v419 = vlaneseq
  %v420 = vshrl.u32 %v419, 7
  %v421 = vsub.s32 1, %v420
  %v422 = vrot.slane %v413, %v421
  %v423 = vlaneseq
  %v424 = vshrl.u32 %v423, 7
  %v425 = vsub.s32 2, %v424
  %v426 = vrot.slane %v413, %v425
  %v427 = vlaneseq
  %v428 = vshrl.u32 %v427, 7
  %v429 = vsub.s32 3, %v428
  %v430 = vrot.slane %v413, %v429
  %v431 = vlaneseq
  %v432 = vshrl.u32 %v431, 7
  %v433 = vsub.s32 4, %v432
  %v434 = vrot.slane %v413, %v433
  %v435 = vlaneseq
  %v436 = vshrl.u32 %v435, 7
  %v437 = vsub.s32 5, %v436
  %v438 = vrot.slane %v413, %v437
  %445 = vmatprep.subr.mxu0 %v222
  %446 = vmatpush1.msra.mxu0 %v221
  %447 = vmatprep.subr.mxu0 %v228
  %448 = vmatpush1.msra.mxu0 %v227
  %449 = vmatprep.subr.mxu0 %v234
  %450 = vmatpush1.msra.mxu0 %v233
  %451 = vmatprep.subr.mxu0 %v240
  %452 = vmatpush1.msra.mxu0 %v239
  %453 = vmatprep.subr.mxu0 %v246
  %454 = vmatpush1.msra.mxu0 %v245
  %455 = vmatprep.subr.mxu0 %v252
  %456 = vmatpush1.msra.mxu0 %v251
  %457 = vmatprep.subr.mxu0 %v258
  %458 = vmatpush1.msra.mxu0 %v257
  %459 = vmatprep.subr.mxu0 %v264
  %460 = vmatpush1.msra.mxu0 %v263
  %461 = vmatprep.subr.mxu0 %v270
  %462 = vmatpush1.msra.mxu0 %v269
  %463 = vmatprep.subr.mxu0 %v276
  %464 = vmatpush1.msra.mxu0 %v275
  %465 = vmatprep.subr.mxu0 %v282
  %466 = vmatpush1.msra.mxu0 %v281
  %467 = vmatprep.subr.mxu0 %v288
  %468 = vmatpush1.msra.mxu0 %v287
  %469 = vmatprep.subr.mxu0 %v294
  %470 = vmatpush1.msra.mxu0 %v293
  %471 = vmatprep.subr.mxu0 %v300
  %472 = vmatpush1.msra.mxu0 %v299
  %473 = vmatprep.subr.mxu0 %v306
  %474 = vmatpush1.msra.mxu0 %v305
  %475 = vmatprep.subr.mxu0 %v312
  %476 = vmatpush1.msra.mxu0 %v311
  %477 = vmatprep.subr.mxu0 %v318
  %478 = vmatpush1.msra.mxu0 %v317
  %479 = vmatprep.subr.mxu0 %v324
  %480 = vmatpush1.msra.mxu0 %v323
  %481 = vmatprep.subr.mxu0 %v330
  %482 = vmatpush1.msra.mxu0 %v329
  %483 = vmatprep.subr.mxu0 %v336
  %484 = vmatpush1.msra.mxu0 %v335
  %485 = vmatprep.subr.mxu0 %v342
  %486 = vmatpush1.msra.mxu0 %v341
  %487 = vmatprep.subr.mxu0 %v348
  %488 = vmatpush1.msra.mxu0 %v347
  %489 = vmatprep.subr.mxu0 %v354
  %490 = vmatpush1.msra.mxu0 %v353
  %491 = vmatprep.subr.mxu0 %v360
  %492 = vmatpush1.msra.mxu0 %v359
  %493 = vmatprep.subr.mxu0 %v366
  %494 = vmatpush1.msra.mxu0 %v365
  %495 = vmatprep.subr.mxu0 %v372
  %496 = vmatpush1.msra.mxu0 %v371
  %497 = vmatprep.subr.mxu0 %v378
  %498 = vmatpush1.msra.mxu0 %v377
  %499 = vmatprep.subr.mxu0 %v384
  %500 = vmatpush1.msra.mxu0 %v383
  %501 = vmatprep.subr.mxu0 %v390
  %502 = vmatpush1.msra.mxu0 %v389
  %503 = vmatprep.subr.mxu0 %v396
  %504 = vmatpush1.msra.mxu0 %v395
  %505 = vmatprep.subr.mxu0 %v402
  %506 = vmatpush1.msra.mxu0 %v401
  %507 = vmatprep.subr.mxu0 %v408
  %508 = vmatpush1.msra.mxu0 %v407
  %509 = vmatprep.mubr.f32.mxu0 %v206
  %510 = vmatmul.mubr.f32.gmra.mrb[0].mxu0 %v205
  %v511 = vpop.f32.mrb[0].mxu0
  %v512 = vadd.f32 %v418, %v511
  %v513 = vpop.f32.mrb[0].mxu0
  %v514 = vadd.f32 %v422, %v513
  %515 = vmatprep.mubr.f32.mxu0 %v208
  %516 = vmatmul.mubr.f32.gmra.mrb[0].mxu0 %v207
  %v517 = vpop.f32.mrb[0].mxu0
  %v518 = vadd.f32 %v418, %v517
  %v519 = vpop.f32.mrb[0].mxu0
  %v520 = vadd.f32 %v422, %v519
  %521 = vmatprep.mubr.f32.mxu0 %v210
  %522 = vmatmul.mubr.f32.gmra.mrb[0].mxu0 %v209
  %v523 = vpop.f32.mrb[0].mxu0
  %v524 = vadd.f32 %v418, %v523
  %v525 = vpop.f32.mrb[0].mxu0
  %v526 = vadd.f32 %v422, %v525
  %527 = vmatprep.mubr.f32.mxu0 %v212
  %528 = vmatmul.mubr.f32.gmra.mrb[0].mxu0 %v211
  %v529 = vpop.f32.mrb[0].mxu0
  %v530 = vadd.f32 %v418, %v529
  %v531 = vpop.f32.mrb[0].mxu0
  %v532 = vadd.f32 %v422, %v531
  %533 = vmatprep.mubr.f32.mxu0 %v214
  %534 = vmatmul.mubr.f32.gmra.mrb[0].mxu0 %v213
  %v535 = vpop.f32.mrb[0].mxu0
  %v536 = vadd.f32 %v418, %v535
  %v537 = vpop.f32.mrb[0].mxu0
  %v538 = vadd.f32 %v422, %v537
  %539 = vmatprep.mubr.f32.mxu0 %v216
  %540 = vmatmul.mubr.f32.gmra.mrb[0].mxu0 %v215
  %v541 = vpop.f32.mrb[0].mxu0
  %v542 = vadd.f32 %v418, %v541
  %v543 = vpop.f32.mrb[0].mxu0
  %v544 = vadd.f32 %v422, %v543
  %545 = vmatprep.mubr.f32.mxu0 %v218
  %546 = vmatmul.mubr.f32.gmra.mrb[0].mxu0 %v217
  %v547 = vpop.f32.mrb[0].mxu0
  %v548 = vadd.f32 %v418, %v547
  %v549 = vpop.f32.mrb[0].mxu0
  %v550 = vadd.f32 %v422, %v549
  %551 = vmatprep.mubr.f32.mxu0 %v220
  %552 = vmatmul.mubr.f32.gmra.mrb[0].mxu0 %v219
  %v553 = vpop.f32.mrb[0].mxu0
  %v554 = vadd.f32 %v418, %v553
  %v555 = vpop.f32.mrb[0].mxu0
  %v556 = vadd.f32 %v422, %v555
  %557 = vdwg.mxu0
  %558 = vmatprep.subr.mxu0 %v224
  %559 = vmatpush1.msra.mxu0 %v223
  %560 = vmatprep.subr.mxu0 %v230
  %561 = vmatpush1.msra.mxu0 %v229
  %562 = vmatprep.subr.mxu0 %v236
  %563 = vmatpush1.msra.mxu0 %v235
  %564 = vmatprep.subr.mxu0 %v242
  %565 = vmatpush1.msra.mxu0 %v241
  %566 = vmatprep.subr.mxu0 %v248
  %567 = vmatpush1.msra.mxu0 %v247
  %568 = vmatprep.subr.mxu0 %v254
  %569 = vmatpush1.msra.mxu0 %v253
  %570 = vmatprep.subr.mxu0 %v260
  %571 = vmatpush1.msra.mxu0 %v259
  %572 = vmatprep.subr.mxu0 %v266
  %573 = vmatpush1.msra.mxu0 %v265
  %574 = vmatprep.subr.mxu0 %v272
  %575 = vmatpush1.msra.mxu0 %v271
  %576 = vmatprep.subr.mxu0 %v278
  %577 = vmatpush1.msra.mxu0 %v277
  %578 = vmatprep.subr.mxu0 %v284
  %579 = vmatpush1.msra.mxu0 %v283
  %580 = vmatprep.subr.mxu0 %v290
  %581 = vmatpush1.msra.mxu0 %v289
  %582 = vmatprep.subr.mxu0 %v296
  %583 = vmatpush1.msra.mxu0 %v295
  %584 = vmatprep.subr.mxu0 %v302
  %585 = vmatpush1.msra.mxu0 %v301
  %586 = vmatprep.subr.mxu0 %v308
  %587 = vmatpush1.msra.mxu0 %v307
  %588 = vmatprep.subr.mxu0 %v314
  %589 = vmatpush1.msra.mxu0 %v313
  %590 = vmatprep.subr.mxu0 %v320
  %591 = vmatpush1.msra.mxu0 %v319
  %592 = vmatprep.subr.mxu0 %v326
  %593 = vmatpush1.msra.mxu0 %v325
  %594 = vmatprep.subr.mxu0 %v332
  %595 = vmatpush1.msra.mxu0 %v331
  %596 = vmatprep.subr.mxu0 %v338
  %597 = vmatpush1.msra.mxu0 %v337
  %598 = vmatprep.subr.mxu0 %v344
  %599 = vmatpush1.msra.mxu0 %v343
  %600 = vmatprep.subr.mxu0 %v350
  %601 = vmatpush1.msra.mxu0 %v349
  %602 = vmatprep.subr.mxu0 %v356
  %603 = vmatpush1.msra.mxu0 %v355
  %604 = vmatprep.subr.mxu0 %v362
  %605 = vmatpush1.msra.mxu0 %v361
  %606 = vmatprep.subr.mxu0 %v368
  %607 = vmatpush1.msra.mxu0 %v367
  %608 = vmatprep.subr.mxu0 %v374
  %609 = vmatpush1.msra.mxu0 %v373
  %610 = vmatprep.subr.mxu0 %v380
  %611 = vmatpush1.msra.mxu0 %v379
  %612 = vmatprep.subr.mxu0 %v386
  %613 = vmatpush1.msra.mxu0 %v385
  %614 = vmatprep.subr.mxu0 %v392
  %615 = vmatpush1.msra.mxu0 %v391
  %616 = vmatprep.subr.mxu0 %v398
  %617 = vmatpush1.msra.mxu0 %v397
  %618 = vmatprep.subr.mxu0 %v404
  %619 = vmatpush1.msra.mxu0 %v403
  %620 = vmatprep.subr.mxu0 %v410
  %621 = vmatpush1.msra.mxu0 %v409
  %622 = vmatprep.mubr.f32.mxu0 %v206
  %623 = vmatmul.mubr.f32.gmra.mrb[0].mxu0 %v205
  %v624 = vpop.f32.mrb[0].mxu0
  %v625 = vadd.f32 %v426, %v624
  %v626 = vpop.f32.mrb[0].mxu0
  %v627 = vadd.f32 %v430, %v626
  %628 = vmatprep.mubr.f32.mxu0 %v208
  %629 = vmatmul.mubr.f32.gmra.mrb[0].mxu0 %v207
  %v630 = vpop.f32.mrb[0].mxu0
  %v631 = vadd.f32 %v426, %v630
  %v632 = vpop.f32.mrb[0].mxu0
  %v633 = vadd.f32 %v430, %v632
  %634 = vmatprep.mubr.f32.mxu0 %v210
  %635 = vmatmul.mubr.f32.gmra.mrb[0].mxu0 %v209
  %v636 = vpop.f32.mrb[0].mxu0
  %v637 = vadd.f32 %v426, %v636
  %v638 = vpop.f32.mrb[0].mxu0
  %v639 = vadd.f32 %v430, %v638
  %640 = vmatprep.mubr.f32.mxu0 %v212
  %641 = vmatmul.mubr.f32.gmra.mrb[0].mxu0 %v211
  %v642 = vpop.f32.mrb[0].mxu0
  %v643 = vadd.f32 %v426, %v642
  %v644 = vpop.f32.mrb[0].mxu0
  %v645 = vadd.f32 %v430, %v644
  %646 = vmatprep.mubr.f32.mxu0 %v214
  %647 = vmatmul.mubr.f32.gmra.mrb[0].mxu0 %v213
  %v648 = vpop.f32.mrb[0].mxu0
  %v649 = vadd.f32 %v426, %v648
  %v650 = vpop.f32.mrb[0].mxu0
  %v651 = vadd.f32 %v430, %v650
  %652 = vmatprep.mubr.f32.mxu0 %v216
  %653 = vmatmul.mubr.f32.gmra.mrb[0].mxu0 %v215
  %v654 = vpop.f32.mrb[0].mxu0
  %v655 = vadd.f32 %v426, %v654
  %v656 = vpop.f32.mrb[0].mxu0
  %v657 = vadd.f32 %v430, %v656
  %658 = vmatprep.mubr.f32.mxu0 %v218
  %659 = vmatmul.mubr.f32.gmra.mrb[0].mxu0 %v217
  %v660 = vpop.f32.mrb[0].mxu0
  %v661 = vadd.f32 %v426, %v660
  %v662 = vpop.f32.mrb[0].mxu0
  %v663 = vadd.f32 %v430, %v662
  %664 = vmatprep.mubr.f32.mxu0 %v220
  %665 = vmatmul.mubr.f32.gmra.mrb[0].mxu0 %v219
  %v666 = vpop.f32.mrb[0].mxu0
  %v667 = vadd.f32 %v426, %v666
  %v668 = vpop.f32.mrb[0].mxu0
  %v669 = vadd.f32 %v430, %v668
  %670 = vdwg.mxu0
  %671 = vmatprep.subr.mxu0 %v226
  %672 = vmatpush1.msra.mxu0 %v225
  %673 = vmatprep.subr.mxu0 %v232
  %674 = vmatpush1.msra.mxu0 %v231
  %675 = vmatprep.subr.mxu0 %v238
  %676 = vmatpush1.msra.mxu0 %v237
  %677 = vmatprep.subr.mxu0 %v244
  %678 = vmatpush1.msra.mxu0 %v243
  %679 = vmatprep.subr.mxu0 %v250
  %680 = vmatpush1.msra.mxu0 %v249
  %681 = vmatprep.subr.mxu0 %v256
  %682 = vmatpush1.msra.mxu0 %v255
  %683 = vmatprep.subr.mxu0 %v262
  %684 = vmatpush1.msra.mxu0 %v261
  %685 = vmatprep.subr.mxu0 %v268
  %686 = vmatpush1.msra.mxu0 %v267
  %687 = vmatprep.subr.mxu0 %v274
  %688 = vmatpush1.msra.mxu0 %v273
  %689 = vmatprep.subr.mxu0 %v280
  %690 = vmatpush1.msra.mxu0 %v279
  %691 = vmatprep.subr.mxu0 %v286
  %692 = vmatpush1.msra.mxu0 %v285
  %693 = vmatprep.subr.mxu0 %v292
  %694 = vmatpush1.msra.mxu0 %v291
  %695 = vmatprep.subr.mxu0 %v298
  %696 = vmatpush1.msra.mxu0 %v297
  %697 = vmatprep.subr.mxu0 %v304
  %698 = vmatpush1.msra.mxu0 %v303
  %699 = vmatprep.subr.mxu0 %v310
  %700 = vmatpush1.msra.mxu0 %v309
  %701 = vmatprep.subr.mxu0 %v316
  %702 = vmatpush1.msra.mxu0 %v315
  %703 = vmatprep.subr.mxu0 %v322
  %704 = vmatpush1.msra.mxu0 %v321
  %705 = vmatprep.subr.mxu0 %v328
  %706 = vmatpush1.msra.mxu0 %v327
  %707 = vmatprep.subr.mxu0 %v334
  %708 = vmatpush1.msra.mxu0 %v333
  %709 = vmatprep.subr.mxu0 %v340
  %710 = vmatpush1.msra.mxu0 %v339
  %711 = vmatprep.subr.mxu0 %v346
  %712 = vmatpush1.msra.mxu0 %v345
  %713 = vmatprep.subr.mxu0 %v352
  %714 = vmatpush1.msra.mxu0 %v351
  %715 = vmatprep.subr.mxu0 %v358
  %716 = vmatpush1.msra.mxu0 %v357
  %717 = vmatprep.subr.mxu0 %v364
  %718 = vmatpush1.msra.mxu0 %v363
  %719 = vmatprep.subr.mxu0 %v370
  %720 = vmatpush1.msra.mxu0 %v369
  %721 = vmatprep.subr.mxu0 %v376
  %722 = vmatpush1.msra.mxu0 %v375
  %723 = vmatprep.subr.mxu0 %v382
  %724 = vmatpush1.msra.mxu0 %v381
  %725 = vmatprep.subr.mxu0 %v388
  %726 = vmatpush1.msra.mxu0 %v387
  %727 = vmatprep.subr.mxu0 %v394
  %728 = vmatpush1.msra.mxu0 %v393
  %729 = vmatprep.subr.mxu0 %v400
  %730 = vmatpush1.msra.mxu0 %v399
  %731 = vmatprep.subr.mxu0 %v406
  %732 = vmatpush1.msra.mxu0 %v405
  %733 = vmatprep.subr.mxu0 %v412
  %734 = vmatpush1.msra.mxu0 %v411
  %735 = vmatprep.mubr.f32.mxu0 %v206
  %736 = vmatmul.mubr.f32.gmra.mrb[0].mxu0 %v205
  %v737 = vpop.f32.mrb[0].mxu0
  %v738 = vadd.f32 %v434, %v737
  %v739 = vpop.f32.mrb[0].mxu0
  %v740 = vadd.f32 %v438, %v739
  %741 = vmatprep.mubr.f32.mxu0 %v208
  %742 = vmatmul.mubr.f32.gmra.mrb[0].mxu0 %v207
  %v743 = vpop.f32.mrb[0].mxu0
  %v744 = vadd.f32 %v434, %v743
  %v745 = vpop.f32.mrb[0].mxu0
  %v746 = vadd.f32 %v438, %v745
  %747 = vmatprep.mubr.f32.mxu0 %v210
  %748 = vmatmul.mubr.f32.gmra.mrb[0].mxu0 %v209
  %v749 = vpop.f32.mrb[0].mxu0
  %v750 = vadd.f32 %v434, %v749
  %v751 = vpop.f32.mrb[0].mxu0
  %v752 = vadd.f32 %v438, %v751
  %753 = vmatprep.mubr.f32.mxu0 %v212
  %754 = vmatmul.mubr.f32.gmra.mrb[0].mxu0 %v211
  %v755 = vpop.f32.mrb[0].mxu0
  %v756 = vadd.f32 %v434, %v755
  %v757 = vpop.f32.mrb[0].mxu0
  %v758 = vadd.f32 %v438, %v757
  %759 = vmatprep.mubr.f32.mxu0 %v214
  %760 = vmatmul.mubr.f32.gmra.mrb[0].mxu0 %v213
  %v761 = vpop.f32.mrb[0].mxu0
  %v762 = vadd.f32 %v434, %v761
  %v763 = vpop.f32.mrb[0].mxu0
  %v764 = vadd.f32 %v438, %v763
  %765 = vmatprep.mubr.f32.mxu0 %v216
  %766 = vmatmul.mubr.f32.gmra.mrb[0].mxu0 %v215
  %v767 = vpop.f32.mrb[0].mxu0
  %v768 = vadd.f32 %v434, %v767
  %v769 = vpop.f32.mrb[0].mxu0
  %v770 = vadd.f32 %v438, %v769
  %771 = vmatprep.mubr.f32.mxu0 %v218
  %772 = vmatmul.mubr.f32.gmra.mrb[0].mxu0 %v217
  %v773 = vpop.f32.mrb[0].mxu0
  %v774 = vadd.f32 %v434, %v773
  %v775 = vpop.f32.mrb[0].mxu0
  %v776 = vadd.f32 %v438, %v775
  %777 = vmatprep.mubr.f32.mxu0 %v220
  %778 = vmatmul.mubr.f32.gmra.mrb[0].mxu0 %v219
  %v779 = vpop.f32.mrb[0].mxu0
  %v780 = vadd.f32 %v434, %v779
  %v781 = vpop.f32.mrb[0].mxu0
  %v782 = vadd.f32 %v438, %v781
  %783 = vdwg.mxu0
  %784 = vst [vmem:[%s5] sm:$0xff] %v512
  %785 = vst [vmem:[%s5 + $0x8] sm:$0xff] %v514
  %786 = vst [vmem:[%s5 + $0x10] sm:$0xff] %v625
  %787 = vst [vmem:[%s5 + $0x18] sm:$0xff] %v627
  %788 = vst [vmem:[%s5 + $0x20] sm:$0xff] %v738
  %789 = vst [vmem:[%s5 + $0x28] sm:$0xff] %v740
  %790 = vst [vmem:[%s5 + $0x30] sm:$0xff] %v518
  %791 = vst [vmem:[%s5 + $0x38] sm:$0xff] %v520
  %792 = vst [vmem:[%s5 + $0x40] sm:$0xff] %v631
  %793 = vst [vmem:[%s5 + $0x48] sm:$0xff] %v633
  %794 = vst [vmem:[%s5 + $0x50] sm:$0xff] %v744
  %795 = vst [vmem:[%s5 + $0x58] sm:$0xff] %v746
  %796 = vst [vmem:[%s5 + $0x60] sm:$0xff] %v524
  %797 = vst [vmem:[%s5 + $0x68] sm:$0xff] %v526
  %798 = vst [vmem:[%s5 + $0x70] sm:$0xff] %v637
  %799 = vst [vmem:[%s5 + $0x78] sm:$0xff] %v639
  %800 = vst [vmem:[%s5 + $0x80] sm:$0xff] %v750
  %801 = vst [vmem:[%s5 + $0x88] sm:$0xff] %v752
  %802 = vst [vmem:[%s5 + $0x90] sm:$0xff] %v530
  %803 = vst [vmem:[%s5 + $0x98] sm:$0xff] %v532
  %804 = vst [vmem:[%s5 + $0xa0] sm:$0xff] %v643
  %805 = vst [vmem:[%s5 + $0xa8] sm:$0xff] %v645
  %806 = vst [vmem:[%s5 + $0xb0] sm:$0xff] %v756
  %807 = vst [vmem:[%s5 + $0xb8] sm:$0xff] %v758
  %808 = vst [vmem:[%s5 + $0xc0] sm:$0xff] %v536
  %809 = vst [vmem:[%s5 + $0xc8] sm:$0xff] %v538
  %810 = vst [vmem:[%s5 + $0xd0] sm:$0xff] %v649
  %811 = vst [vmem:[%s5 + $0xd8] sm:$0xff] %v651
  %812 = vst [vmem:[%s5 + $0xe0] sm:$0xff] %v762
  %813 = vst [vmem:[%s5 + $0xe8] sm:$0xff] %v764
  %814 = vst [vmem:[%s5 + $0xf0] sm:$0xff] %v542
  %815 = vst [vmem:[%s5 + $0xf8] sm:$0xff] %v544
  %816 = vst [vmem:[%s5 + $0x100] sm:$0xff] %v655
  %817 = vst [vmem:[%s5 + $0x108] sm:$0xff] %v657
  %818 = vst [vmem:[%s5 + $0x110] sm:$0xff] %v768
  %819 = vst [vmem:[%s5 + $0x118] sm:$0xff] %v770
  %820 = vst [vmem:[%s5 + $0x120] sm:$0xff] %v548
  %821 = vst [vmem:[%s5 + $0x128] sm:$0xff] %v550
  %822 = vst [vmem:[%s5 + $0x130] sm:$0xff] %v661
  %823 = vst [vmem:[%s5 + $0x138] sm:$0xff] %v663
  %824 = vst [vmem:[%s5 + $0x140] sm:$0xff] %v774
  %825 = vst [vmem:[%s5 + $0x148] sm:$0xff] %v776
  %826 = vst [vmem:[%s5 + $0x150] sm:$0xff] %v554
  %827 = vst [vmem:[%s5 + $0x158] sm:$0xff] %v556
  %828 = vst [vmem:[%s5 + $0x160] sm:$0xff] %v667
  %829 = vst [vmem:[%s5 + $0x168] sm:$0xff] %v669
  %830 = vst [vmem:[%s5 + $0x170] sm:$0xff] %v780
  %831 = vst [vmem:[%s5 + $0x178] sm:$0xff] %v782
  // Predicated region
  $region22: #{_lambda_.8} parent=0 // pred_check
    _
  $region23: #{_lambda_.8} parent=0 // pred_check_branch
    %833 = sbr.rel (0) target = $region25
  $region24: #{_lambda_.8} parent=0 // pred_region
    _
  $region25: #{_lambda_.8} parent=0 // pred_fallthru
    _
  // Predicated region
  $region26: #{_lambda_.8} parent=0 // pred_check
    _
  $region27: #{_lambda_.8} parent=0 // pred_check_branch
    %835 = sbr.rel (0) target = $region29
  $region28: #{_lambda_.8} parent=0 // pred_region
    _
  $region29: #{_lambda_.8} parent=0 // pred_fallthru
    _

</llo_original>
